<compile_context>
chip_gen: v7x
topology: tpu7x:2x2x1
jax: 0.10.0
libtpu: 0.0.40
codegen_flags: <defaults>
</compile_context>

<pallas_src>
import jax
import jax.numpy as jnp
from jax.experimental import pallas as pl
from jax.experimental.pallas import tpu as pltpu

C_IN = 96
C_OUT = 2304
H = 7
W = 7
HW = H * W


def _se_scale_kernel(xsq_ref, w_ref, b_ref, x_ref, o_ref):
    # xsq_ref: [C_IN, 1]        squeeze vector (tiny, replicated per block)
    # w_ref  : [TILE_N, C_IN]   1x1 conv weight, native layout
    # b_ref  : [TILE_N, 1]      conv bias (column)
    # x_ref  : [TILE_N, HW]     x725 slab, native [C_OUT, HW] layout
    # o_ref  : [TILE_N, HW]
    s = jnp.dot(w_ref[...], xsq_ref[...],
                preferred_element_type=jnp.float32)            # [TILE_N, 1]
    gate = jax.nn.sigmoid(s + b_ref[...])                      # [TILE_N, 1]
    o_ref[...] = (gate * x_ref[...]).astype(o_ref.dtype)       # bcast over HW


def _pick_tiling():
    """v7x: two channel blocks sharded across the two TensorCores.
    v5e/v6e: one grid step (whole problem ~1.8 MB, far under scoped VMEM)."""
    try:
        kind = jax.devices()[0].device_kind.lower()
    except Exception:
        kind = ""
    core_parallel = getattr(pltpu, "CORE_PARALLEL", None)
    if "v7" in kind and core_parallel is not None:
        return 1152, (core_parallel,)
    return C_OUT, ("arbitrary",)


_TILE_N, _DIM_SEMANTICS = _pick_tiling()


@jax.jit
def se_conv_sigmoid_mul(x728, x725, weight, bias):
    """x728: [1, C_IN, 1, 1], x725: [1, C_OUT, H, W],
    weight: [C_OUT, C_IN] (1x1 conv kernel squeezed), bias: [C_OUT]."""
    xsq = x728.reshape(C_IN, 1)          # free reshape (metadata only)
    b2d = bias.reshape(C_OUT, 1)         # free reshape
    x2d = x725.reshape(C_OUT, HW)        # free reshape: native layout, no copy

    tile_n = _TILE_N
    grid = (C_OUT // tile_n,)

    flops = 2 * C_IN * C_OUT + 3 * C_OUT + C_OUT * HW
    bytes_accessed = 4 * (C_OUT * C_IN + 2 * C_OUT * HW + C_OUT + C_IN)

    out2d = pl.pallas_call(
        _se_scale_kernel,
        out_shape=jax.ShapeDtypeStruct((C_OUT, HW), x725.dtype),
        grid_spec=pltpu.PrefetchScalarGridSpec(
            num_scalar_prefetch=0,
            grid=grid,
            in_specs=[
                pl.BlockSpec((C_IN, 1), lambda i: (0, 0)),        # squeeze vec
                pl.BlockSpec((tile_n, C_IN), lambda i: (i, 0)),   # conv weight
                pl.BlockSpec((tile_n, 1), lambda i: (i, 0)),      # conv bias
                pl.BlockSpec((tile_n, HW), lambda i: (i, 0)),     # x725 slab
            ],
            out_specs=pl.BlockSpec((tile_n, HW), lambda i: (i, 0)),
        ),
        compiler_params=pltpu.CompilerParams(
            dimension_semantics=_DIM_SEMANTICS),
        cost_estimate=pl.CostEstimate(
            flops=flops,
            transcendentals=C_OUT,
            bytes_accessed=bytes_accessed),
    )(xsq, weight, b2d, x2d)

    return out2d.reshape(1, C_OUT, H, W)   # free reshape back to NCHW


def reference(x728, x725, weight, bias):
    s = jnp.einsum("oc,c->o", weight, x728.reshape(C_IN)) + bias   # [C_OUT]
    gate = jax.nn.sigmoid(s).reshape(1, C_OUT, 1, 1)
    return gate * x725


if __name__ == "__main__":
    key = jax.random.PRNGKey(0)
    k_w, k_b, k_x725, k_x728 = jax.random.split(key, 4)

    # Deterministic parameter init (PyTorch-style uniform(-1/sqrt(fan_in), +)).
    bound = 1.0 / (C_IN ** 0.5)
    weight = jax.random.uniform(k_w, (C_OUT, C_IN), jnp.float32, -bound, bound)
    bias = jax.random.uniform(k_b, (C_OUT,), jnp.float32, -bound, bound)

    x725 = jax.random.normal(k_x725, (1, C_OUT, H, W), jnp.float32)
    x728 = jax.random.normal(k_x728, (1, C_IN, 1, 1), jnp.float32)

    out = se_conv_sigmoid_mul(x728, x725, weight, bias)
    out = jax.block_until_ready(out)

    ref = reference(x728, x725, weight, bias)
    assert out.shape == (1, C_OUT, H, W)
    assert jnp.allclose(out, ref, atol=1e-5, rtol=1e-5), "mismatch vs reference"

    print("KERNEL_OK")
</pallas_src>

<mosaic_0001>
module attributes {stable_mosaic.version = 11 : i64} {
  func.func @_se_scale_kernel(%arg0: i32, %arg1: memref<96x1xf32, #tpu.memory_space<vmem>>, %arg2: memref<2304x96xf32, #tpu.memory_space<vmem>>, %arg3: memref<2304x1xf32, #tpu.memory_space<vmem>>, %arg4: memref<2304x49xf32, #tpu.memory_space<vmem>>, %arg5: memref<2304x49xf32, #tpu.memory_space<vmem>>) attributes {dimension_semantics = [#tpu.dimension_semantics<arbitrary>], iteration_bounds = array<i64: 1>, scalar_prefetch = 0 : i64, scratch_operands = 0 : i64, tpu.core_type = #tpu.core_type<tc>, window_params = [{pipeline_mode = #tpu.pipeline_mode<synchronous>, transform_indices = @transform_0, window_bounds = array<i64: 96, 1>}, {transform_indices = @transform_1, window_bounds = array<i64: 2304, 96>}, {transform_indices = @transform_2, window_bounds = array<i64: 2304, 1>}, {transform_indices = @transform_3, window_bounds = array<i64: 2304, 49>}, {transform_indices = @transform_4, window_bounds = array<i64: 2304, 49>}]} {
    %c0 = arith.constant 0 : index
    %c0_0 = arith.constant 0 : index
    %0 = vector.load %arg2[%c0, %c0_0] : memref<2304x96xf32, #tpu.memory_space<vmem>>, vector<2304x96xf32>
    %c0_1 = arith.constant 0 : index
    %c0_2 = arith.constant 0 : index
    %1 = vector.load %arg1[%c0_1, %c0_2] : memref<96x1xf32, #tpu.memory_space<vmem>>, vector<96x1xf32>
    %cst = arith.constant dense<0.000000e+00> : vector<2304x1xf32>
    %2 = tpu.matmul %0, %1, %cst {dimension_numbers = #tpu.dot_dimension_numbers<[1], [0], [0], [1], [0, 0, 1, 1], [], []>} : vector<2304x96xf32>, vector<96x1xf32>, vector<2304x1xf32> -> vector<2304x1xf32>
    %c0_3 = arith.constant 0 : index
    %c0_4 = arith.constant 0 : index
    %3 = vector.load %arg3[%c0_3, %c0_4] : memref<2304x1xf32, #tpu.memory_space<vmem>>, vector<2304x1xf32>
    %4 = arith.addf %2, %3 : vector<2304x1xf32>
    %5 = arith.negf %4 : vector<2304x1xf32>
    %6 = math.exp %5 : vector<2304x1xf32>
    %cst_5 = arith.constant 1.000000e+00 : f32
    %7 = vector.broadcast %cst_5 : f32 to vector<2304x1xf32>
    %8 = arith.addf %7, %6 : vector<2304x1xf32>
    %9 = arith.divf %7, %8 : vector<2304x1xf32>
    %c0_6 = arith.constant 0 : index
    %c0_7 = arith.constant 0 : index
    %10 = vector.load %arg4[%c0_6, %c0_7] : memref<2304x49xf32, #tpu.memory_space<vmem>>, vector<2304x49xf32>
    %11 = vector.broadcast %9 : vector<2304x1xf32> to vector<2304x49xf32>
    %12 = arith.mulf %11, %10 : vector<2304x49xf32>
    %c0_8 = arith.constant 0 : index
    %c0_9 = arith.constant 0 : index
    %13 = vector.load %arg5[%c0_8, %c0_9] : memref<2304x49xf32, #tpu.memory_space<vmem>>, vector<2304x49xf32>
    tpu.vector_store %arg5[%c0_8, %c0_9], %12 {strides = array<i32>} : memref<2304x49xf32, #tpu.memory_space<vmem>>, vector<2304x49xf32>,
    return
  }
  func.func @transform_0(%arg0: i32) -> (i32, i32) {
    %c0_i32 = arith.constant 0 : i32
    %c0_i32_0 = arith.constant 0 : i32
    %c0_i32_1 = arith.constant 0 : i32
    return %c0_i32, %c0_i32_0 : i32, i32
  }
  func.func @transform_1(%arg0: i32) -> (i32, i32) {
    %c0_i32 = arith.constant 0 : i32
    %c0_i32_0 = arith.constant 0 : i32
    return %arg0, %c0_i32 : i32, i32
  }
  func.func @transform_2(%arg0: i32) -> (i32, i32) {
    %c0_i32 = arith.constant 0 : i32
    %c0_i32_0 = arith.constant 0 : i32
    return %arg0, %c0_i32 : i32, i32
  }
  func.func @transform_3(%arg0: i32) -> (i32, i32) {
    %c0_i32 = arith.constant 0 : i32
    %c0_i32_0 = arith.constant 0 : i32
    return %arg0, %c0_i32 : i32, i32
  }
  func.func @transform_4(%arg0: i32) -> (i32, i32) {
    %c0_i32 = arith.constant 0 : i32
    %c0_i32_0 = arith.constant 0 : i32
    return %arg0, %c0_i32 : i32, i32
  }
}

</mosaic_0001>

<llo_original>
// kernel: se_conv_sigmoid_mul.1
$region0: #{se_conv_sigmoid_mul.1}
  #allocation0 [shape = 'u32[]', space=smem, size = 0x4, offset = 0x4, fixed_abs, tag = 'smem constant byte address 0x4 - core index']
  #allocation1 [shape = 'u32[144,128]{1,0:T(1,128)}', space=vmem, size = 0x12000, scoped, tag = 'internal scratch']
  %s0 = inlined_call_operand.vmem [shape: f32[96,1], index: 0, kind: input, shape index: {}]
  %s1 = inlined_call_operand.vmem [shape: f32[2304,96], index: 1, kind: input, shape index: {}]
  %s2 = inlined_call_operand.vmem [shape: f32[2304,1], index: 2, kind: input, shape index: {}]
  %s3 = inlined_call_operand.vmem [shape: f32[2304,49], index: 3, kind: input, shape index: {}]
  %s4 = inlined_call_operand.vmem [shape: f32[2304,49], index: 4, kind: output, shape index: {}]
  %s5 = sld [smem:[#allocation0]]
  $region26: #{se_conv_sigmoid_mul.1} parent=0
    _
  %s7 = ssub.s32 1, %s5
  %s8 = scalar_select 0, %s7, %s5
  // Predicated region
  $region2: #{se_conv_sigmoid_mul.1} parent=0 // pred_check
    _
  $region3: #{se_conv_sigmoid_mul.1} parent=0 // pred_check_branch
    %10 = sbr.rel (0) target = $region5
  $region4: #{se_conv_sigmoid_mul.1} parent=0 // pred_region
    _
  $region5: #{se_conv_sigmoid_mul.1} parent=0 // pred_fallthru
    _
  // Predicated region
  $region6: #{se_conv_sigmoid_mul.1} parent=0 // pred_check
    _
  $region7: #{se_conv_sigmoid_mul.1} parent=0 // pred_check_branch
    %12 = sbr.rel (0) target = $region9
  $region8: #{se_conv_sigmoid_mul.1} parent=0 // pred_region
    _
  $region9: #{se_conv_sigmoid_mul.1} parent=0 // pred_fallthru
    _
  // Predicated region
  $region10: #{se_conv_sigmoid_mul.1} parent=0 // pred_check
    _
  $region11: #{se_conv_sigmoid_mul.1} parent=0 // pred_check_branch
    %14 = sbr.rel (0) target = $region13
  $region12: #{se_conv_sigmoid_mul.1} parent=0 // pred_region
    _
  $region13: #{se_conv_sigmoid_mul.1} parent=0 // pred_fallthru
    _
  // Predicated region
  $region14: #{se_conv_sigmoid_mul.1} parent=0 // pred_check
    _
  $region15: #{se_conv_sigmoid_mul.1} parent=0 // pred_check_branch
    %16 = sbr.rel (0) target = $region17
  $region16: #{se_conv_sigmoid_mul.1} parent=0 // pred_region
    _
  $region17: #{se_conv_sigmoid_mul.1} parent=0 // pred_fallthru
    _
  %v17 = vld [vmem:[%s1] sm:$0xff]
  %v18 = vld [vmem:[%s1 + $0x8] sm:$0xff]
  %v19 = vld [vmem:[%s1 + $0x10] sm:$0xff]
  %v20 = vld [vmem:[%s1 + $0x18] sm:$0xff]
  %v21 = vld [vmem:[%s1 + $0x20] sm:$0xff]
  %v22 = vld [vmem:[%s1 + $0x28] sm:$0xff]
  %v23 = vld [vmem:[%s1 + $0x30] sm:$0xff]
  %v24 = vld [vmem:[%s1 + $0x38] sm:$0xff]
  %v25 = vld [vmem:[%s1 + $0x40] sm:$0xff]
  %v26 = vld [vmem:[%s1 + $0x48] sm:$0xff]
  %v27 = vld [vmem:[%s1 + $0x50] sm:$0xff]
  %v28 = vld [vmem:[%s1 + $0x58] sm:$0xff]
  %v29 = vld [vmem:[%s1 + $0x60] sm:$0xff]
  %v30 = vld [vmem:[%s1 + $0x68] sm:$0xff]
  %v31 = vld [vmem:[%s1 + $0x70] sm:$0xff]
  %v32 = vld [vmem:[%s1 + $0x78] sm:$0xff]
  %v33 = vld [vmem:[%s1 + $0x80] sm:$0xff]
  %v34 = vld [vmem:[%s1 + $0x88] sm:$0xff]
  %v35 = vld [vmem:[%s1 + $0x90] sm:$0xff]
  %v36 = vld [vmem:[%s1 + $0x98] sm:$0xff]
  %v37 = vld [vmem:[%s1 + $0xa0] sm:$0xff]
  %v38 = vld [vmem:[%s1 + $0xa8] sm:$0xff]
  %v39 = vld [vmem:[%s1 + $0xb0] sm:$0xff]
  %v40 = vld [vmem:[%s1 + $0xb8] sm:$0xff]
  %v41 = vld [vmem:[%s1 + $0xc0] sm:$0xff]
  %v42 = vld [vmem:[%s1 + $0xc8] sm:$0xff]
  %v43 = vld [vmem:[%s1 + $0xd0] sm:$0xff]
  %v44 = vld [vmem:[%s1 + $0xd8] sm:$0xff]
  %v45 = vld [vmem:[%s1 + $0xe0] sm:$0xff]
  %v46 = vld [vmem:[%s1 + $0xe8] sm:$0xff]
  %v47 = vld [vmem:[%s1 + $0xf0] sm:$0xff]
  %v48 = vld [vmem:[%s1 + $0xf8] sm:$0xff]
  %v49 = vld [vmem:[%s1 + $0x100] sm:$0xff]
  %v50 = vld [vmem:[%s1 + $0x108] sm:$0xff]
  %v51 = vld [vmem:[%s1 + $0x110] sm:$0xff]
  %v52 = vld [vmem:[%s1 + $0x118] sm:$0xff]
  %v53 = vld [vmem:[%s1 + $0x120] sm:$0xff]
  %v54 = vld [vmem:[%s1 + $0x128] sm:$0xff]
  %v55 = vld [vmem:[%s1 + $0x130] sm:$0xff]
  %v56 = vld [vmem:[%s1 + $0x138] sm:$0xff]
  %v57 = vld [vmem:[%s1 + $0x140] sm:$0xff]
  %v58 = vld [vmem:[%s1 + $0x148] sm:$0xff]
  %v59 = vld [vmem:[%s1 + $0x150] sm:$0xff]
  %v60 = vld [vmem:[%s1 + $0x158] sm:$0xff]
  %v61 = vld [vmem:[%s1 + $0x160] sm:$0xff]
  %v62 = vld [vmem:[%s1 + $0x168] sm:$0xff]
  %v63 = vld [vmem:[%s1 + $0x170] sm:$0xff]
  %v64 = vld [vmem:[%s1 + $0x178] sm:$0xff]
  %v65 = vld [vmem:[%s1 + $0x180] sm:$0xff]
  %v66 = vld [vmem:[%s1 + $0x188] sm:$0xff]
  %v67 = vld [vmem:[%s1 + $0x190] sm:$0xff]
  %v68 = vld [vmem:[%s1 + $0x198] sm:$0xff]
  %v69 = vld [vmem:[%s1 + $0x1a0] sm:$0xff]
  %v70 = vld [vmem:[%s1 + $0x1a8] sm:$0xff]
  %v71 = vld [vmem:[%s1 + $0x1b0] sm:$0xff]
  %v72 = vld [vmem:[%s1 + $0x1b8] sm:$0xff]
  %v73 = vld [vmem:[%s1 + $0x1c0] sm:$0xff]
  %v74 = vld [vmem:[%s1 + $0x1c8] sm:$0xff]
  %v75 = vld [vmem:[%s1 + $0x1d0] sm:$0xff]
  %v76 = vld [vmem:[%s1 + $0x1d8] sm:$0xff]
  %v77 = vld [vmem:[%s1 + $0x1e0] sm:$0xff]
  %v78 = vld [vmem:[%s1 + $0x1e8] sm:$0xff]
  %v79 = vld [vmem:[%s1 + $0x1f0] sm:$0xff]
  %v80 = vld [vmem:[%s1 + $0x1f8] sm:$0xff]
  %v81 = vld [vmem:[%s1 + $0x200] sm:$0xff]
  %v82 = vld [vmem:[%s1 + $0x208] sm:$0xff]
  %v83 = vld [vmem:[%s1 + $0x210] sm:$0xff]
  %v84 = vld [vmem:[%s1 + $0x218] sm:$0xff]
  %v85 = vld [vmem:[%s1 + $0x220] sm:$0xff]
  %v86 = vld [vmem:[%s1 + $0x228] sm:$0xff]
  %v87 = vld [vmem:[%s1 + $0x230] sm:$0xff]
  %v88 = vld [vmem:[%s1 + $0x238] sm:$0xff]
  %v89 = vld [vmem:[%s1 + $0x240] sm:$0xff]
  %v90 = vld [vmem:[%s1 + $0x248] sm:$0xff]
  %v91 = vld [vmem:[%s1 + $0x250] sm:$0xff]
  %v92 = vld [vmem:[%s1 + $0x258] sm:$0xff]
  %v93 = vld [vmem:[%s1 + $0x260] sm:$0xff]
  %v94 = vld [vmem:[%s1 + $0x268] sm:$0xff]
  %v95 = vld [vmem:[%s1 + $0x270] sm:$0xff]
  %v96 = vld [vmem:[%s1 + $0x278] sm:$0xff]
  %v97 = vld [vmem:[%s1 + $0x280] sm:$0xff]
  %v98 = vld [vmem:[%s1 + $0x288] sm:$0xff]
  %v99 = vld [vmem:[%s1 + $0x290] sm:$0xff]
  %v100 = vld [vmem:[%s1 + $0x298] sm:$0xff]
  %v101 = vld [vmem:[%s1 + $0x2a0] sm:$0xff]
  %v102 = vld [vmem:[%s1 + $0x2a8] sm:$0xff]
  %v103 = vld [vmem:[%s1 + $0x2b0] sm:$0xff]
  %v104 = vld [vmem:[%s1 + $0x2b8] sm:$0xff]
  %v105 = vld [vmem:[%s1 + $0x2c0] sm:$0xff]
  %v106 = vld [vmem:[%s1 + $0x2c8] sm:$0xff]
  %v107 = vld [vmem:[%s1 + $0x2d0] sm:$0xff]
  %v108 = vld [vmem:[%s1 + $0x2d8] sm:$0xff]
  %v109 = vld [vmem:[%s1 + $0x2e0] sm:$0xff]
  %v110 = vld [vmem:[%s1 + $0x2e8] sm:$0xff]
  %v111 = vld [vmem:[%s1 + $0x2f0] sm:$0xff]
  %v112 = vld [vmem:[%s1 + $0x2f8] sm:$0xff]
  %v113 = vld [vmem:[%s1 + $0x300] sm:$0xff]
  %v114 = vld [vmem:[%s1 + $0x308] sm:$0xff]
  %v115 = vld [vmem:[%s1 + $0x310] sm:$0xff]
  %v116 = vld [vmem:[%s1 + $0x318] sm:$0xff]
  %v117 = vld [vmem:[%s1 + $0x320] sm:$0xff]
  %v118 = vld [vmem:[%s1 + $0x328] sm:$0xff]
  %v119 = vld [vmem:[%s1 + $0x330] sm:$0xff]
  %v120 = vld [vmem:[%s1 + $0x338] sm:$0xff]
  %v121 = vld [vmem:[%s1 + $0x340] sm:$0xff]
  %v122 = vld [vmem:[%s1 + $0x348] sm:$0xff]
  %v123 = vld [vmem:[%s1 + $0x350] sm:$0xff]
  %v124 = vld [vmem:[%s1 + $0x358] sm:$0xff]
  %v125 = vld [vmem:[%s1 + $0x360] sm:$0xff]
  %v126 = vld [vmem:[%s1 + $0x368] sm:$0xff]
  %v127 = vld [vmem:[%s1 + $0x370] sm:$0xff]
  %v128 = vld [vmem:[%s1 + $0x378] sm:$0xff]
  %v129 = vld [vmem:[%s1 + $0x380] sm:$0xff]
  %v130 = vld [vmem:[%s1 + $0x388] sm:$0xff]
  %v131 = vld [vmem:[%s1 + $0x390] sm:$0xff]
  %v132 = vld [vmem:[%s1 + $0x398] sm:$0xff]
  %v133 = vld [vmem:[%s1 + $0x3a0] sm:$0xff]
  %v134 = vld [vmem:[%s1 + $0x3a8] sm:$0xff]
  %v135 = vld [vmem:[%s1 + $0x3b0] sm:$0xff]
  %v136 = vld [vmem:[%s1 + $0x3b8] sm:$0xff]
  %v137 = vld [vmem:[%s1 + $0x3c0] sm:$0xff]
  %v138 = vld [vmem:[%s1 + $0x3c8] sm:$0xff]
  %v139 = vld [vmem:[%s1 + $0x3d0] sm:$0xff]
  %v140 = vld [vmem:[%s1 + $0x3d8] sm:$0xff]
  %v141 = vld [vmem:[%s1 + $0x3e0] sm:$0xff]
  %v142 = vld [vmem:[%s1 + $0x3e8] sm:$0xff]
  %v143 = vld [vmem:[%s1 + $0x3f0] sm:$0xff]
  %v144 = vld [vmem:[%s1 + $0x3f8] sm:$0xff]
  %v145 = vld [vmem:[%s1 + $0x400] sm:$0xff]
  %v146 = vld [vmem:[%s1 + $0x408] sm:$0xff]
  %v147 = vld [vmem:[%s1 + $0x410] sm:$0xff]
  %v148 = vld [vmem:[%s1 + $0x418] sm:$0xff]
  %v149 = vld [vmem:[%s1 + $0x420] sm:$0xff]
  %v150 = vld [vmem:[%s1 + $0x428] sm:$0xff]
  %v151 = vld [vmem:[%s1 + $0x430] sm:$0xff]
  %v152 = vld [vmem:[%s1 + $0x438] sm:$0xff]
  %v153 = vld [vmem:[%s1 + $0x440] sm:$0xff]
  %v154 = vld [vmem:[%s1 + $0x448] sm:$0xff]
  %v155 = vld [vmem:[%s1 + $0x450] sm:$0xff]
  %v156 = vld [vmem:[%s1 + $0x458] sm:$0xff]
  %v157 = vld [vmem:[%s1 + $0x460] sm:$0xff]
  %v158 = vld [vmem:[%s1 + $0x468] sm:$0xff]
  %v159 = vld [vmem:[%s1 + $0x470] sm:$0xff]
  %v160 = vld [vmem:[%s1 + $0x478] sm:$0xff]
  %v161 = vld [vmem:[%s1 + $0x480] sm:$0xff]
  %v162 = vld [vmem:[%s1 + $0x488] sm:$0xff]
  %v163 = vld [vmem:[%s1 + $0x490] sm:$0xff]
  %v164 = vld [vmem:[%s1 + $0x498] sm:$0xff]
  %v165 = vld [vmem:[%s1 + $0x4a0] sm:$0xff]
  %v166 = vld [vmem:[%s1 + $0x4a8] sm:$0xff]
  %v167 = vld [vmem:[%s1 + $0x4b0] sm:$0xff]
  %v168 = vld [vmem:[%s1 + $0x4b8] sm:$0xff]
  %v169 = vld [vmem:[%s1 + $0x4c0] sm:$0xff]
  %v170 = vld [vmem:[%s1 + $0x4c8] sm:$0xff]
  %v171 = vld [vmem:[%s1 + $0x4d0] sm:$0xff]
  %v172 = vld [vmem:[%s1 + $0x4d8] sm:$0xff]
  %v173 = vld [vmem:[%s1 + $0x4e0] sm:$0xff]
  %v174 = vld [vmem:[%s1 + $0x4e8] sm:$0xff]
  %v175 = vld [vmem:[%s1 + $0x4f0] sm:$0xff]
  %v176 = vld [vmem:[%s1 + $0x4f8] sm:$0xff]
  %v177 = vld [vmem:[%s1 + $0x500] sm:$0xff]
  %v178 = vld [vmem:[%s1 + $0x508] sm:$0xff]
  %v179 = vld [vmem:[%s1 + $0x510] sm:$0xff]
  %v180 = vld [vmem:[%s1 + $0x518] sm:$0xff]
  %v181 = vld [vmem:[%s1 + $0x520] sm:$0xff]
  %v182 = vld [vmem:[%s1 + $0x528] sm:$0xff]
  %v183 = vld [vmem:[%s1 + $0x530] sm:$0xff]
  %v184 = vld [vmem:[%s1 + $0x538] sm:$0xff]
  %v185 = vld [vmem:[%s1 + $0x540] sm:$0xff]
  %v186 = vld [vmem:[%s1 + $0x548] sm:$0xff]
  %v187 = vld [vmem:[%s1 + $0x550] sm:$0xff]
  %v188 = vld [vmem:[%s1 + $0x558] sm:$0xff]
  %v189 = vld [vmem:[%s1 + $0x560] sm:$0xff]
  %v190 = vld [vmem:[%s1 + $0x568] sm:$0xff]
  %v191 = vld [vmem:[%s1 + $0x570] sm:$0xff]
  %v192 = vld [vmem:[%s1 + $0x578] sm:$0xff]
  %v193 = vld [vmem:[%s1 + $0x580] sm:$0xff]
  %v194 = vld [vmem:[%s1 + $0x588] sm:$0xff]
  %v195 = vld [vmem:[%s1 + $0x590] sm:$0xff]
  %v196 = vld [vmem:[%s1 + $0x598] sm:$0xff]
  %v197 = vld [vmem:[%s1 + $0x5a0] sm:$0xff]
  %v198 = vld [vmem:[%s1 + $0x5a8] sm:$0xff]
  %v199 = vld [vmem:[%s1 + $0x5b0] sm:$0xff]
  %v200 = vld [vmem:[%s1 + $0x5b8] sm:$0xff]
  %v201 = vld [vmem:[%s1 + $0x5c0] sm:$0xff]
  %v202 = vld [vmem:[%s1 + $0x5c8] sm:$0xff]
  %v203 = vld [vmem:[%s1 + $0x5d0] sm:$0xff]
  %v204 = vld [vmem:[%s1 + $0x5d8] sm:$0xff]
  %v205 = vld [vmem:[%s1 + $0x5e0] sm:$0xff]
  %v206 = vld [vmem:[%s1 + $0x5e8] sm:$0xff]
  %v207 = vld [vmem:[%s1 + $0x5f0] sm:$0xff]
  %v208 = vld [vmem:[%s1 + $0x5f8] sm:$0xff]
  %v209 = vld [vmem:[%s1 + $0x600] sm:$0xff]
  %v210 = vld [vmem:[%s1 + $0x608] sm:$0xff]
  %v211 = vld [vmem:[%s1 + $0x610] sm:$0xff]
  %v212 = vld [vmem:[%s1 + $0x618] sm:$0xff]
  %v213 = vld [vmem:[%s1 + $0x620] sm:$0xff]
  %v214 = vld [vmem:[%s1 + $0x628] sm:$0xff]
  %v215 = vld [vmem:[%s1 + $0x630] sm:$0xff]
  %v216 = vld [vmem:[%s1 + $0x638] sm:$0xff]
  %v217 = vld [vmem:[%s1 + $0x640] sm:$0xff]
  %v218 = vld [vmem:[%s1 + $0x648] sm:$0xff]
  %v219 = vld [vmem:[%s1 + $0x650] sm:$0xff]
  %v220 = vld [vmem:[%s1 + $0x658] sm:$0xff]
  %v221 = vld [vmem:[%s1 + $0x660] sm:$0xff]
  %v222 = vld [vmem:[%s1 + $0x668] sm:$0xff]
  %v223 = vld [vmem:[%s1 + $0x670] sm:$0xff]
  %v224 = vld [vmem:[%s1 + $0x678] sm:$0xff]
  %v225 = vld [vmem:[%s1 + $0x680] sm:$0xff]
  %v226 = vld [vmem:[%s1 + $0x688] sm:$0xff]
  %v227 = vld [vmem:[%s1 + $0x690] sm:$0xff]
  %v228 = vld [vmem:[%s1 + $0x698] sm:$0xff]
  %v229 = vld [vmem:[%s1 + $0x6a0] sm:$0xff]
  %v230 = vld [vmem:[%s1 + $0x6a8] sm:$0xff]
  %v231 = vld [vmem:[%s1 + $0x6b0] sm:$0xff]
  %v232 = vld [vmem:[%s1 + $0x6b8] sm:$0xff]
  %v233 = vld [vmem:[%s1 + $0x6c0] sm:$0xff]
  %v234 = vld [vmem:[%s1 + $0x6c8] sm:$0xff]
  %v235 = vld [vmem:[%s1 + $0x6d0] sm:$0xff]
  %v236 = vld [vmem:[%s1 + $0x6d8] sm:$0xff]
  %v237 = vld [vmem:[%s1 + $0x6e0] sm:$0xff]
  %v238 = vld [vmem:[%s1 + $0x6e8] sm:$0xff]
  %v239 = vld [vmem:[%s1 + $0x6f0] sm:$0xff]
  %v240 = vld [vmem:[%s1 + $0x6f8] sm:$0xff]
  %v241 = vld [vmem:[%s1 + $0x700] sm:$0xff]
  %v242 = vld [vmem:[%s1 + $0x708] sm:$0xff]
  %v243 = vld [vmem:[%s1 + $0x710] sm:$0xff]
  %v244 = vld [vmem:[%s1 + $0x718] sm:$0xff]
  %v245 = vld [vmem:[%s1 + $0x720] sm:$0xff]
  %v246 = vld [vmem:[%s1 + $0x728] sm:$0xff]
  %v247 = vld [vmem:[%s1 + $0x730] sm:$0xff]
  %v248 = vld [vmem:[%s1 + $0x738] sm:$0xff]
  %v249 = vld [vmem:[%s1 + $0x740] sm:$0xff]
  %v250 = vld [vmem:[%s1 + $0x748] sm:$0xff]
  %v251 = vld [vmem:[%s1 + $0x750] sm:$0xff]
  %v252 = vld [vmem:[%s1 + $0x758] sm:$0xff]
  %v253 = vld [vmem:[%s1 + $0x760] sm:$0xff]
  %v254 = vld [vmem:[%s1 + $0x768] sm:$0xff]
  %v255 = vld [vmem:[%s1 + $0x770] sm:$0xff]
  %v256 = vld [vmem:[%s1 + $0x778] sm:$0xff]
  %v257 = vld [vmem:[%s1 + $0x780] sm:$0xff]
  %v258 = vld [vmem:[%s1 + $0x788] sm:$0xff]
  %v259 = vld [vmem:[%s1 + $0x790] sm:$0xff]
  %v260 = vld [vmem:[%s1 + $0x798] sm:$0xff]
  %v261 = vld [vmem:[%s1 + $0x7a0] sm:$0xff]
  %v262 = vld [vmem:[%s1 + $0x7a8] sm:$0xff]
  %v263 = vld [vmem:[%s1 + $0x7b0] sm:$0xff]
  %v264 = vld [vmem:[%s1 + $0x7b8] sm:$0xff]
  %v265 = vld [vmem:[%s1 + $0x7c0] sm:$0xff]
  %v266 = vld [vmem:[%s1 + $0x7c8] sm:$0xff]
  %v267 = vld [vmem:[%s1 + $0x7d0] sm:$0xff]
  %v268 = vld [vmem:[%s1 + $0x7d8] sm:$0xff]
  %v269 = vld [vmem:[%s1 + $0x7e0] sm:$0xff]
  %v270 = vld [vmem:[%s1 + $0x7e8] sm:$0xff]
  %v271 = vld [vmem:[%s1 + $0x7f0] sm:$0xff]
  %v272 = vld [vmem:[%s1 + $0x7f8] sm:$0xff]
  %v273 = vld [vmem:[%s1 + $0x800] sm:$0xff]
  %v274 = vld [vmem:[%s1 + $0x808] sm:$0xff]
  %v275 = vld [vmem:[%s1 + $0x810] sm:$0xff]
  %v276 = vld [vmem:[%s1 + $0x818] sm:$0xff]
  %v277 = vld [vmem:[%s1 + $0x820] sm:$0xff]
  %v278 = vld [vmem:[%s1 + $0x828] sm:$0xff]
  %v279 = vld [vmem:[%s1 + $0x830] sm:$0xff]
  %v280 = vld [vmem:[%s1 + $0x838] sm:$0xff]
  %v281 = vld [vmem:[%s1 + $0x840] sm:$0xff]
  %v282 = vld [vmem:[%s1 + $0x848] sm:$0xff]
  %v283 = vld [vmem:[%s1 + $0x850] sm:$0xff]
  %v284 = vld [vmem:[%s1 + $0x858] sm:$0xff]
  %v285 = vld [vmem:[%s1 + $0x860] sm:$0xff]
  %v286 = vld [vmem:[%s1 + $0x868] sm:$0xff]
  %v287 = vld [vmem:[%s1 + $0x870] sm:$0xff]
  %v288 = vld [vmem:[%s1 + $0x878] sm:$0xff]
  %v289 = vld [vmem:[%s1 + $0x880] sm:$0xff]
  %v290 = vld [vmem:[%s1 + $0x888] sm:$0xff]
  %v291 = vld [vmem:[%s1 + $0x890] sm:$0xff]
  %v292 = vld [vmem:[%s1 + $0x898] sm:$0xff]
  %v293 = vld [vmem:[%s1 + $0x8a0] sm:$0xff]
  %v294 = vld [vmem:[%s1 + $0x8a8] sm:$0xff]
  %v295 = vld [vmem:[%s1 + $0x8b0] sm:$0xff]
  %v296 = vld [vmem:[%s1 + $0x8b8] sm:$0xff]
  %v297 = vld [vmem:[%s1 + $0x8c0] sm:$0xff]
  %v298 = vld [vmem:[%s1 + $0x8c8] sm:$0xff]
  %v299 = vld [vmem:[%s1 + $0x8d0] sm:$0xff]
  %v300 = vld [vmem:[%s1 + $0x8d8] sm:$0xff]
  %v301 = vld [vmem:[%s1 + $0x8e0] sm:$0xff]
  %v302 = vld [vmem:[%s1 + $0x8e8] sm:$0xff]
  %v303 = vld [vmem:[%s1 + $0x8f0] sm:$0xff]
  %v304 = vld [vmem:[%s1 + $0x8f8] sm:$0xff]
  %v305 = vld [vmem:[%s0] sm:$0xff]
  %v306 = vld [vmem:[%s0 + $0x8] sm:$0xff]
  %v307 = vld [vmem:[%s0 + $0x10] sm:$0xff]
  %v308 = vld [vmem:[%s0 + $0x18] sm:$0xff]
  %v309 = vld [vmem:[%s0 + $0x20] sm:$0xff]
  %v310 = vld [vmem:[%s0 + $0x28] sm:$0xff]
  %v311 = vld [vmem:[%s0 + $0x30] sm:$0xff]
  %v312 = vld [vmem:[%s0 + $0x38] sm:$0xff]
  %v313 = vld [vmem:[%s0 + $0x40] sm:$0xff]
  %v314 = vld [vmem:[%s0 + $0x48] sm:$0xff]
  %v315 = vld [vmem:[%s0 + $0x50] sm:$0xff]
  %v316 = vld [vmem:[%s0 + $0x58] sm:$0xff]
  %v317 = vld [vmem:[%s2] sm:$0xff]
  %v318 = vld [vmem:[%s2 + $0x8] sm:$0xff]
  %v319 = vld [vmem:[%s2 + $0x10] sm:$0xff]
  %v320 = vld [vmem:[%s2 + $0x18] sm:$0xff]
  %v321 = vld [vmem:[%s2 + $0x20] sm:$0xff]
  %v322 = vld [vmem:[%s2 + $0x28] sm:$0xff]
  %v323 = vld [vmem:[%s2 + $0x30] sm:$0xff]
  %v324 = vld [vmem:[%s2 + $0x38] sm:$0xff]
  %v325 = vld [vmem:[%s2 + $0x40] sm:$0xff]
  %v326 = vld [vmem:[%s2 + $0x48] sm:$0xff]
  %v327 = vld [vmem:[%s2 + $0x50] sm:$0xff]
  %v328 = vld [vmem:[%s2 + $0x58] sm:$0xff]
  %v329 = vld [vmem:[%s2 + $0x60] sm:$0xff]
  %v330 = vld [vmem:[%s2 + $0x68] sm:$0xff]
  %v331 = vld [vmem:[%s2 + $0x70] sm:$0xff]
  %v332 = vld [vmem:[%s2 + $0x78] sm:$0xff]
  %v333 = vld [vmem:[%s2 + $0x80] sm:$0xff]
  %v334 = vld [vmem:[%s2 + $0x88] sm:$0xff]
  %v335 = vld [vmem:[%s2 + $0x90] sm:$0xff]
  %v336 = vld [vmem:[%s2 + $0x98] sm:$0xff]
  %v337 = vld [vmem:[%s2 + $0xa0] sm:$0xff]
  %v338 = vld [vmem:[%s2 + $0xa8] sm:$0xff]
  %v339 = vld [vmem:[%s2 + $0xb0] sm:$0xff]
  %v340 = vld [vmem:[%s2 + $0xb8] sm:$0xff]
  %v341 = vld [vmem:[%s2 + $0xc0] sm:$0xff]
  %v342 = vld [vmem:[%s2 + $0xc8] sm:$0xff]
  %v343 = vld [vmem:[%s2 + $0xd0] sm:$0xff]
  %v344 = vld [vmem:[%s2 + $0xd8] sm:$0xff]
  %v345 = vld [vmem:[%s2 + $0xe0] sm:$0xff]
  %v346 = vld [vmem:[%s2 + $0xe8] sm:$0xff]
  %v347 = vld [vmem:[%s2 + $0xf0] sm:$0xff]
  %v348 = vld [vmem:[%s2 + $0xf8] sm:$0xff]
  %v349 = vld [vmem:[%s2 + $0x100] sm:$0xff]
  %v350 = vld [vmem:[%s2 + $0x108] sm:$0xff]
  %v351 = vld [vmem:[%s2 + $0x110] sm:$0xff]
  %v352 = vld [vmem:[%s2 + $0x118] sm:$0xff]
  %v353 = vld [vmem:[%s2 + $0x120] sm:$0xff]
  %v354 = vld [vmem:[%s2 + $0x128] sm:$0xff]
  %v355 = vld [vmem:[%s2 + $0x130] sm:$0xff]
  %v356 = vld [vmem:[%s2 + $0x138] sm:$0xff]
  %v357 = vld [vmem:[%s2 + $0x140] sm:$0xff]
  %v358 = vld [vmem:[%s2 + $0x148] sm:$0xff]
  %v359 = vld [vmem:[%s2 + $0x150] sm:$0xff]
  %v360 = vld [vmem:[%s2 + $0x158] sm:$0xff]
  %v361 = vld [vmem:[%s2 + $0x160] sm:$0xff]
  %v362 = vld [vmem:[%s2 + $0x168] sm:$0xff]
  %v363 = vld [vmem:[%s2 + $0x170] sm:$0xff]
  %v364 = vld [vmem:[%s2 + $0x178] sm:$0xff]
  %v365 = vld [vmem:[%s2 + $0x180] sm:$0xff]
  %v366 = vld [vmem:[%s2 + $0x188] sm:$0xff]
  %v367 = vld [vmem:[%s2 + $0x190] sm:$0xff]
  %v368 = vld [vmem:[%s2 + $0x198] sm:$0xff]
  %v369 = vld [vmem:[%s2 + $0x1a0] sm:$0xff]
  %v370 = vld [vmem:[%s2 + $0x1a8] sm:$0xff]
  %v371 = vld [vmem:[%s2 + $0x1b0] sm:$0xff]
  %v372 = vld [vmem:[%s2 + $0x1b8] sm:$0xff]
  %v373 = vld [vmem:[%s2 + $0x1c0] sm:$0xff]
  %v374 = vld [vmem:[%s2 + $0x1c8] sm:$0xff]
  %v375 = vld [vmem:[%s2 + $0x1d0] sm:$0xff]
  %v376 = vld [vmem:[%s2 + $0x1d8] sm:$0xff]
  %v377 = vld [vmem:[%s2 + $0x1e0] sm:$0xff]
  %v378 = vld [vmem:[%s2 + $0x1e8] sm:$0xff]
  %v379 = vld [vmem:[%s2 + $0x1f0] sm:$0xff]
  %v380 = vld [vmem:[%s2 + $0x1f8] sm:$0xff]
  %v381 = vld [vmem:[%s2 + $0x200] sm:$0xff]
  %v382 = vld [vmem:[%s2 + $0x208] sm:$0xff]
  %v383 = vld [vmem:[%s2 + $0x210] sm:$0xff]
  %v384 = vld [vmem:[%s2 + $0x218] sm:$0xff]
  %v385 = vld [vmem:[%s2 + $0x220] sm:$0xff]
  %v386 = vld [vmem:[%s2 + $0x228] sm:$0xff]
  %v387 = vld [vmem:[%s2 + $0x230] sm:$0xff]
  %v388 = vld [vmem:[%s2 + $0x238] sm:$0xff]
  %v389 = vld [vmem:[%s2 + $0x240] sm:$0xff]
  %v390 = vld [vmem:[%s2 + $0x248] sm:$0xff]
  %v391 = vld [vmem:[%s2 + $0x250] sm:$0xff]
  %v392 = vld [vmem:[%s2 + $0x258] sm:$0xff]
  %v393 = vld [vmem:[%s2 + $0x260] sm:$0xff]
  %v394 = vld [vmem:[%s2 + $0x268] sm:$0xff]
  %v395 = vld [vmem:[%s2 + $0x270] sm:$0xff]
  %v396 = vld [vmem:[%s2 + $0x278] sm:$0xff]
  %v397 = vld [vmem:[%s2 + $0x280] sm:$0xff]
  %v398 = vld [vmem:[%s2 + $0x288] sm:$0xff]
  %v399 = vld [vmem:[%s2 + $0x290] sm:$0xff]
  %v400 = vld [vmem:[%s2 + $0x298] sm:$0xff]
  %v401 = vld [vmem:[%s2 + $0x2a0] sm:$0xff]
  %v402 = vld [vmem:[%s2 + $0x2a8] sm:$0xff]
  %v403 = vld [vmem:[%s2 + $0x2b0] sm:$0xff]
  %v404 = vld [vmem:[%s2 + $0x2b8] sm:$0xff]
  %v405 = vld [vmem:[%s2 + $0x2c0] sm:$0xff]
  %v406 = vld [vmem:[%s2 + $0x2c8] sm:$0xff]
  %v407 = vld [vmem:[%s2 + $0x2d0] sm:$0xff]
  %v408 = vld [vmem:[%s2 + $0x2d8] sm:$0xff]
  %v409 = vld [vmem:[%s2 + $0x2e0] sm:$0xff]
  %v410 = vld [vmem:[%s2 + $0x2e8] sm:$0xff]
  %v411 = vld [vmem:[%s2 + $0x2f0] sm:$0xff]
  %v412 = vld [vmem:[%s2 + $0x2f8] sm:$0xff]
  %v413 = vld [vmem:[%s2 + $0x300] sm:$0xff]
  %v414 = vld [vmem:[%s2 + $0x308] sm:$0xff]
  %v415 = vld [vmem:[%s2 + $0x310] sm:$0xff]
  %v416 = vld [vmem:[%s2 + $0x318] sm:$0xff]
  %v417 = vld [vmem:[%s2 + $0x320] sm:$0xff]
  %v418 = vld [vmem:[%s2 + $0x328] sm:$0xff]
  %v419 = vld [vmem:[%s2 + $0x330] sm:$0xff]
  %v420 = vld [vmem:[%s2 + $0x338] sm:$0xff]
  %v421 = vld [vmem:[%s2 + $0x340] sm:$0xff]
  %v422 = vld [vmem:[%s2 + $0x348] sm:$0xff]
  %v423 = vld [vmem:[%s2 + $0x350] sm:$0xff]
  %v424 = vld [vmem:[%s2 + $0x358] sm:$0xff]
  %v425 = vld [vmem:[%s2 + $0x360] sm:$0xff]
  %v426 = vld [vmem:[%s2 + $0x368] sm:$0xff]
  %v427 = vld [vmem:[%s2 + $0x370] sm:$0xff]
  %v428 = vld [vmem:[%s2 + $0x378] sm:$0xff]
  %v429 = vld [vmem:[%s2 + $0x380] sm:$0xff]
  %v430 = vld [vmem:[%s2 + $0x388] sm:$0xff]
  %v431 = vld [vmem:[%s2 + $0x390] sm:$0xff]
  %v432 = vld [vmem:[%s2 + $0x398] sm:$0xff]
  %v433 = vld [vmem:[%s2 + $0x3a0] sm:$0xff]
  %v434 = vld [vmem:[%s2 + $0x3a8] sm:$0xff]
  %v435 = vld [vmem:[%s2 + $0x3b0] sm:$0xff]
  %v436 = vld [vmem:[%s2 + $0x3b8] sm:$0xff]
  %v437 = vld [vmem:[%s2 + $0x3c0] sm:$0xff]
  %v438 = vld [vmem:[%s2 + $0x3c8] sm:$0xff]
  %v439 = vld [vmem:[%s2 + $0x3d0] sm:$0xff]
  %v440 = vld [vmem:[%s2 + $0x3d8] sm:$0xff]
  %v441 = vld [vmem:[%s2 + $0x3e0] sm:$0xff]
  %v442 = vld [vmem:[%s2 + $0x3e8] sm:$0xff]
  %v443 = vld [vmem:[%s2 + $0x3f0] sm:$0xff]
  %v444 = vld [vmem:[%s2 + $0x3f8] sm:$0xff]
  %v445 = vld [vmem:[%s2 + $0x400] sm:$0xff]
  %v446 = vld [vmem:[%s2 + $0x408] sm:$0xff]
  %v447 = vld [vmem:[%s2 + $0x410] sm:$0xff]
  %v448 = vld [vmem:[%s2 + $0x418] sm:$0xff]
  %v449 = vld [vmem:[%s2 + $0x420] sm:$0xff]
  %v450 = vld [vmem:[%s2 + $0x428] sm:$0xff]
  %v451 = vld [vmem:[%s2 + $0x430] sm:$0xff]
  %v452 = vld [vmem:[%s2 + $0x438] sm:$0xff]
  %v453 = vld [vmem:[%s2 + $0x440] sm:$0xff]
  %v454 = vld [vmem:[%s2 + $0x448] sm:$0xff]
  %v455 = vld [vmem:[%s2 + $0x450] sm:$0xff]
  %v456 = vld [vmem:[%s2 + $0x458] sm:$0xff]
  %v457 = vld [vmem:[%s2 + $0x460] sm:$0xff]
  %v458 = vld [vmem:[%s2 + $0x468] sm:$0xff]
  %v459 = vld [vmem:[%s2 + $0x470] sm:$0xff]
  %v460 = vld [vmem:[%s2 + $0x478] sm:$0xff]
  %v461 = vld [vmem:[%s2 + $0x480] sm:$0xff]
  %v462 = vld [vmem:[%s2 + $0x488] sm:$0xff]
  %v463 = vld [vmem:[%s2 + $0x490] sm:$0xff]
  %v464 = vld [vmem:[%s2 + $0x498] sm:$0xff]
  %v465 = vld [vmem:[%s2 + $0x4a0] sm:$0xff]
  %v466 = vld [vmem:[%s2 + $0x4a8] sm:$0xff]
  %v467 = vld [vmem:[%s2 + $0x4b0] sm:$0xff]
  %v468 = vld [vmem:[%s2 + $0x4b8] sm:$0xff]
  %v469 = vld [vmem:[%s2 + $0x4c0] sm:$0xff]
  %v470 = vld [vmem:[%s2 + $0x4c8] sm:$0xff]
  %v471 = vld [vmem:[%s2 + $0x4d0] sm:$0xff]
  %v472 = vld [vmem:[%s2 + $0x4d8] sm:$0xff]
  %v473 = vld [vmem:[%s2 + $0x4e0] sm:$0xff]
  %v474 = vld [vmem:[%s2 + $0x4e8] sm:$0xff]
  %v475 = vld [vmem:[%s2 + $0x4f0] sm:$0xff]
  %v476 = vld [vmem:[%s2 + $0x4f8] sm:$0xff]
  %v477 = vld [vmem:[%s2 + $0x500] sm:$0xff]
  %v478 = vld [vmem:[%s2 + $0x508] sm:$0xff]
  %v479 = vld [vmem:[%s2 + $0x510] sm:$0xff]
  %v480 = vld [vmem:[%s2 + $0x518] sm:$0xff]
  %v481 = vld [vmem:[%s2 + $0x520] sm:$0xff]
  %v482 = vld [vmem:[%s2 + $0x528] sm:$0xff]
  %v483 = vld [vmem:[%s2 + $0x530] sm:$0xff]
  %v484 = vld [vmem:[%s2 + $0x538] sm:$0xff]
  %v485 = vld [vmem:[%s2 + $0x540] sm:$0xff]
  %v486 = vld [vmem:[%s2 + $0x548] sm:$0xff]
  %v487 = vld [vmem:[%s2 + $0x550] sm:$0xff]
  %v488 = vld [vmem:[%s2 + $0x558] sm:$0xff]
  %v489 = vld [vmem:[%s2 + $0x560] sm:$0xff]
  %v490 = vld [vmem:[%s2 + $0x568] sm:$0xff]
  %v491 = vld [vmem:[%s2 + $0x570] sm:$0xff]
  %v492 = vld [vmem:[%s2 + $0x578] sm:$0xff]
  %v493 = vld [vmem:[%s2 + $0x580] sm:$0xff]
  %v494 = vld [vmem:[%s2 + $0x588] sm:$0xff]
  %v495 = vld [vmem:[%s2 + $0x590] sm:$0xff]
  %v496 = vld [vmem:[%s2 + $0x598] sm:$0xff]
  %v497 = vld [vmem:[%s2 + $0x5a0] sm:$0xff]
  %v498 = vld [vmem:[%s2 + $0x5a8] sm:$0xff]
  %v499 = vld [vmem:[%s2 + $0x5b0] sm:$0xff]
  %v500 = vld [vmem:[%s2 + $0x5b8] sm:$0xff]
  %v501 = vld [vmem:[%s2 + $0x5c0] sm:$0xff]
  %v502 = vld [vmem:[%s2 + $0x5c8] sm:$0xff]
  %v503 = vld [vmem:[%s2 + $0x5d0] sm:$0xff]
  %v504 = vld [vmem:[%s2 + $0x5d8] sm:$0xff]
  %v505 = vld [vmem:[%s2 + $0x5e0] sm:$0xff]
  %v506 = vld [vmem:[%s2 + $0x5e8] sm:$0xff]
  %v507 = vld [vmem:[%s2 + $0x5f0] sm:$0xff]
  %v508 = vld [vmem:[%s2 + $0x5f8] sm:$0xff]
  %v509 = vld [vmem:[%s2 + $0x600] sm:$0xff]
  %v510 = vld [vmem:[%s2 + $0x608] sm:$0xff]
  %v511 = vld [vmem:[%s2 + $0x610] sm:$0xff]
  %v512 = vld [vmem:[%s2 + $0x618] sm:$0xff]
  %v513 = vld [vmem:[%s2 + $0x620] sm:$0xff]
  %v514 = vld [vmem:[%s2 + $0x628] sm:$0xff]
  %v515 = vld [vmem:[%s2 + $0x630] sm:$0xff]
  %v516 = vld [vmem:[%s2 + $0x638] sm:$0xff]
  %v517 = vld [vmem:[%s2 + $0x640] sm:$0xff]
  %v518 = vld [vmem:[%s2 + $0x648] sm:$0xff]
  %v519 = vld [vmem:[%s2 + $0x650] sm:$0xff]
  %v520 = vld [vmem:[%s2 + $0x658] sm:$0xff]
  %v521 = vld [vmem:[%s2 + $0x660] sm:$0xff]
  %v522 = vld [vmem:[%s2 + $0x668] sm:$0xff]
  %v523 = vld [vmem:[%s2 + $0x670] sm:$0xff]
  %v524 = vld [vmem:[%s2 + $0x678] sm:$0xff]
  %v525 = vld [vmem:[%s2 + $0x680] sm:$0xff]
  %v526 = vld [vmem:[%s2 + $0x688] sm:$0xff]
  %v527 = vld [vmem:[%s2 + $0x690] sm:$0xff]
  %v528 = vld [vmem:[%s2 + $0x698] sm:$0xff]
  %v529 = vld [vmem:[%s2 + $0x6a0] sm:$0xff]
  %v530 = vld [vmem:[%s2 + $0x6a8] sm:$0xff]
  %v531 = vld [vmem:[%s2 + $0x6b0] sm:$0xff]
  %v532 = vld [vmem:[%s2 + $0x6b8] sm:$0xff]
  %v533 = vld [vmem:[%s2 + $0x6c0] sm:$0xff]
  %v534 = vld [vmem:[%s2 + $0x6c8] sm:$0xff]
  %v535 = vld [vmem:[%s2 + $0x6d0] sm:$0xff]
  %v536 = vld [vmem:[%s2 + $0x6d8] sm:$0xff]
  %v537 = vld [vmem:[%s2 + $0x6e0] sm:$0xff]
  %v538 = vld [vmem:[%s2 + $0x6e8] sm:$0xff]
  %v539 = vld [vmem:[%s2 + $0x6f0] sm:$0xff]
  %v540 = vld [vmem:[%s2 + $0x6f8] sm:$0xff]
  %v541 = vld [vmem:[%s2 + $0x700] sm:$0xff]
  %v542 = vld [vmem:[%s2 + $0x708] sm:$0xff]
  %v543 = vld [vmem:[%s2 + $0x710] sm:$0xff]
  %v544 = vld [vmem:[%s2 + $0x718] sm:$0xff]
  %v545 = vld [vmem:[%s2 + $0x720] sm:$0xff]
  %v546 = vld [vmem:[%s2 + $0x728] sm:$0xff]
  %v547 = vld [vmem:[%s2 + $0x730] sm:$0xff]
  %v548 = vld [vmem:[%s2 + $0x738] sm:$0xff]
  %v549 = vld [vmem:[%s2 + $0x740] sm:$0xff]
  %v550 = vld [vmem:[%s2 + $0x748] sm:$0xff]
  %v551 = vld [vmem:[%s2 + $0x750] sm:$0xff]
  %v552 = vld [vmem:[%s2 + $0x758] sm:$0xff]
  %v553 = vld [vmem:[%s2 + $0x760] sm:$0xff]
  %v554 = vld [vmem:[%s2 + $0x768] sm:$0xff]
  %v555 = vld [vmem:[%s2 + $0x770] sm:$0xff]
  %v556 = vld [vmem:[%s2 + $0x778] sm:$0xff]
  %v557 = vld [vmem:[%s2 + $0x780] sm:$0xff]
  %v558 = vld [vmem:[%s2 + $0x788] sm:$0xff]
  %v559 = vld [vmem:[%s2 + $0x790] sm:$0xff]
  %v560 = vld [vmem:[%s2 + $0x798] sm:$0xff]
  %v561 = vld [vmem:[%s2 + $0x7a0] sm:$0xff]
  %v562 = vld [vmem:[%s2 + $0x7a8] sm:$0xff]
  %v563 = vld [vmem:[%s2 + $0x7b0] sm:$0xff]
  %v564 = vld [vmem:[%s2 + $0x7b8] sm:$0xff]
  %v565 = vld [vmem:[%s2 + $0x7c0] sm:$0xff]
  %v566 = vld [vmem:[%s2 + $0x7c8] sm:$0xff]
  %v567 = vld [vmem:[%s2 + $0x7d0] sm:$0xff]
  %v568 = vld [vmem:[%s2 + $0x7d8] sm:$0xff]
  %v569 = vld [vmem:[%s2 + $0x7e0] sm:$0xff]
  %v570 = vld [vmem:[%s2 + $0x7e8] sm:$0xff]
  %v571 = vld [vmem:[%s2 + $0x7f0] sm:$0xff]
  %v572 = vld [vmem:[%s2 + $0x7f8] sm:$0xff]
  %v573 = vld [vmem:[%s2 + $0x800] sm:$0xff]
  %v574 = vld [vmem:[%s2 + $0x808] sm:$0xff]
  %v575 = vld [vmem:[%s2 + $0x810] sm:$0xff]
  %v576 = vld [vmem:[%s2 + $0x818] sm:$0xff]
  %v577 = vld [vmem:[%s2 + $0x820] sm:$0xff]
  %v578 = vld [vmem:[%s2 + $0x828] sm:$0xff]
  %v579 = vld [vmem:[%s2 + $0x830] sm:$0xff]
  %v580 = vld [vmem:[%s2 + $0x838] sm:$0xff]
  %v581 = vld [vmem:[%s2 + $0x840] sm:$0xff]
  %v582 = vld [vmem:[%s2 + $0x848] sm:$0xff]
  %v583 = vld [vmem:[%s2 + $0x850] sm:$0xff]
  %v584 = vld [vmem:[%s2 + $0x858] sm:$0xff]
  %v585 = vld [vmem:[%s2 + $0x860] sm:$0xff]
  %v586 = vld [vmem:[%s2 + $0x868] sm:$0xff]
  %v587 = vld [vmem:[%s2 + $0x870] sm:$0xff]
  %v588 = vld [vmem:[%s2 + $0x878] sm:$0xff]
  %v589 = vld [vmem:[%s2 + $0x880] sm:$0xff]
  %v590 = vld [vmem:[%s2 + $0x888] sm:$0xff]
  %v591 = vld [vmem:[%s2 + $0x890] sm:$0xff]
  %v592 = vld [vmem:[%s2 + $0x898] sm:$0xff]
  %v593 = vld [vmem:[%s2 + $0x8a0] sm:$0xff]
  %v594 = vld [vmem:[%s2 + $0x8a8] sm:$0xff]
  %v595 = vld [vmem:[%s2 + $0x8b0] sm:$0xff]
  %v596 = vld [vmem:[%s2 + $0x8b8] sm:$0xff]
  %v597 = vld [vmem:[%s2 + $0x8c0] sm:$0xff]
  %v598 = vld [vmem:[%s2 + $0x8c8] sm:$0xff]
  %v599 = vld [vmem:[%s2 + $0x8d0] sm:$0xff]
  %v600 = vld [vmem:[%s2 + $0x8d8] sm:$0xff]
  %v601 = vld [vmem:[%s2 + $0x8e0] sm:$0xff]
  %v602 = vld [vmem:[%s2 + $0x8e8] sm:$0xff]
  %v603 = vld [vmem:[%s2 + $0x8f0] sm:$0xff]
  %v604 = vld [vmem:[%s2 + $0x8f8] sm:$0xff]
  %vm605 = vcmask 785408
  %v607 = vsel %vm605, %v17, 0
  %v610 = vsel %vm605, %v18, 0
  %v613 = vsel %vm605, %v19, 0
  %v616 = vsel %vm605, %v20, 0
  %v619 = vsel %vm605, %v21, 0
  %v622 = vsel %vm605, %v22, 0
  %v625 = vsel %vm605, %v23, 0
  %v628 = vsel %vm605, %v24, 0
  %v631 = vsel %vm605, %v25, 0
  %v634 = vsel %vm605, %v26, 0
  %v637 = vsel %vm605, %v27, 0
  %v640 = vsel %vm605, %v28, 0
  %v643 = vsel %vm605, %v29, 0
  %v646 = vsel %vm605, %v30, 0
  %v649 = vsel %vm605, %v31, 0
  %v652 = vsel %vm605, %v32, 0
  %v655 = vsel %vm605, %v33, 0
  %v658 = vsel %vm605, %v34, 0
  %v661 = vsel %vm605, %v35, 0
  %v664 = vsel %vm605, %v36, 0
  %v667 = vsel %vm605, %v37, 0
  %v670 = vsel %vm605, %v38, 0
  %v673 = vsel %vm605, %v39, 0
  %v676 = vsel %vm605, %v40, 0
  %v679 = vsel %vm605, %v41, 0
  %v682 = vsel %vm605, %v42, 0
  %v685 = vsel %vm605, %v43, 0
  %v688 = vsel %vm605, %v44, 0
  %v691 = vsel %vm605, %v45, 0
  %v694 = vsel %vm605, %v46, 0
  %v697 = vsel %vm605, %v47, 0
  %v700 = vsel %vm605, %v48, 0
  %v703 = vsel %vm605, %v49, 0
  %v706 = vsel %vm605, %v50, 0
  %v709 = vsel %vm605, %v51, 0
  %v712 = vsel %vm605, %v52, 0
  %v715 = vsel %vm605, %v53, 0
  %v718 = vsel %vm605, %v54, 0
  %v721 = vsel %vm605, %v55, 0
  %v724 = vsel %vm605, %v56, 0
  %v727 = vsel %vm605, %v57, 0
  %v730 = vsel %vm605, %v58, 0
  %v733 = vsel %vm605, %v59, 0
  %v736 = vsel %vm605, %v60, 0
  %v739 = vsel %vm605, %v61, 0
  %v742 = vsel %vm605, %v62, 0
  %v745 = vsel %vm605, %v63, 0
  %v748 = vsel %vm605, %v64, 0
  %v751 = vsel %vm605, %v65, 0
  %v754 = vsel %vm605, %v66, 0
  %v757 = vsel %vm605, %v67, 0
  %v760 = vsel %vm605, %v68, 0
  %v763 = vsel %vm605, %v69, 0
  %v766 = vsel %vm605, %v70, 0
  %v769 = vsel %vm605, %v71, 0
  %v772 = vsel %vm605, %v72, 0
  %v775 = vsel %vm605, %v73, 0
  %v778 = vsel %vm605, %v74, 0
  %v781 = vsel %vm605, %v75, 0
  %v784 = vsel %vm605, %v76, 0
  %v787 = vsel %vm605, %v77, 0
  %v790 = vsel %vm605, %v78, 0
  %v793 = vsel %vm605, %v79, 0
  %v796 = vsel %vm605, %v80, 0
  %v799 = vsel %vm605, %v81, 0
  %v802 = vsel %vm605, %v82, 0
  %v805 = vsel %vm605, %v83, 0
  %v808 = vsel %vm605, %v84, 0
  %v811 = vsel %vm605, %v85, 0
  %v814 = vsel %vm605, %v86, 0
  %v817 = vsel %vm605, %v87, 0
  %v820 = vsel %vm605, %v88, 0
  %v823 = vsel %vm605, %v89, 0
  %v826 = vsel %vm605, %v90, 0
  %v829 = vsel %vm605, %v91, 0
  %v832 = vsel %vm605, %v92, 0
  %v835 = vsel %vm605, %v93, 0
  %v838 = vsel %vm605, %v94, 0
  %v841 = vsel %vm605, %v95, 0
  %v844 = vsel %vm605, %v96, 0
  %v847 = vsel %vm605, %v97, 0
  %v850 = vsel %vm605, %v98, 0
  %v853 = vsel %vm605, %v99, 0
  %v856 = vsel %vm605, %v100, 0
  %v859 = vsel %vm605, %v101, 0
  %v862 = vsel %vm605, %v102, 0
  %v865 = vsel %vm605, %v103, 0
  %v868 = vsel %vm605, %v104, 0
  %v871 = vsel %vm605, %v105, 0
  %v874 = vsel %vm605, %v106, 0
  %v877 = vsel %vm605, %v107, 0
  %v880 = vsel %vm605, %v108, 0
  %v883 = vsel %vm605, %v109, 0
  %v886 = vsel %vm605, %v110, 0
  %v889 = vsel %vm605, %v111, 0
  %v892 = vsel %vm605, %v112, 0
  %v895 = vsel %vm605, %v113, 0
  %v898 = vsel %vm605, %v114, 0
  %v901 = vsel %vm605, %v115, 0
  %v904 = vsel %vm605, %v116, 0
  %v907 = vsel %vm605, %v117, 0
  %v910 = vsel %vm605, %v118, 0
  %v913 = vsel %vm605, %v119, 0
  %v916 = vsel %vm605, %v120, 0
  %v919 = vsel %vm605, %v121, 0
  %v922 = vsel %vm605, %v122, 0
  %v925 = vsel %vm605, %v123, 0
  %v928 = vsel %vm605, %v124, 0
  %v931 = vsel %vm605, %v125, 0
  %v934 = vsel %vm605, %v126, 0
  %v937 = vsel %vm605, %v127, 0
  %v940 = vsel %vm605, %v128, 0
  %v943 = vsel %vm605, %v129, 0
  %v946 = vsel %vm605, %v130, 0
  %v949 = vsel %vm605, %v131, 0
  %v952 = vsel %vm605, %v132, 0
  %v955 = vsel %vm605, %v133, 0
  %v958 = vsel %vm605, %v134, 0
  %v961 = vsel %vm605, %v135, 0
  %v964 = vsel %vm605, %v136, 0
  %v967 = vsel %vm605, %v137, 0
  %v970 = vsel %vm605, %v138, 0
  %v973 = vsel %vm605, %v139, 0
  %v976 = vsel %vm605, %v140, 0
  %v979 = vsel %vm605, %v141, 0
  %v982 = vsel %vm605, %v142, 0
  %v985 = vsel %vm605, %v143, 0
  %v988 = vsel %vm605, %v144, 0
  %v991 = vsel %vm605, %v145, 0
  %v994 = vsel %vm605, %v146, 0
  %v997 = vsel %vm605, %v147, 0
  %v1000 = vsel %vm605, %v148, 0
  %v1003 = vsel %vm605, %v149, 0
  %v1006 = vsel %vm605, %v150, 0
  %v1009 = vsel %vm605, %v151, 0
  %v1012 = vsel %vm605, %v152, 0
  %v1015 = vsel %vm605, %v153, 0
  %v1018 = vsel %vm605, %v154, 0
  %v1021 = vsel %vm605, %v155, 0
  %v1024 = vsel %vm605, %v156, 0
  %v1027 = vsel %vm605, %v157, 0
  %v1030 = vsel %vm605, %v158, 0
  %v1033 = vsel %vm605, %v159, 0
  %v1036 = vsel %vm605, %v160, 0
  %v1039 = vsel %vm605, %v161, 0
  %v1042 = vsel %vm605, %v162, 0
  %v1045 = vsel %vm605, %v163, 0
  %v1048 = vsel %vm605, %v164, 0
  %v1051 = vsel %vm605, %v165, 0
  %v1054 = vsel %vm605, %v166, 0
  %v1057 = vsel %vm605, %v167, 0
  %v1060 = vsel %vm605, %v168, 0
  %v1063 = vsel %vm605, %v169, 0
  %v1066 = vsel %vm605, %v170, 0
  %v1069 = vsel %vm605, %v171, 0
  %v1072 = vsel %vm605, %v172, 0
  %v1075 = vsel %vm605, %v173, 0
  %v1078 = vsel %vm605, %v174, 0
  %v1081 = vsel %vm605, %v175, 0
  %v1084 = vsel %vm605, %v176, 0
  %v1087 = vsel %vm605, %v177, 0
  %v1090 = vsel %vm605, %v178, 0
  %v1093 = vsel %vm605, %v179, 0
  %v1096 = vsel %vm605, %v180, 0
  %v1099 = vsel %vm605, %v181, 0
  %v1102 = vsel %vm605, %v182, 0
  %v1105 = vsel %vm605, %v183, 0
  %v1108 = vsel %vm605, %v184, 0
  %v1111 = vsel %vm605, %v185, 0
  %v1114 = vsel %vm605, %v186, 0
  %v1117 = vsel %vm605, %v187, 0
  %v1120 = vsel %vm605, %v188, 0
  %v1123 = vsel %vm605, %v189, 0
  %v1126 = vsel %vm605, %v190, 0
  %v1129 = vsel %vm605, %v191, 0
  %v1132 = vsel %vm605, %v192, 0
  %v1135 = vsel %vm605, %v193, 0
  %v1138 = vsel %vm605, %v194, 0
  %v1141 = vsel %vm605, %v195, 0
  %v1144 = vsel %vm605, %v196, 0
  %v1147 = vsel %vm605, %v197, 0
  %v1150 = vsel %vm605, %v198, 0
  %v1153 = vsel %vm605, %v199, 0
  %v1156 = vsel %vm605, %v200, 0
  %v1159 = vsel %vm605, %v201, 0
  %v1162 = vsel %vm605, %v202, 0
  %v1165 = vsel %vm605, %v203, 0
  %v1168 = vsel %vm605, %v204, 0
  %v1171 = vsel %vm605, %v205, 0
  %v1174 = vsel %vm605, %v206, 0
  %v1177 = vsel %vm605, %v207, 0
  %v1180 = vsel %vm605, %v208, 0
  %v1183 = vsel %vm605, %v209, 0
  %v1186 = vsel %vm605, %v210, 0
  %v1189 = vsel %vm605, %v211, 0
  %v1192 = vsel %vm605, %v212, 0
  %v1195 = vsel %vm605, %v213, 0
  %v1198 = vsel %vm605, %v214, 0
  %v1201 = vsel %vm605, %v215, 0
  %v1204 = vsel %vm605, %v216, 0
  %v1207 = vsel %vm605, %v217, 0
  %v1210 = vsel %vm605, %v218, 0
  %v1213 = vsel %vm605, %v219, 0
  %v1216 = vsel %vm605, %v220, 0
  %v1219 = vsel %vm605, %v221, 0
  %v1222 = vsel %vm605, %v222, 0
  %v1225 = vsel %vm605, %v223, 0
  %v1228 = vsel %vm605, %v224, 0
  %v1231 = vsel %vm605, %v225, 0
  %v1234 = vsel %vm605, %v226, 0
  %v1237 = vsel %vm605, %v227, 0
  %v1240 = vsel %vm605, %v228, 0
  %v1243 = vsel %vm605, %v229, 0
  %v1246 = vsel %vm605, %v230, 0
  %v1249 = vsel %vm605, %v231, 0
  %v1252 = vsel %vm605, %v232, 0
  %v1255 = vsel %vm605, %v233, 0
  %v1258 = vsel %vm605, %v234, 0
  %v1261 = vsel %vm605, %v235, 0
  %v1264 = vsel %vm605, %v236, 0
  %v1267 = vsel %vm605, %v237, 0
  %v1270 = vsel %vm605, %v238, 0
  %v1273 = vsel %vm605, %v239, 0
  %v1276 = vsel %vm605, %v240, 0
  %v1279 = vsel %vm605, %v241, 0
  %v1282 = vsel %vm605, %v242, 0
  %v1285 = vsel %vm605, %v243, 0
  %v1288 = vsel %vm605, %v244, 0
  %v1291 = vsel %vm605, %v245, 0
  %v1294 = vsel %vm605, %v246, 0
  %v1297 = vsel %vm605, %v247, 0
  %v1300 = vsel %vm605, %v248, 0
  %v1303 = vsel %vm605, %v249, 0
  %v1306 = vsel %vm605, %v250, 0
  %v1309 = vsel %vm605, %v251, 0
  %v1312 = vsel %vm605, %v252, 0
  %v1315 = vsel %vm605, %v253, 0
  %v1318 = vsel %vm605, %v254, 0
  %v1321 = vsel %vm605, %v255, 0
  %v1324 = vsel %vm605, %v256, 0
  %v1327 = vsel %vm605, %v257, 0
  %v1330 = vsel %vm605, %v258, 0
  %v1333 = vsel %vm605, %v259, 0
  %v1336 = vsel %vm605, %v260, 0
  %v1339 = vsel %vm605, %v261, 0
  %v1342 = vsel %vm605, %v262, 0
  %v1345 = vsel %vm605, %v263, 0
  %v1348 = vsel %vm605, %v264, 0
  %v1351 = vsel %vm605, %v265, 0
  %v1354 = vsel %vm605, %v266, 0
  %v1357 = vsel %vm605, %v267, 0
  %v1360 = vsel %vm605, %v268, 0
  %v1363 = vsel %vm605, %v269, 0
  %v1366 = vsel %vm605, %v270, 0
  %v1369 = vsel %vm605, %v271, 0
  %v1372 = vsel %vm605, %v272, 0
  %v1375 = vsel %vm605, %v273, 0
  %v1378 = vsel %vm605, %v274, 0
  %v1381 = vsel %vm605, %v275, 0
  %v1384 = vsel %vm605, %v276, 0
  %v1387 = vsel %vm605, %v277, 0
  %v1390 = vsel %vm605, %v278, 0
  %v1393 = vsel %vm605, %v279, 0
  %v1396 = vsel %vm605, %v280, 0
  %v1399 = vsel %vm605, %v281, 0
  %v1402 = vsel %vm605, %v282, 0
  %v1405 = vsel %vm605, %v283, 0
  %v1408 = vsel %vm605, %v284, 0
  %v1411 = vsel %vm605, %v285, 0
  %v1414 = vsel %vm605, %v286, 0
  %v1417 = vsel %vm605, %v287, 0
  %v1420 = vsel %vm605, %v288, 0
  %v1423 = vsel %vm605, %v289, 0
  %v1426 = vsel %vm605, %v290, 0
  %v1429 = vsel %vm605, %v291, 0
  %v1432 = vsel %vm605, %v292, 0
  %v1435 = vsel %vm605, %v293, 0
  %v1438 = vsel %vm605, %v294, 0
  %v1441 = vsel %vm605, %v295, 0
  %v1444 = vsel %vm605, %v296, 0
  %v1447 = vsel %vm605, %v297, 0
  %v1450 = vsel %vm605, %v298, 0
  %v1453 = vsel %vm605, %v299, 0
  %v1456 = vsel %vm605, %v300, 0
  %v1459 = vsel %vm605, %v301, 0
  %v1462 = vsel %vm605, %v302, 0
  %v1465 = vsel %vm605, %v303, 0
  %v1468 = vsel %vm605, %v304, 0
  %1470 = vmatprep.subr.mxu0 0.0
  %1471 = vmatpush1.msra.mxu0 %v305
  %1472 = vmatprep.subr.mxu0 0.0
  %1473 = vmatpush1.msra.mxu0 %v306
  %1474 = vmatprep.subr.mxu0 0.0
  %1475 = vmatpush1.msra.mxu0 %v307
  %1476 = vmatprep.subr.mxu0 0.0
  %1477 = vmatpush1.msra.mxu0 %v308
  %1478 = vmatprep.subr.mxu0 0.0
  %1479 = vmatpush1.msra.mxu0 %v309
  %1480 = vmatprep.subr.mxu0 0.0
  %1481 = vmatpush1.msra.mxu0 %v310
  %1482 = vmatprep.subr.mxu0 0.0
  %1483 = vmatpush1.msra.mxu0 %v311
  %1484 = vmatprep.subr.mxu0 0.0
  %1485 = vmatpush1.msra.mxu0 %v312
  %1486 = vmatprep.subr.mxu0 0.0
  %1487 = vmatpush1.msra.mxu0 %v313
  %1488 = vmatprep.subr.mxu0 0.0
  %1489 = vmatpush1.msra.mxu0 %v314
  %1490 = vmatprep.subr.mxu0 0.0
  %1491 = vmatpush1.msra.mxu0 %v315
  %1492 = vmatprep.subr.mxu0 0.0
  %1493 = vmatpush1.msra.mxu0 %v316
  %1494 = vmatprep.subr.mxu0 0.0
  %1495 = vmatpush1.msra.mxu0 0.0
  %1496 = vmatprep.subr.mxu0 0.0
  %1497 = vmatpush1.msra.mxu0 0.0
  %1498 = vmatprep.subr.mxu0 0.0
  %1499 = vmatpush1.msra.mxu0 0.0
  %1500 = vmatprep.subr.mxu0 0.0
  %1501 = vmatpush1.msra.mxu0 0.0
  %1502 = vmatprep.subr.mxu0 0.0
  %1503 = vmatpush1.msra.mxu0 0.0
  %1504 = vmatprep.subr.mxu0 0.0
  %1505 = vmatpush1.msra.mxu0 0.0
  %1506 = vmatprep.subr.mxu0 0.0
  %1507 = vmatpush1.msra.mxu0 0.0
  %1508 = vmatprep.subr.mxu0 0.0
  %1509 = vmatpush1.msra.mxu0 0.0
  %1510 = vmatprep.subr.mxu0 0.0
  %1511 = vmatpush1.msra.mxu0 0.0
  %1512 = vmatprep.subr.mxu0 0.0
  %1513 = vmatpush1.msra.mxu0 0.0
  %1514 = vmatprep.subr.mxu0 0.0
  %1515 = vmatpush1.msra.mxu0 0.0
  %1516 = vmatprep.subr.mxu0 0.0
  %1517 = vmatpush1.msra.mxu0 0.0
  %1518 = vmatprep.subr.mxu0 0.0
  %1519 = vmatpush1.msra.mxu0 0.0
  %1520 = vmatprep.subr.mxu0 0.0
  %1521 = vmatpush1.msra.mxu0 0.0
  %1522 = vmatprep.subr.mxu0 0.0
  %1523 = vmatpush1.msra.mxu0 0.0
  %1524 = vmatprep.subr.mxu0 0.0
  %1525 = vmatpush1.msra.mxu0 0.0
  %1526 = vmatprep.subr.mxu0 0.0
  %1527 = vmatpush1.msra.mxu0 0.0
  %1528 = vmatprep.subr.mxu0 0.0
  %1529 = vmatpush1.msra.mxu0 0.0
  %1530 = vmatprep.subr.mxu0 0.0
  %1531 = vmatpush1.msra.mxu0 0.0
  %1532 = vmatprep.subr.mxu0 0.0
  %1533 = vmatpush1.msra.mxu0 0.0
  %1534 = vmatprep.mubr.f32.mxu0 0.0
  %1535 = vmatmul.mubr.f32.gmra.mrb[0].mxu0 %v607
  %v1536 = vpop.f32.mrb[0].mxu0
  %v1537 = vadd.f32 %v317, %v1536
  %v1538 = vpop.f32.mrb[0].mxu0
  %1539 = vmatprep.mubr.f32.mxu0 0.0
  %1540 = vmatmul.mubr.f32.gmra.mrb[0].mxu0 %v610
  %v1541 = vpop.f32.mrb[0].mxu0
  %v1542 = vadd.f32 %v318, %v1541
  %v1543 = vpop.f32.mrb[0].mxu0
  %1544 = vmatprep.mubr.f32.mxu0 0.0
  %1545 = vmatmul.mubr.f32.gmra.mrb[0].mxu0 %v613
  %v1546 = vpop.f32.mrb[0].mxu0
  %v1547 = vadd.f32 %v319, %v1546
  %v1548 = vpop.f32.mrb[0].mxu0
  %1549 = vmatprep.mubr.f32.mxu0 0.0
  %1550 = vmatmul.mubr.f32.gmra.mrb[0].mxu0 %v616
  %v1551 = vpop.f32.mrb[0].mxu0
  %v1552 = vadd.f32 %v320, %v1551
  %v1553 = vpop.f32.mrb[0].mxu0
  %1554 = vmatprep.mubr.f32.mxu0 0.0
  %1555 = vmatmul.mubr.f32.gmra.mrb[0].mxu0 %v619
  %v1556 = vpop.f32.mrb[0].mxu0
  %v1557 = vadd.f32 %v321, %v1556
  %v1558 = vpop.f32.mrb[0].mxu0
  %1559 = vmatprep.mubr.f32.mxu0 0.0
  %1560 = vmatmul.mubr.f32.gmra.mrb[0].mxu0 %v622
  %v1561 = vpop.f32.mrb[0].mxu0
  %v1562 = vadd.f32 %v322, %v1561
  %v1563 = vpop.f32.mrb[0].mxu0
  %1564 = vmatprep.mubr.f32.mxu0 0.0
  %1565 = vmatmul.mubr.f32.gmra.mrb[0].mxu0 %v625
  %v1566 = vpop.f32.mrb[0].mxu0
  %v1567 = vadd.f32 %v323, %v1566
  %v1568 = vpop.f32.mrb[0].mxu0
  %1569 = vmatprep.mubr.f32.mxu0 0.0
  %1570 = vmatmul.mubr.f32.gmra.mrb[0].mxu0 %v628
  %v1571 = vpop.f32.mrb[0].mxu0
  %v1572 = vadd.f32 %v324, %v1571
  %v1573 = vpop.f32.mrb[0].mxu0
  %1574 = vmatprep.mubr.f32.mxu0 0.0
  %1575 = vmatmul.mubr.f32.gmra.mrb[0].mxu0 %v631
  %v1576 = vpop.f32.mrb[0].mxu0
  %v1577 = vadd.f32 %v325, %v1576
  %v1578 = vpop.f32.mrb[0].mxu0
  %1579 = vmatprep.mubr.f32.mxu0 0.0
  %1580 = vmatmul.mubr.f32.gmra.mrb[0].mxu0 %v634
  %v1581 = vpop.f32.mrb[0].mxu0
  %v1582 = vadd.f32 %v326, %v1581
  %v1583 = vpop.f32.mrb[0].mxu0
  %1584 = vmatprep.mubr.f32.mxu0 0.0
  %1585 = vmatmul.mubr.f32.gmra.mrb[0].mxu0 %v637
  %v1586 = vpop.f32.mrb[0].mxu0
  %v1587 = vadd.f32 %v327, %v1586
  %v1588 = vpop.f32.mrb[0].mxu0
  %1589 = vmatprep.mubr.f32.mxu0 0.0
  %1590 = vmatmul.mubr.f32.gmra.mrb[0].mxu0 %v640
  %v1591 = vpop.f32.mrb[0].mxu0
  %v1592 = vadd.f32 %v328, %v1591
  %v1593 = vpop.f32.mrb[0].mxu0
  %1594 = vmatprep.mubr.f32.mxu0 0.0
  %1595 = vmatmul.mubr.f32.gmra.mrb[0].mxu0 %v643
  %v1596 = vpop.f32.mrb[0].mxu0
  %v1597 = vadd.f32 %v329, %v1596
  %v1598 = vpop.f32.mrb[0].mxu0
  %1599 = vmatprep.mubr.f32.mxu0 0.0
  %1600 = vmatmul.mubr.f32.gmra.mrb[0].mxu0 %v646
  %v1601 = vpop.f32.mrb[0].mxu0
  %v1602 = vadd.f32 %v330, %v1601
  %v1603 = vpop.f32.mrb[0].mxu0
  %1604 = vmatprep.mubr.f32.mxu0 0.0
  %1605 = vmatmul.mubr.f32.gmra.mrb[0].mxu0 %v649
  %v1606 = vpop.f32.mrb[0].mxu0
  %v1607 = vadd.f32 %v331, %v1606
  %v1608 = vpop.f32.mrb[0].mxu0
  %1609 = vmatprep.mubr.f32.mxu0 0.0
  %1610 = vmatmul.mubr.f32.gmra.mrb[0].mxu0 %v652
  %v1611 = vpop.f32.mrb[0].mxu0
  %v1612 = vadd.f32 %v332, %v1611
  %v1613 = vpop.f32.mrb[0].mxu0
  %1614 = vmatprep.mubr.f32.mxu0 0.0
  %1615 = vmatmul.mubr.f32.gmra.mrb[0].mxu0 %v655
  %v1616 = vpop.f32.mrb[0].mxu0
  %v1617 = vadd.f32 %v333, %v1616
  %v1618 = vpop.f32.mrb[0].mxu0
  %1619 = vmatprep.mubr.f32.mxu0 0.0
  %1620 = vmatmul.mubr.f32.gmra.mrb[0].mxu0 %v658
  %v1621 = vpop.f32.mrb[0].mxu0
  %v1622 = vadd.f32 %v334, %v1621
  %v1623 = vpop.f32.mrb[0].mxu0
  %1624 = vmatprep.mubr.f32.mxu0 0.0
  %1625 = vmatmul.mubr.f32.gmra.mrb[0].mxu0 %v661
  %v1626 = vpop.f32.mrb[0].mxu0
  %v1627 = vadd.f32 %v335, %v1626
  %v1628 = vpop.f32.mrb[0].mxu0
  %1629 = vmatprep.mubr.f32.mxu0 0.0
  %1630 = vmatmul.mubr.f32.gmra.mrb[0].mxu0 %v664
  %v1631 = vpop.f32.mrb[0].mxu0
  %v1632 = vadd.f32 %v336, %v1631
  %v1633 = vpop.f32.mrb[0].mxu0
  %1634 = vmatprep.mubr.f32.mxu0 0.0
  %1635 = vmatmul.mubr.f32.gmra.mrb[0].mxu0 %v667
  %v1636 = vpop.f32.mrb[0].mxu0
  %v1637 = vadd.f32 %v337, %v1636
  %v1638 = vpop.f32.mrb[0].mxu0
  %1639 = vmatprep.mubr.f32.mxu0 0.0
  %1640 = vmatmul.mubr.f32.gmra.mrb[0].mxu0 %v670
  %v1641 = vpop.f32.mrb[0].mxu0
  %v1642 = vadd.f32 %v338, %v1641
  %v1643 = vpop.f32.mrb[0].mxu0
  %1644 = vmatprep.mubr.f32.mxu0 0.0
  %1645 = vmatmul.mubr.f32.gmra.mrb[0].mxu0 %v673
  %v1646 = vpop.f32.mrb[0].mxu0
  %v1647 = vadd.f32 %v339, %v1646
  %v1648 = vpop.f32.mrb[0].mxu0
  %1649 = vmatprep.mubr.f32.mxu0 0.0
  %1650 = vmatmul.mubr.f32.gmra.mrb[0].mxu0 %v676
  %v1651 = vpop.f32.mrb[0].mxu0
  %v1652 = vadd.f32 %v340, %v1651
  %v1653 = vpop.f32.mrb[0].mxu0
  %1654 = vmatprep.mubr.f32.mxu0 0.0
  %1655 = vmatmul.mubr.f32.gmra.mrb[0].mxu0 %v679
  %v1656 = vpop.f32.mrb[0].mxu0
  %v1657 = vadd.f32 %v341, %v1656
  %v1658 = vpop.f32.mrb[0].mxu0
  %1659 = vmatprep.mubr.f32.mxu0 0.0
  %1660 = vmatmul.mubr.f32.gmra.mrb[0].mxu0 %v682
  %v1661 = vpop.f32.mrb[0].mxu0
  %v1662 = vadd.f32 %v342, %v1661
  %v1663 = vpop.f32.mrb[0].mxu0
  %1664 = vmatprep.mubr.f32.mxu0 0.0
  %1665 = vmatmul.mubr.f32.gmra.mrb[0].mxu0 %v685
  %v1666 = vpop.f32.mrb[0].mxu0
  %v1667 = vadd.f32 %v343, %v1666
  %v1668 = vpop.f32.mrb[0].mxu0
  %1669 = vmatprep.mubr.f32.mxu0 0.0
  %1670 = vmatmul.mubr.f32.gmra.mrb[0].mxu0 %v688
  %v1671 = vpop.f32.mrb[0].mxu0
  %v1672 = vadd.f32 %v344, %v1671
  %v1673 = vpop.f32.mrb[0].mxu0
  %1674 = vmatprep.mubr.f32.mxu0 0.0
  %1675 = vmatmul.mubr.f32.gmra.mrb[0].mxu0 %v691
  %v1676 = vpop.f32.mrb[0].mxu0
  %v1677 = vadd.f32 %v345, %v1676
  %v1678 = vpop.f32.mrb[0].mxu0
  %1679 = vmatprep.mubr.f32.mxu0 0.0
  %1680 = vmatmul.mubr.f32.gmra.mrb[0].mxu0 %v694
  %v1681 = vpop.f32.mrb[0].mxu0
  %v1682 = vadd.f32 %v346, %v1681
  %v1683 = vpop.f32.mrb[0].mxu0
  %1684 = vmatprep.mubr.f32.mxu0 0.0
  %1685 = vmatmul.mubr.f32.gmra.mrb[0].mxu0 %v697
  %v1686 = vpop.f32.mrb[0].mxu0
  %v1687 = vadd.f32 %v347, %v1686
  %v1688 = vpop.f32.mrb[0].mxu0
  %1689 = vmatprep.mubr.f32.mxu0 0.0
  %1690 = vmatmul.mubr.f32.gmra.mrb[0].mxu0 %v700
  %v1691 = vpop.f32.mrb[0].mxu0
  %v1692 = vadd.f32 %v348, %v1691
  %v1693 = vpop.f32.mrb[0].mxu0
  %1694 = vmatprep.mubr.f32.mxu0 0.0
  %1695 = vmatmul.mubr.f32.gmra.mrb[0].mxu0 %v703
  %v1696 = vpop.f32.mrb[0].mxu0
  %v1697 = vadd.f32 %v349, %v1696
  %v1698 = vpop.f32.mrb[0].mxu0
  %1699 = vmatprep.mubr.f32.mxu0 0.0
  %1700 = vmatmul.mubr.f32.gmra.mrb[0].mxu0 %v706
  %v1701 = vpop.f32.mrb[0].mxu0
  %v1702 = vadd.f32 %v350, %v1701
  %v1703 = vpop.f32.mrb[0].mxu0
  %1704 = vmatprep.mubr.f32.mxu0 0.0
  %1705 = vmatmul.mubr.f32.gmra.mrb[0].mxu0 %v709
  %v1706 = vpop.f32.mrb[0].mxu0
  %v1707 = vadd.f32 %v351, %v1706
  %v1708 = vpop.f32.mrb[0].mxu0
  %1709 = vmatprep.mubr.f32.mxu0 0.0
  %1710 = vmatmul.mubr.f32.gmra.mrb[0].mxu0 %v712
  %v1711 = vpop.f32.mrb[0].mxu0
  %v1712 = vadd.f32 %v352, %v1711
  %v1713 = vpop.f32.mrb[0].mxu0
  %1714 = vmatprep.mubr.f32.mxu0 0.0
  %1715 = vmatmul.mubr.f32.gmra.mrb[0].mxu0 %v715
  %v1716 = vpop.f32.mrb[0].mxu0
  %v1717 = vadd.f32 %v353, %v1716
  %v1718 = vpop.f32.mrb[0].mxu0
  %1719 = vmatprep.mubr.f32.mxu0 0.0
  %1720 = vmatmul.mubr.f32.gmra.mrb[0].mxu0 %v718
  %v1721 = vpop.f32.mrb[0].mxu0
  %v1722 = vadd.f32 %v354, %v1721
  %v1723 = vpop.f32.mrb[0].mxu0
  %1724 = vmatprep.mubr.f32.mxu0 0.0
  %1725 = vmatmul.mubr.f32.gmra.mrb[0].mxu0 %v721
  %v1726 = vpop.f32.mrb[0].mxu0
  %v1727 = vadd.f32 %v355, %v1726
  %v1728 = vpop.f32.mrb[0].mxu0
  %1729 = vmatprep.mubr.f32.mxu0 0.0
  %1730 = vmatmul.mubr.f32.gmra.mrb[0].mxu0 %v724
  %v1731 = vpop.f32.mrb[0].mxu0
  %v1732 = vadd.f32 %v356, %v1731
  %v1733 = vpop.f32.mrb[0].mxu0
  %1734 = vmatprep.mubr.f32.mxu0 0.0
  %1735 = vmatmul.mubr.f32.gmra.mrb[0].mxu0 %v727
  %v1736 = vpop.f32.mrb[0].mxu0
  %v1737 = vadd.f32 %v357, %v1736
  %v1738 = vpop.f32.mrb[0].mxu0
  %1739 = vmatprep.mubr.f32.mxu0 0.0
  %1740 = vmatmul.mubr.f32.gmra.mrb[0].mxu0 %v730
  %v1741 = vpop.f32.mrb[0].mxu0
  %v1742 = vadd.f32 %v358, %v1741
  %v1743 = vpop.f32.mrb[0].mxu0
  %1744 = vmatprep.mubr.f32.mxu0 0.0
  %1745 = vmatmul.mubr.f32.gmra.mrb[0].mxu0 %v733
  %v1746 = vpop.f32.mrb[0].mxu0
  %v1747 = vadd.f32 %v359, %v1746
  %v1748 = vpop.f32.mrb[0].mxu0
  %1749 = vmatprep.mubr.f32.mxu0 0.0
  %1750 = vmatmul.mubr.f32.gmra.mrb[0].mxu0 %v736
  %v1751 = vpop.f32.mrb[0].mxu0
  %v1752 = vadd.f32 %v360, %v1751
  %v1753 = vpop.f32.mrb[0].mxu0
  %1754 = vmatprep.mubr.f32.mxu0 0.0
  %1755 = vmatmul.mubr.f32.gmra.mrb[0].mxu0 %v739
  %v1756 = vpop.f32.mrb[0].mxu0
  %v1757 = vadd.f32 %v361, %v1756
  %v1758 = vpop.f32.mrb[0].mxu0
  %1759 = vmatprep.mubr.f32.mxu0 0.0
  %1760 = vmatmul.mubr.f32.gmra.mrb[0].mxu0 %v742
  %v1761 = vpop.f32.mrb[0].mxu0
  %v1762 = vadd.f32 %v362, %v1761
  %v1763 = vpop.f32.mrb[0].mxu0
  %1764 = vmatprep.mubr.f32.mxu0 0.0
  %1765 = vmatmul.mubr.f32.gmra.mrb[0].mxu0 %v745
  %v1766 = vpop.f32.mrb[0].mxu0
  %v1767 = vadd.f32 %v363, %v1766
  %v1768 = vpop.f32.mrb[0].mxu0
  %1769 = vmatprep.mubr.f32.mxu0 0.0
  %1770 = vmatmul.mubr.f32.gmra.mrb[0].mxu0 %v748
  %v1771 = vpop.f32.mrb[0].mxu0
  %v1772 = vadd.f32 %v364, %v1771
  %v1773 = vpop.f32.mrb[0].mxu0
  %1774 = vmatprep.mubr.f32.mxu0 0.0
  %1775 = vmatmul.mubr.f32.gmra.mrb[0].mxu0 %v751
  %v1776 = vpop.f32.mrb[0].mxu0
  %v1777 = vadd.f32 %v365, %v1776
  %v1778 = vpop.f32.mrb[0].mxu0
  %1779 = vmatprep.mubr.f32.mxu0 0.0
  %1780 = vmatmul.mubr.f32.gmra.mrb[0].mxu0 %v754
  %v1781 = vpop.f32.mrb[0].mxu0
  %v1782 = vadd.f32 %v366, %v1781
  %v1783 = vpop.f32.mrb[0].mxu0
  %1784 = vmatprep.mubr.f32.mxu0 0.0
  %1785 = vmatmul.mubr.f32.gmra.mrb[0].mxu0 %v757
  %v1786 = vpop.f32.mrb[0].mxu0
  %v1787 = vadd.f32 %v367, %v1786
  %v1788 = vpop.f32.mrb[0].mxu0
  %1789 = vmatprep.mubr.f32.mxu0 0.0
  %1790 = vmatmul.mubr.f32.gmra.mrb[0].mxu0 %v760
  %v1791 = vpop.f32.mrb[0].mxu0
  %v1792 = vadd.f32 %v368, %v1791
  %v1793 = vpop.f32.mrb[0].mxu0
  %1794 = vmatprep.mubr.f32.mxu0 0.0
  %1795 = vmatmul.mubr.f32.gmra.mrb[0].mxu0 %v763
  %v1796 = vpop.f32.mrb[0].mxu0
  %v1797 = vadd.f32 %v369, %v1796
  %v1798 = vpop.f32.mrb[0].mxu0
  %1799 = vmatprep.mubr.f32.mxu0 0.0
  %1800 = vmatmul.mubr.f32.gmra.mrb[0].mxu0 %v766
  %v1801 = vpop.f32.mrb[0].mxu0
  %v1802 = vadd.f32 %v370, %v1801
  %v1803 = vpop.f32.mrb[0].mxu0
  %1804 = vmatprep.mubr.f32.mxu0 0.0
  %1805 = vmatmul.mubr.f32.gmra.mrb[0].mxu0 %v769
  %v1806 = vpop.f32.mrb[0].mxu0
  %v1807 = vadd.f32 %v371, %v1806
  %v1808 = vpop.f32.mrb[0].mxu0
  %1809 = vmatprep.mubr.f32.mxu0 0.0
  %1810 = vmatmul.mubr.f32.gmra.mrb[0].mxu0 %v772
  %v1811 = vpop.f32.mrb[0].mxu0
  %v1812 = vadd.f32 %v372, %v1811
  %v1813 = vpop.f32.mrb[0].mxu0
  %1814 = vmatprep.mubr.f32.mxu0 0.0
  %1815 = vmatmul.mubr.f32.gmra.mrb[0].mxu0 %v775
  %v1816 = vpop.f32.mrb[0].mxu0
  %v1817 = vadd.f32 %v373, %v1816
  %v1818 = vpop.f32.mrb[0].mxu0
  %1819 = vmatprep.mubr.f32.mxu0 0.0
  %1820 = vmatmul.mubr.f32.gmra.mrb[0].mxu0 %v778
  %v1821 = vpop.f32.mrb[0].mxu0
  %v1822 = vadd.f32 %v374, %v1821
  %v1823 = vpop.f32.mrb[0].mxu0
  %1824 = vmatprep.mubr.f32.mxu0 0.0
  %1825 = vmatmul.mubr.f32.gmra.mrb[0].mxu0 %v781
  %v1826 = vpop.f32.mrb[0].mxu0
  %v1827 = vadd.f32 %v375, %v1826
  %v1828 = vpop.f32.mrb[0].mxu0
  %1829 = vmatprep.mubr.f32.mxu0 0.0
  %1830 = vmatmul.mubr.f32.gmra.mrb[0].mxu0 %v784
  %v1831 = vpop.f32.mrb[0].mxu0
  %v1832 = vadd.f32 %v376, %v1831
  %v1833 = vpop.f32.mrb[0].mxu0
  %1834 = vmatprep.mubr.f32.mxu0 0.0
  %1835 = vmatmul.mubr.f32.gmra.mrb[0].mxu0 %v787
  %v1836 = vpop.f32.mrb[0].mxu0
  %v1837 = vadd.f32 %v377, %v1836
  %v1838 = vpop.f32.mrb[0].mxu0
  %1839 = vmatprep.mubr.f32.mxu0 0.0
  %1840 = vmatmul.mubr.f32.gmra.mrb[0].mxu0 %v790
  %v1841 = vpop.f32.mrb[0].mxu0
  %v1842 = vadd.f32 %v378, %v1841
  %v1843 = vpop.f32.mrb[0].mxu0
  %1844 = vmatprep.mubr.f32.mxu0 0.0
  %1845 = vmatmul.mubr.f32.gmra.mrb[0].mxu0 %v793
  %v1846 = vpop.f32.mrb[0].mxu0
  %v1847 = vadd.f32 %v379, %v1846
  %v1848 = vpop.f32.mrb[0].mxu0
  %1849 = vmatprep.mubr.f32.mxu0 0.0
  %1850 = vmatmul.mubr.f32.gmra.mrb[0].mxu0 %v796
  %v1851 = vpop.f32.mrb[0].mxu0
  %v1852 = vadd.f32 %v380, %v1851
  %v1853 = vpop.f32.mrb[0].mxu0
  %1854 = vmatprep.mubr.f32.mxu0 0.0
  %1855 = vmatmul.mubr.f32.gmra.mrb[0].mxu0 %v799
  %v1856 = vpop.f32.mrb[0].mxu0
  %v1857 = vadd.f32 %v381, %v1856
  %v1858 = vpop.f32.mrb[0].mxu0
  %1859 = vmatprep.mubr.f32.mxu0 0.0
  %1860 = vmatmul.mubr.f32.gmra.mrb[0].mxu0 %v802
  %v1861 = vpop.f32.mrb[0].mxu0
  %v1862 = vadd.f32 %v382, %v1861
  %v1863 = vpop.f32.mrb[0].mxu0
  %1864 = vmatprep.mubr.f32.mxu0 0.0
  %1865 = vmatmul.mubr.f32.gmra.mrb[0].mxu0 %v805
  %v1866 = vpop.f32.mrb[0].mxu0
  %v1867 = vadd.f32 %v383, %v1866
  %v1868 = vpop.f32.mrb[0].mxu0
  %1869 = vmatprep.mubr.f32.mxu0 0.0
  %1870 = vmatmul.mubr.f32.gmra.mrb[0].mxu0 %v808
  %v1871 = vpop.f32.mrb[0].mxu0
  %v1872 = vadd.f32 %v384, %v1871
  %v1873 = vpop.f32.mrb[0].mxu0
  %1874 = vmatprep.mubr.f32.mxu0 0.0
  %1875 = vmatmul.mubr.f32.gmra.mrb[0].mxu0 %v811
  %v1876 = vpop.f32.mrb[0].mxu0
  %v1877 = vadd.f32 %v385, %v1876
  %v1878 = vpop.f32.mrb[0].mxu0
  %1879 = vmatprep.mubr.f32.mxu0 0.0
  %1880 = vmatmul.mubr.f32.gmra.mrb[0].mxu0 %v814
  %v1881 = vpop.f32.mrb[0].mxu0
  %v1882 = vadd.f32 %v386, %v1881
  %v1883 = vpop.f32.mrb[0].mxu0
  %1884 = vmatprep.mubr.f32.mxu0 0.0
  %1885 = vmatmul.mubr.f32.gmra.mrb[0].mxu0 %v817
  %v1886 = vpop.f32.mrb[0].mxu0
  %v1887 = vadd.f32 %v387, %v1886
  %v1888 = vpop.f32.mrb[0].mxu0
  %1889 = vmatprep.mubr.f32.mxu0 0.0
  %1890 = vmatmul.mubr.f32.gmra.mrb[0].mxu0 %v820
  %v1891 = vpop.f32.mrb[0].mxu0
  %v1892 = vadd.f32 %v388, %v1891
  %v1893 = vpop.f32.mrb[0].mxu0
  %1894 = vmatprep.mubr.f32.mxu0 0.0
  %1895 = vmatmul.mubr.f32.gmra.mrb[0].mxu0 %v823
  %v1896 = vpop.f32.mrb[0].mxu0
  %v1897 = vadd.f32 %v389, %v1896
  %v1898 = vpop.f32.mrb[0].mxu0
  %1899 = vmatprep.mubr.f32.mxu0 0.0
  %1900 = vmatmul.mubr.f32.gmra.mrb[0].mxu0 %v826
  %v1901 = vpop.f32.mrb[0].mxu0
  %v1902 = vadd.f32 %v390, %v1901
  %v1903 = vpop.f32.mrb[0].mxu0
  %1904 = vmatprep.mubr.f32.mxu0 0.0
  %1905 = vmatmul.mubr.f32.gmra.mrb[0].mxu0 %v829
  %v1906 = vpop.f32.mrb[0].mxu0
  %v1907 = vadd.f32 %v391, %v1906
  %v1908 = vpop.f32.mrb[0].mxu0
  %1909 = vmatprep.mubr.f32.mxu0 0.0
  %1910 = vmatmul.mubr.f32.gmra.mrb[0].mxu0 %v832
  %v1911 = vpop.f32.mrb[0].mxu0
  %v1912 = vadd.f32 %v392, %v1911
  %v1913 = vpop.f32.mrb[0].mxu0
  %1914 = vmatprep.mubr.f32.mxu0 0.0
  %1915 = vmatmul.mubr.f32.gmra.mrb[0].mxu0 %v835
  %v1916 = vpop.f32.mrb[0].mxu0
  %v1917 = vadd.f32 %v393, %v1916
  %v1918 = vpop.f32.mrb[0].mxu0
  %1919 = vmatprep.mubr.f32.mxu0 0.0
  %1920 = vmatmul.mubr.f32.gmra.mrb[0].mxu0 %v838
  %v1921 = vpop.f32.mrb[0].mxu0
  %v1922 = vadd.f32 %v394, %v1921
  %v1923 = vpop.f32.mrb[0].mxu0
  %1924 = vmatprep.mubr.f32.mxu0 0.0
  %1925 = vmatmul.mubr.f32.gmra.mrb[0].mxu0 %v841
  %v1926 = vpop.f32.mrb[0].mxu0
  %v1927 = vadd.f32 %v395, %v1926
  %v1928 = vpop.f32.mrb[0].mxu0
  %1929 = vmatprep.mubr.f32.mxu0 0.0
  %1930 = vmatmul.mubr.f32.gmra.mrb[0].mxu0 %v844
  %v1931 = vpop.f32.mrb[0].mxu0
  %v1932 = vadd.f32 %v396, %v1931
  %v1933 = vpop.f32.mrb[0].mxu0
  %1934 = vmatprep.mubr.f32.mxu0 0.0
  %1935 = vmatmul.mubr.f32.gmra.mrb[0].mxu0 %v847
  %v1936 = vpop.f32.mrb[0].mxu0
  %v1937 = vadd.f32 %v397, %v1936
  %v1938 = vpop.f32.mrb[0].mxu0
  %1939 = vmatprep.mubr.f32.mxu0 0.0
  %1940 = vmatmul.mubr.f32.gmra.mrb[0].mxu0 %v850
  %v1941 = vpop.f32.mrb[0].mxu0
  %v1942 = vadd.f32 %v398, %v1941
  %v1943 = vpop.f32.mrb[0].mxu0
  %1944 = vmatprep.mubr.f32.mxu0 0.0
  %1945 = vmatmul.mubr.f32.gmra.mrb[0].mxu0 %v853
  %v1946 = vpop.f32.mrb[0].mxu0
  %v1947 = vadd.f32 %v399, %v1946
  %v1948 = vpop.f32.mrb[0].mxu0
  %1949 = vmatprep.mubr.f32.mxu0 0.0
  %1950 = vmatmul.mubr.f32.gmra.mrb[0].mxu0 %v856
  %v1951 = vpop.f32.mrb[0].mxu0
  %v1952 = vadd.f32 %v400, %v1951
  %v1953 = vpop.f32.mrb[0].mxu0
  %1954 = vmatprep.mubr.f32.mxu0 0.0
  %1955 = vmatmul.mubr.f32.gmra.mrb[0].mxu0 %v859
  %v1956 = vpop.f32.mrb[0].mxu0
  %v1957 = vadd.f32 %v401, %v1956
  %v1958 = vpop.f32.mrb[0].mxu0
  %1959 = vmatprep.mubr.f32.mxu0 0.0
  %1960 = vmatmul.mubr.f32.gmra.mrb[0].mxu0 %v862
  %v1961 = vpop.f32.mrb[0].mxu0
  %v1962 = vadd.f32 %v402, %v1961
  %v1963 = vpop.f32.mrb[0].mxu0
  %1964 = vmatprep.mubr.f32.mxu0 0.0
  %1965 = vmatmul.mubr.f32.gmra.mrb[0].mxu0 %v865
  %v1966 = vpop.f32.mrb[0].mxu0
  %v1967 = vadd.f32 %v403, %v1966
  %v1968 = vpop.f32.mrb[0].mxu0
  %1969 = vmatprep.mubr.f32.mxu0 0.0
  %1970 = vmatmul.mubr.f32.gmra.mrb[0].mxu0 %v868
  %v1971 = vpop.f32.mrb[0].mxu0
  %v1972 = vadd.f32 %v404, %v1971
  %v1973 = vpop.f32.mrb[0].mxu0
  %1974 = vmatprep.mubr.f32.mxu0 0.0
  %1975 = vmatmul.mubr.f32.gmra.mrb[0].mxu0 %v871
  %v1976 = vpop.f32.mrb[0].mxu0
  %v1977 = vadd.f32 %v405, %v1976
  %v1978 = vpop.f32.mrb[0].mxu0
  %1979 = vmatprep.mubr.f32.mxu0 0.0
  %1980 = vmatmul.mubr.f32.gmra.mrb[0].mxu0 %v874
  %v1981 = vpop.f32.mrb[0].mxu0
  %v1982 = vadd.f32 %v406, %v1981
  %v1983 = vpop.f32.mrb[0].mxu0
  %1984 = vmatprep.mubr.f32.mxu0 0.0
  %1985 = vmatmul.mubr.f32.gmra.mrb[0].mxu0 %v877
  %v1986 = vpop.f32.mrb[0].mxu0
  %v1987 = vadd.f32 %v407, %v1986
  %v1988 = vpop.f32.mrb[0].mxu0
  %1989 = vmatprep.mubr.f32.mxu0 0.0
  %1990 = vmatmul.mubr.f32.gmra.mrb[0].mxu0 %v880
  %v1991 = vpop.f32.mrb[0].mxu0
  %v1992 = vadd.f32 %v408, %v1991
  %v1993 = vpop.f32.mrb[0].mxu0
  %1994 = vmatprep.mubr.f32.mxu0 0.0
  %1995 = vmatmul.mubr.f32.gmra.mrb[0].mxu0 %v883
  %v1996 = vpop.f32.mrb[0].mxu0
  %v1997 = vadd.f32 %v409, %v1996
  %v1998 = vpop.f32.mrb[0].mxu0
  %1999 = vmatprep.mubr.f32.mxu0 0.0
  %2000 = vmatmul.mubr.f32.gmra.mrb[0].mxu0 %v886
  %v2001 = vpop.f32.mrb[0].mxu0
  %v2002 = vadd.f32 %v410, %v2001
  %v2003 = vpop.f32.mrb[0].mxu0
  %2004 = vmatprep.mubr.f32.mxu0 0.0
  %2005 = vmatmul.mubr.f32.gmra.mrb[0].mxu0 %v889
  %v2006 = vpop.f32.mrb[0].mxu0
  %v2007 = vadd.f32 %v411, %v2006
  %v2008 = vpop.f32.mrb[0].mxu0
  %2009 = vmatprep.mubr.f32.mxu0 0.0
  %2010 = vmatmul.mubr.f32.gmra.mrb[0].mxu0 %v892
  %v2011 = vpop.f32.mrb[0].mxu0
  %v2012 = vadd.f32 %v412, %v2011
  %v2013 = vpop.f32.mrb[0].mxu0
  %2014 = vmatprep.mubr.f32.mxu0 0.0
  %2015 = vmatmul.mubr.f32.gmra.mrb[0].mxu0 %v895
  %v2016 = vpop.f32.mrb[0].mxu0
  %v2017 = vadd.f32 %v413, %v2016
  %v2018 = vpop.f32.mrb[0].mxu0
  %2019 = vmatprep.mubr.f32.mxu0 0.0
  %2020 = vmatmul.mubr.f32.gmra.mrb[0].mxu0 %v898
  %v2021 = vpop.f32.mrb[0].mxu0
  %v2022 = vadd.f32 %v414, %v2021
  %v2023 = vpop.f32.mrb[0].mxu0
  %2024 = vmatprep.mubr.f32.mxu0 0.0
  %2025 = vmatmul.mubr.f32.gmra.mrb[0].mxu0 %v901
  %v2026 = vpop.f32.mrb[0].mxu0
  %v2027 = vadd.f32 %v415, %v2026
  %v2028 = vpop.f32.mrb[0].mxu0
  %2029 = vmatprep.mubr.f32.mxu0 0.0
  %2030 = vmatmul.mubr.f32.gmra.mrb[0].mxu0 %v904
  %v2031 = vpop.f32.mrb[0].mxu0
  %v2032 = vadd.f32 %v416, %v2031
  %v2033 = vpop.f32.mrb[0].mxu0
  %2034 = vmatprep.mubr.f32.mxu0 0.0
  %2035 = vmatmul.mubr.f32.gmra.mrb[0].mxu0 %v907
  %v2036 = vpop.f32.mrb[0].mxu0
  %v2037 = vadd.f32 %v417, %v2036
  %v2038 = vpop.f32.mrb[0].mxu0
  %2039 = vmatprep.mubr.f32.mxu0 0.0
  %2040 = vmatmul.mubr.f32.gmra.mrb[0].mxu0 %v910
  %v2041 = vpop.f32.mrb[0].mxu0
  %v2042 = vadd.f32 %v418, %v2041
  %v2043 = vpop.f32.mrb[0].mxu0
  %2044 = vmatprep.mubr.f32.mxu0 0.0
  %2045 = vmatmul.mubr.f32.gmra.mrb[0].mxu0 %v913
  %v2046 = vpop.f32.mrb[0].mxu0
  %v2047 = vadd.f32 %v419, %v2046
  %v2048 = vpop.f32.mrb[0].mxu0
  %2049 = vmatprep.mubr.f32.mxu0 0.0
  %2050 = vmatmul.mubr.f32.gmra.mrb[0].mxu0 %v916
  %v2051 = vpop.f32.mrb[0].mxu0
  %v2052 = vadd.f32 %v420, %v2051
  %v2053 = vpop.f32.mrb[0].mxu0
  %2054 = vmatprep.mubr.f32.mxu0 0.0
  %2055 = vmatmul.mubr.f32.gmra.mrb[0].mxu0 %v919
  %v2056 = vpop.f32.mrb[0].mxu0
  %v2057 = vadd.f32 %v421, %v2056
  %v2058 = vpop.f32.mrb[0].mxu0
  %2059 = vmatprep.mubr.f32.mxu0 0.0
  %2060 = vmatmul.mubr.f32.gmra.mrb[0].mxu0 %v922
  %v2061 = vpop.f32.mrb[0].mxu0
  %v2062 = vadd.f32 %v422, %v2061
  %v2063 = vpop.f32.mrb[0].mxu0
  %2064 = vmatprep.mubr.f32.mxu0 0.0
  %2065 = vmatmul.mubr.f32.gmra.mrb[0].mxu0 %v925
  %v2066 = vpop.f32.mrb[0].mxu0
  %v2067 = vadd.f32 %v423, %v2066
  %v2068 = vpop.f32.mrb[0].mxu0
  %2069 = vmatprep.mubr.f32.mxu0 0.0
  %2070 = vmatmul.mubr.f32.gmra.mrb[0].mxu0 %v928
  %v2071 = vpop.f32.mrb[0].mxu0
  %v2072 = vadd.f32 %v424, %v2071
  %v2073 = vpop.f32.mrb[0].mxu0
  %2074 = vmatprep.mubr.f32.mxu0 0.0
  %2075 = vmatmul.mubr.f32.gmra.mrb[0].mxu0 %v931
  %v2076 = vpop.f32.mrb[0].mxu0
  %v2077 = vadd.f32 %v425, %v2076
  %v2078 = vpop.f32.mrb[0].mxu0
  %2079 = vmatprep.mubr.f32.mxu0 0.0
  %2080 = vmatmul.mubr.f32.gmra.mrb[0].mxu0 %v934
  %v2081 = vpop.f32.mrb[0].mxu0
  %v2082 = vadd.f32 %v426, %v2081
  %v2083 = vpop.f32.mrb[0].mxu0
  %2084 = vmatprep.mubr.f32.mxu0 0.0
  %2085 = vmatmul.mubr.f32.gmra.mrb[0].mxu0 %v937
  %v2086 = vpop.f32.mrb[0].mxu0
  %v2087 = vadd.f32 %v427, %v2086
  %v2088 = vpop.f32.mrb[0].mxu0
  %2089 = vmatprep.mubr.f32.mxu0 0.0
  %2090 = vmatmul.mubr.f32.gmra.mrb[0].mxu0 %v940
  %v2091 = vpop.f32.mrb[0].mxu0
  %v2092 = vadd.f32 %v428, %v2091
  %v2093 = vpop.f32.mrb[0].mxu0
  %2094 = vmatprep.mubr.f32.mxu0 0.0
  %2095 = vmatmul.mubr.f32.gmra.mrb[0].mxu0 %v943
  %v2096 = vpop.f32.mrb[0].mxu0
  %v2097 = vadd.f32 %v429, %v2096
  %v2098 = vpop.f32.mrb[0].mxu0
  %2099 = vmatprep.mubr.f32.mxu0 0.0
  %2100 = vmatmul.mubr.f32.gmra.mrb[0].mxu0 %v946
  %v2101 = vpop.f32.mrb[0].mxu0
  %v2102 = vadd.f32 %v430, %v2101
  %v2103 = vpop.f32.mrb[0].mxu0
  %2104 = vmatprep.mubr.f32.mxu0 0.0
  %2105 = vmatmul.mubr.f32.gmra.mrb[0].mxu0 %v949
  %v2106 = vpop.f32.mrb[0].mxu0
  %v2107 = vadd.f32 %v431, %v2106
  %v2108 = vpop.f32.mrb[0].mxu0
  %2109 = vmatprep.mubr.f32.mxu0 0.0
  %2110 = vmatmul.mubr.f32.gmra.mrb[0].mxu0 %v952
  %v2111 = vpop.f32.mrb[0].mxu0
  %v2112 = vadd.f32 %v432, %v2111
  %v2113 = vpop.f32.mrb[0].mxu0
  %2114 = vmatprep.mubr.f32.mxu0 0.0
  %2115 = vmatmul.mubr.f32.gmra.mrb[0].mxu0 %v955
  %v2116 = vpop.f32.mrb[0].mxu0
  %v2117 = vadd.f32 %v433, %v2116
  %v2118 = vpop.f32.mrb[0].mxu0
  %2119 = vmatprep.mubr.f32.mxu0 0.0
  %2120 = vmatmul.mubr.f32.gmra.mrb[0].mxu0 %v958
  %v2121 = vpop.f32.mrb[0].mxu0
  %v2122 = vadd.f32 %v434, %v2121
  %v2123 = vpop.f32.mrb[0].mxu0
  %2124 = vmatprep.mubr.f32.mxu0 0.0
  %2125 = vmatmul.mubr.f32.gmra.mrb[0].mxu0 %v961
  %v2126 = vpop.f32.mrb[0].mxu0
  %v2127 = vadd.f32 %v435, %v2126
  %v2128 = vpop.f32.mrb[0].mxu0
  %2129 = vmatprep.mubr.f32.mxu0 0.0
  %2130 = vmatmul.mubr.f32.gmra.mrb[0].mxu0 %v964
  %v2131 = vpop.f32.mrb[0].mxu0
  %v2132 = vadd.f32 %v436, %v2131
  %v2133 = vpop.f32.mrb[0].mxu0
  %2134 = vmatprep.mubr.f32.mxu0 0.0
  %2135 = vmatmul.mubr.f32.gmra.mrb[0].mxu0 %v967
  %v2136 = vpop.f32.mrb[0].mxu0
  %v2137 = vadd.f32 %v437, %v2136
  %v2138 = vpop.f32.mrb[0].mxu0
  %2139 = vmatprep.mubr.f32.mxu0 0.0
  %2140 = vmatmul.mubr.f32.gmra.mrb[0].mxu0 %v970
  %v2141 = vpop.f32.mrb[0].mxu0
  %v2142 = vadd.f32 %v438, %v2141
  %v2143 = vpop.f32.mrb[0].mxu0
  %2144 = vmatprep.mubr.f32.mxu0 0.0
  %2145 = vmatmul.mubr.f32.gmra.mrb[0].mxu0 %v973
  %v2146 = vpop.f32.mrb[0].mxu0
  %v2147 = vadd.f32 %v439, %v2146
  %v2148 = vpop.f32.mrb[0].mxu0
  %2149 = vmatprep.mubr.f32.mxu0 0.0
  %2150 = vmatmul.mubr.f32.gmra.mrb[0].mxu0 %v976
  %v2151 = vpop.f32.mrb[0].mxu0
  %v2152 = vadd.f32 %v440, %v2151
  %v2153 = vpop.f32.mrb[0].mxu0
  %2154 = vmatprep.mubr.f32.mxu0 0.0
  %2155 = vmatmul.mubr.f32.gmra.mrb[0].mxu0 %v979
  %v2156 = vpop.f32.mrb[0].mxu0
  %v2157 = vadd.f32 %v441, %v2156
  %v2158 = vpop.f32.mrb[0].mxu0
  %2159 = vmatprep.mubr.f32.mxu0 0.0
  %2160 = vmatmul.mubr.f32.gmra.mrb[0].mxu0 %v982
  %v2161 = vpop.f32.mrb[0].mxu0
  %v2162 = vadd.f32 %v442, %v2161
  %v2163 = vpop.f32.mrb[0].mxu0
  %2164 = vmatprep.mubr.f32.mxu0 0.0
  %2165 = vmatmul.mubr.f32.gmra.mrb[0].mxu0 %v985
  %v2166 = vpop.f32.mrb[0].mxu0
  %v2167 = vadd.f32 %v443, %v2166
  %v2168 = vpop.f32.mrb[0].mxu0
  %2169 = vmatprep.mubr.f32.mxu0 0.0
  %2170 = vmatmul.mubr.f32.gmra.mrb[0].mxu0 %v988
  %v2171 = vpop.f32.mrb[0].mxu0
  %v2172 = vadd.f32 %v444, %v2171
  %v2173 = vpop.f32.mrb[0].mxu0
  %2174 = vmatprep.mubr.f32.mxu0 0.0
  %2175 = vmatmul.mubr.f32.gmra.mrb[0].mxu0 %v991
  %v2176 = vpop.f32.mrb[0].mxu0
  %v2177 = vadd.f32 %v445, %v2176
  %v2178 = vpop.f32.mrb[0].mxu0
  %2179 = vmatprep.mubr.f32.mxu0 0.0
  %2180 = vmatmul.mubr.f32.gmra.mrb[0].mxu0 %v994
  %v2181 = vpop.f32.mrb[0].mxu0
  %v2182 = vadd.f32 %v446, %v2181
  %v2183 = vpop.f32.mrb[0].mxu0
  %2184 = vmatprep.mubr.f32.mxu0 0.0
  %2185 = vmatmul.mubr.f32.gmra.mrb[0].mxu0 %v997
  %v2186 = vpop.f32.mrb[0].mxu0
  %v2187 = vadd.f32 %v447, %v2186
  %v2188 = vpop.f32.mrb[0].mxu0
  %2189 = vmatprep.mubr.f32.mxu0 0.0
  %2190 = vmatmul.mubr.f32.gmra.mrb[0].mxu0 %v1000
  %v2191 = vpop.f32.mrb[0].mxu0
  %v2192 = vadd.f32 %v448, %v2191
  %v2193 = vpop.f32.mrb[0].mxu0
  %2194 = vmatprep.mubr.f32.mxu0 0.0
  %2195 = vmatmul.mubr.f32.gmra.mrb[0].mxu0 %v1003
  %v2196 = vpop.f32.mrb[0].mxu0
  %v2197 = vadd.f32 %v449, %v2196
  %v2198 = vpop.f32.mrb[0].mxu0
  %2199 = vmatprep.mubr.f32.mxu0 0.0
  %2200 = vmatmul.mubr.f32.gmra.mrb[0].mxu0 %v1006
  %v2201 = vpop.f32.mrb[0].mxu0
  %v2202 = vadd.f32 %v450, %v2201
  %v2203 = vpop.f32.mrb[0].mxu0
  %2204 = vmatprep.mubr.f32.mxu0 0.0
  %2205 = vmatmul.mubr.f32.gmra.mrb[0].mxu0 %v1009
  %v2206 = vpop.f32.mrb[0].mxu0
  %v2207 = vadd.f32 %v451, %v2206
  %v2208 = vpop.f32.mrb[0].mxu0
  %2209 = vmatprep.mubr.f32.mxu0 0.0
  %2210 = vmatmul.mubr.f32.gmra.mrb[0].mxu0 %v1012
  %v2211 = vpop.f32.mrb[0].mxu0
  %v2212 = vadd.f32 %v452, %v2211
  %v2213 = vpop.f32.mrb[0].mxu0
  %2214 = vmatprep.mubr.f32.mxu0 0.0
  %2215 = vmatmul.mubr.f32.gmra.mrb[0].mxu0 %v1015
  %v2216 = vpop.f32.mrb[0].mxu0
  %v2217 = vadd.f32 %v453, %v2216
  %v2218 = vpop.f32.mrb[0].mxu0
  %2219 = vmatprep.mubr.f32.mxu0 0.0
  %2220 = vmatmul.mubr.f32.gmra.mrb[0].mxu0 %v1018
  %v2221 = vpop.f32.mrb[0].mxu0
  %v2222 = vadd.f32 %v454, %v2221
  %v2223 = vpop.f32.mrb[0].mxu0
  %2224 = vmatprep.mubr.f32.mxu0 0.0
  %2225 = vmatmul.mubr.f32.gmra.mrb[0].mxu0 %v1021
  %v2226 = vpop.f32.mrb[0].mxu0
  %v2227 = vadd.f32 %v455, %v2226
  %v2228 = vpop.f32.mrb[0].mxu0
  %2229 = vmatprep.mubr.f32.mxu0 0.0
  %2230 = vmatmul.mubr.f32.gmra.mrb[0].mxu0 %v1024
  %v2231 = vpop.f32.mrb[0].mxu0
  %v2232 = vadd.f32 %v456, %v2231
  %v2233 = vpop.f32.mrb[0].mxu0
  %2234 = vmatprep.mubr.f32.mxu0 0.0
  %2235 = vmatmul.mubr.f32.gmra.mrb[0].mxu0 %v1027
  %v2236 = vpop.f32.mrb[0].mxu0
  %v2237 = vadd.f32 %v457, %v2236
  %v2238 = vpop.f32.mrb[0].mxu0
  %2239 = vmatprep.mubr.f32.mxu0 0.0
  %2240 = vmatmul.mubr.f32.gmra.mrb[0].mxu0 %v1030
  %v2241 = vpop.f32.mrb[0].mxu0
  %v2242 = vadd.f32 %v458, %v2241
  %v2243 = vpop.f32.mrb[0].mxu0
  %2244 = vmatprep.mubr.f32.mxu0 0.0
  %2245 = vmatmul.mubr.f32.gmra.mrb[0].mxu0 %v1033
  %v2246 = vpop.f32.mrb[0].mxu0
  %v2247 = vadd.f32 %v459, %v2246
  %v2248 = vpop.f32.mrb[0].mxu0
  %2249 = vmatprep.mubr.f32.mxu0 0.0
  %2250 = vmatmul.mubr.f32.gmra.mrb[0].mxu0 %v1036
  %v2251 = vpop.f32.mrb[0].mxu0
  %v2252 = vadd.f32 %v460, %v2251
  %v2253 = vpop.f32.mrb[0].mxu0
  %2254 = vmatprep.mubr.f32.mxu0 0.0
  %2255 = vmatmul.mubr.f32.gmra.mrb[0].mxu0 %v1039
  %v2256 = vpop.f32.mrb[0].mxu0
  %v2257 = vadd.f32 %v461, %v2256
  %v2258 = vpop.f32.mrb[0].mxu0
  %2259 = vmatprep.mubr.f32.mxu0 0.0
  %2260 = vmatmul.mubr.f32.gmra.mrb[0].mxu0 %v1042
  %v2261 = vpop.f32.mrb[0].mxu0
  %v2262 = vadd.f32 %v462, %v2261
  %v2263 = vpop.f32.mrb[0].mxu0
  %2264 = vmatprep.mubr.f32.mxu0 0.0
  %2265 = vmatmul.mubr.f32.gmra.mrb[0].mxu0 %v1045
  %v2266 = vpop.f32.mrb[0].mxu0
  %v2267 = vadd.f32 %v463, %v2266
  %v2268 = vpop.f32.mrb[0].mxu0
  %2269 = vmatprep.mubr.f32.mxu0 0.0
  %2270 = vmatmul.mubr.f32.gmra.mrb[0].mxu0 %v1048
  %v2271 = vpop.f32.mrb[0].mxu0
  %v2272 = vadd.f32 %v464, %v2271
  %v2273 = vpop.f32.mrb[0].mxu0
  %2274 = vmatprep.mubr.f32.mxu0 0.0
  %2275 = vmatmul.mubr.f32.gmra.mrb[0].mxu0 %v1051
  %v2276 = vpop.f32.mrb[0].mxu0
  %v2277 = vadd.f32 %v465, %v2276
  %v2278 = vpop.f32.mrb[0].mxu0
  %2279 = vmatprep.mubr.f32.mxu0 0.0
  %2280 = vmatmul.mubr.f32.gmra.mrb[0].mxu0 %v1054
  %v2281 = vpop.f32.mrb[0].mxu0
  %v2282 = vadd.f32 %v466, %v2281
  %v2283 = vpop.f32.mrb[0].mxu0
  %2284 = vmatprep.mubr.f32.mxu0 0.0
  %2285 = vmatmul.mubr.f32.gmra.mrb[0].mxu0 %v1057
  %v2286 = vpop.f32.mrb[0].mxu0
  %v2287 = vadd.f32 %v467, %v2286
  %v2288 = vpop.f32.mrb[0].mxu0
  %2289 = vmatprep.mubr.f32.mxu0 0.0
  %2290 = vmatmul.mubr.f32.gmra.mrb[0].mxu0 %v1060
  %v2291 = vpop.f32.mrb[0].mxu0
  %v2292 = vadd.f32 %v468, %v2291
  %v2293 = vpop.f32.mrb[0].mxu0
  %2294 = vmatprep.mubr.f32.mxu0 0.0
  %2295 = vmatmul.mubr.f32.gmra.mrb[0].mxu0 %v1063
  %v2296 = vpop.f32.mrb[0].mxu0
  %v2297 = vadd.f32 %v469, %v2296
  %v2298 = vpop.f32.mrb[0].mxu0
  %2299 = vmatprep.mubr.f32.mxu0 0.0
  %2300 = vmatmul.mubr.f32.gmra.mrb[0].mxu0 %v1066
  %v2301 = vpop.f32.mrb[0].mxu0
  %v2302 = vadd.f32 %v470, %v2301
  %v2303 = vpop.f32.mrb[0].mxu0
  %2304 = vmatprep.mubr.f32.mxu0 0.0
  %2305 = vmatmul.mubr.f32.gmra.mrb[0].mxu0 %v1069
  %v2306 = vpop.f32.mrb[0].mxu0
  %v2307 = vadd.f32 %v471, %v2306
  %v2308 = vpop.f32.mrb[0].mxu0
  %2309 = vmatprep.mubr.f32.mxu0 0.0
  %2310 = vmatmul.mubr.f32.gmra.mrb[0].mxu0 %v1072
  %v2311 = vpop.f32.mrb[0].mxu0
  %v2312 = vadd.f32 %v472, %v2311
  %v2313 = vpop.f32.mrb[0].mxu0
  %2314 = vmatprep.mubr.f32.mxu0 0.0
  %2315 = vmatmul.mubr.f32.gmra.mrb[0].mxu0 %v1075
  %v2316 = vpop.f32.mrb[0].mxu0
  %v2317 = vadd.f32 %v473, %v2316
  %v2318 = vpop.f32.mrb[0].mxu0
  %2319 = vmatprep.mubr.f32.mxu0 0.0
  %2320 = vmatmul.mubr.f32.gmra.mrb[0].mxu0 %v1078
  %v2321 = vpop.f32.mrb[0].mxu0
  %v2322 = vadd.f32 %v474, %v2321
  %v2323 = vpop.f32.mrb[0].mxu0
  %2324 = vmatprep.mubr.f32.mxu0 0.0
  %2325 = vmatmul.mubr.f32.gmra.mrb[0].mxu0 %v1081
  %v2326 = vpop.f32.mrb[0].mxu0
  %v2327 = vadd.f32 %v475, %v2326
  %v2328 = vpop.f32.mrb[0].mxu0
  %2329 = vmatprep.mubr.f32.mxu0 0.0
  %2330 = vmatmul.mubr.f32.gmra.mrb[0].mxu0 %v1084
  %v2331 = vpop.f32.mrb[0].mxu0
  %v2332 = vadd.f32 %v476, %v2331
  %v2333 = vpop.f32.mrb[0].mxu0
  %2334 = vmatprep.mubr.f32.mxu0 0.0
  %2335 = vmatmul.mubr.f32.gmra.mrb[0].mxu0 %v1087
  %v2336 = vpop.f32.mrb[0].mxu0
  %v2337 = vadd.f32 %v477, %v2336
  %v2338 = vpop.f32.mrb[0].mxu0
  %2339 = vmatprep.mubr.f32.mxu0 0.0
  %2340 = vmatmul.mubr.f32.gmra.mrb[0].mxu0 %v1090
  %v2341 = vpop.f32.mrb[0].mxu0
  %v2342 = vadd.f32 %v478, %v2341
  %v2343 = vpop.f32.mrb[0].mxu0
  %2344 = vmatprep.mubr.f32.mxu0 0.0
  %2345 = vmatmul.mubr.f32.gmra.mrb[0].mxu0 %v1093
  %v2346 = vpop.f32.mrb[0].mxu0
  %v2347 = vadd.f32 %v479, %v2346
  %v2348 = vpop.f32.mrb[0].mxu0
  %2349 = vmatprep.mubr.f32.mxu0 0.0
  %2350 = vmatmul.mubr.f32.gmra.mrb[0].mxu0 %v1096
  %v2351 = vpop.f32.mrb[0].mxu0
  %v2352 = vadd.f32 %v480, %v2351
  %v2353 = vpop.f32.mrb[0].mxu0
  %2354 = vmatprep.mubr.f32.mxu0 0.0
  %2355 = vmatmul.mubr.f32.gmra.mrb[0].mxu0 %v1099
  %v2356 = vpop.f32.mrb[0].mxu0
  %v2357 = vadd.f32 %v481, %v2356
  %v2358 = vpop.f32.mrb[0].mxu0
  %2359 = vmatprep.mubr.f32.mxu0 0.0
  %2360 = vmatmul.mubr.f32.gmra.mrb[0].mxu0 %v1102
  %v2361 = vpop.f32.mrb[0].mxu0
  %v2362 = vadd.f32 %v482, %v2361
  %v2363 = vpop.f32.mrb[0].mxu0
  %2364 = vmatprep.mubr.f32.mxu0 0.0
  %2365 = vmatmul.mubr.f32.gmra.mrb[0].mxu0 %v1105
  %v2366 = vpop.f32.mrb[0].mxu0
  %v2367 = vadd.f32 %v483, %v2366
  %v2368 = vpop.f32.mrb[0].mxu0
  %2369 = vmatprep.mubr.f32.mxu0 0.0
  %2370 = vmatmul.mubr.f32.gmra.mrb[0].mxu0 %v1108
  %v2371 = vpop.f32.mrb[0].mxu0
  %v2372 = vadd.f32 %v484, %v2371
  %v2373 = vpop.f32.mrb[0].mxu0
  %2374 = vmatprep.mubr.f32.mxu0 0.0
  %2375 = vmatmul.mubr.f32.gmra.mrb[0].mxu0 %v1111
  %v2376 = vpop.f32.mrb[0].mxu0
  %v2377 = vadd.f32 %v485, %v2376
  %v2378 = vpop.f32.mrb[0].mxu0
  %2379 = vmatprep.mubr.f32.mxu0 0.0
  %2380 = vmatmul.mubr.f32.gmra.mrb[0].mxu0 %v1114
  %v2381 = vpop.f32.mrb[0].mxu0
  %v2382 = vadd.f32 %v486, %v2381
  %v2383 = vpop.f32.mrb[0].mxu0
  %2384 = vmatprep.mubr.f32.mxu0 0.0
  %2385 = vmatmul.mubr.f32.gmra.mrb[0].mxu0 %v1117
  %v2386 = vpop.f32.mrb[0].mxu0
  %v2387 = vadd.f32 %v487, %v2386
  %v2388 = vpop.f32.mrb[0].mxu0
  %2389 = vmatprep.mubr.f32.mxu0 0.0
  %2390 = vmatmul.mubr.f32.gmra.mrb[0].mxu0 %v1120
  %v2391 = vpop.f32.mrb[0].mxu0
  %v2392 = vadd.f32 %v488, %v2391
  %v2393 = vpop.f32.mrb[0].mxu0
  %2394 = vmatprep.mubr.f32.mxu0 0.0
  %2395 = vmatmul.mubr.f32.gmra.mrb[0].mxu0 %v1123
  %v2396 = vpop.f32.mrb[0].mxu0
  %v2397 = vadd.f32 %v489, %v2396
  %v2398 = vpop.f32.mrb[0].mxu0
  %2399 = vmatprep.mubr.f32.mxu0 0.0
  %2400 = vmatmul.mubr.f32.gmra.mrb[0].mxu0 %v1126
  %v2401 = vpop.f32.mrb[0].mxu0
  %v2402 = vadd.f32 %v490, %v2401
  %v2403 = vpop.f32.mrb[0].mxu0
  %2404 = vmatprep.mubr.f32.mxu0 0.0
  %2405 = vmatmul.mubr.f32.gmra.mrb[0].mxu0 %v1129
  %v2406 = vpop.f32.mrb[0].mxu0
  %v2407 = vadd.f32 %v491, %v2406
  %v2408 = vpop.f32.mrb[0].mxu0
  %2409 = vmatprep.mubr.f32.mxu0 0.0
  %2410 = vmatmul.mubr.f32.gmra.mrb[0].mxu0 %v1132
  %v2411 = vpop.f32.mrb[0].mxu0
  %v2412 = vadd.f32 %v492, %v2411
  %v2413 = vpop.f32.mrb[0].mxu0
  %2414 = vmatprep.mubr.f32.mxu0 0.0
  %2415 = vmatmul.mubr.f32.gmra.mrb[0].mxu0 %v1135
  %v2416 = vpop.f32.mrb[0].mxu0
  %v2417 = vadd.f32 %v493, %v2416
  %v2418 = vpop.f32.mrb[0].mxu0
  %2419 = vmatprep.mubr.f32.mxu0 0.0
  %2420 = vmatmul.mubr.f32.gmra.mrb[0].mxu0 %v1138
  %v2421 = vpop.f32.mrb[0].mxu0
  %v2422 = vadd.f32 %v494, %v2421
  %v2423 = vpop.f32.mrb[0].mxu0
  %2424 = vmatprep.mubr.f32.mxu0 0.0
  %2425 = vmatmul.mubr.f32.gmra.mrb[0].mxu0 %v1141
  %v2426 = vpop.f32.mrb[0].mxu0
  %v2427 = vadd.f32 %v495, %v2426
  %v2428 = vpop.f32.mrb[0].mxu0
  %2429 = vmatprep.mubr.f32.mxu0 0.0
  %2430 = vmatmul.mubr.f32.gmra.mrb[0].mxu0 %v1144
  %v2431 = vpop.f32.mrb[0].mxu0
  %v2432 = vadd.f32 %v496, %v2431
  %v2433 = vpop.f32.mrb[0].mxu0
  %2434 = vmatprep.mubr.f32.mxu0 0.0
  %2435 = vmatmul.mubr.f32.gmra.mrb[0].mxu0 %v1147
  %v2436 = vpop.f32.mrb[0].mxu0
  %v2437 = vadd.f32 %v497, %v2436
  %v2438 = vpop.f32.mrb[0].mxu0
  %2439 = vmatprep.mubr.f32.mxu0 0.0
  %2440 = vmatmul.mubr.f32.gmra.mrb[0].mxu0 %v1150
  %v2441 = vpop.f32.mrb[0].mxu0
  %v2442 = vadd.f32 %v498, %v2441
  %v2443 = vpop.f32.mrb[0].mxu0
  %2444 = vmatprep.mubr.f32.mxu0 0.0
  %2445 = vmatmul.mubr.f32.gmra.mrb[0].mxu0 %v1153
  %v2446 = vpop.f32.mrb[0].mxu0
  %v2447 = vadd.f32 %v499, %v2446
  %v2448 = vpop.f32.mrb[0].mxu0
  %2449 = vmatprep.mubr.f32.mxu0 0.0
  %2450 = vmatmul.mubr.f32.gmra.mrb[0].mxu0 %v1156
  %v2451 = vpop.f32.mrb[0].mxu0
  %v2452 = vadd.f32 %v500, %v2451
  %v2453 = vpop.f32.mrb[0].mxu0
  %2454 = vmatprep.mubr.f32.mxu0 0.0
  %2455 = vmatmul.mubr.f32.gmra.mrb[0].mxu0 %v1159
  %v2456 = vpop.f32.mrb[0].mxu0
  %v2457 = vadd.f32 %v501, %v2456
  %v2458 = vpop.f32.mrb[0].mxu0
  %2459 = vmatprep.mubr.f32.mxu0 0.0
  %2460 = vmatmul.mubr.f32.gmra.mrb[0].mxu0 %v1162
  %v2461 = vpop.f32.mrb[0].mxu0
  %v2462 = vadd.f32 %v502, %v2461
  %v2463 = vpop.f32.mrb[0].mxu0
  %2464 = vmatprep.mubr.f32.mxu0 0.0
  %2465 = vmatmul.mubr.f32.gmra.mrb[0].mxu0 %v1165
  %v2466 = vpop.f32.mrb[0].mxu0
  %v2467 = vadd.f32 %v503, %v2466
  %v2468 = vpop.f32.mrb[0].mxu0
  %2469 = vmatprep.mubr.f32.mxu0 0.0
  %2470 = vmatmul.mubr.f32.gmra.mrb[0].mxu0 %v1168
  %v2471 = vpop.f32.mrb[0].mxu0
  %v2472 = vadd.f32 %v504, %v2471
  %v2473 = vpop.f32.mrb[0].mxu0
  %2474 = vmatprep.mubr.f32.mxu0 0.0
  %2475 = vmatmul.mubr.f32.gmra.mrb[0].mxu0 %v1171
  %v2476 = vpop.f32.mrb[0].mxu0
  %v2477 = vadd.f32 %v505, %v2476
  %v2478 = vpop.f32.mrb[0].mxu0
  %2479 = vmatprep.mubr.f32.mxu0 0.0
  %2480 = vmatmul.mubr.f32.gmra.mrb[0].mxu0 %v1174
  %v2481 = vpop.f32.mrb[0].mxu0
  %v2482 = vadd.f32 %v506, %v2481
  %v2483 = vpop.f32.mrb[0].mxu0
  %2484 = vmatprep.mubr.f32.mxu0 0.0
  %2485 = vmatmul.mubr.f32.gmra.mrb[0].mxu0 %v1177
  %v2486 = vpop.f32.mrb[0].mxu0
  %v2487 = vadd.f32 %v507, %v2486
  %v2488 = vpop.f32.mrb[0].mxu0
  %2489 = vmatprep.mubr.f32.mxu0 0.0
  %2490 = vmatmul.mubr.f32.gmra.mrb[0].mxu0 %v1180
  %v2491 = vpop.f32.mrb[0].mxu0
  %v2492 = vadd.f32 %v508, %v2491
  %v2493 = vpop.f32.mrb[0].mxu0
  %2494 = vmatprep.mubr.f32.mxu0 0.0
  %2495 = vmatmul.mubr.f32.gmra.mrb[0].mxu0 %v1183
  %v2496 = vpop.f32.mrb[0].mxu0
  %v2497 = vadd.f32 %v509, %v2496
  %v2498 = vpop.f32.mrb[0].mxu0
  %2499 = vmatprep.mubr.f32.mxu0 0.0
  %2500 = vmatmul.mubr.f32.gmra.mrb[0].mxu0 %v1186
  %v2501 = vpop.f32.mrb[0].mxu0
  %v2502 = vadd.f32 %v510, %v2501
  %v2503 = vpop.f32.mrb[0].mxu0
  %2504 = vmatprep.mubr.f32.mxu0 0.0
  %2505 = vmatmul.mubr.f32.gmra.mrb[0].mxu0 %v1189
  %v2506 = vpop.f32.mrb[0].mxu0
  %v2507 = vadd.f32 %v511, %v2506
  %v2508 = vpop.f32.mrb[0].mxu0
  %2509 = vmatprep.mubr.f32.mxu0 0.0
  %2510 = vmatmul.mubr.f32.gmra.mrb[0].mxu0 %v1192
  %v2511 = vpop.f32.mrb[0].mxu0
  %v2512 = vadd.f32 %v512, %v2511
  %v2513 = vpop.f32.mrb[0].mxu0
  %2514 = vmatprep.mubr.f32.mxu0 0.0
  %2515 = vmatmul.mubr.f32.gmra.mrb[0].mxu0 %v1195
  %v2516 = vpop.f32.mrb[0].mxu0
  %v2517 = vadd.f32 %v513, %v2516
  %v2518 = vpop.f32.mrb[0].mxu0
  %2519 = vmatprep.mubr.f32.mxu0 0.0
  %2520 = vmatmul.mubr.f32.gmra.mrb[0].mxu0 %v1198
  %v2521 = vpop.f32.mrb[0].mxu0
  %v2522 = vadd.f32 %v514, %v2521
  %v2523 = vpop.f32.mrb[0].mxu0
  %2524 = vmatprep.mubr.f32.mxu0 0.0
  %2525 = vmatmul.mubr.f32.gmra.mrb[0].mxu0 %v1201
  %v2526 = vpop.f32.mrb[0].mxu0
  %v2527 = vadd.f32 %v515, %v2526
  %v2528 = vpop.f32.mrb[0].mxu0
  %2529 = vmatprep.mubr.f32.mxu0 0.0
  %2530 = vmatmul.mubr.f32.gmra.mrb[0].mxu0 %v1204
  %v2531 = vpop.f32.mrb[0].mxu0
  %v2532 = vadd.f32 %v516, %v2531
  %v2533 = vpop.f32.mrb[0].mxu0
  %2534 = vmatprep.mubr.f32.mxu0 0.0
  %2535 = vmatmul.mubr.f32.gmra.mrb[0].mxu0 %v1207
  %v2536 = vpop.f32.mrb[0].mxu0
  %v2537 = vadd.f32 %v517, %v2536
  %v2538 = vpop.f32.mrb[0].mxu0
  %2539 = vmatprep.mubr.f32.mxu0 0.0
  %2540 = vmatmul.mubr.f32.gmra.mrb[0].mxu0 %v1210
  %v2541 = vpop.f32.mrb[0].mxu0
  %v2542 = vadd.f32 %v518, %v2541
  %v2543 = vpop.f32.mrb[0].mxu0
  %2544 = vmatprep.mubr.f32.mxu0 0.0
  %2545 = vmatmul.mubr.f32.gmra.mrb[0].mxu0 %v1213
  %v2546 = vpop.f32.mrb[0].mxu0
  %v2547 = vadd.f32 %v519, %v2546
  %v2548 = vpop.f32.mrb[0].mxu0
  %2549 = vmatprep.mubr.f32.mxu0 0.0
  %2550 = vmatmul.mubr.f32.gmra.mrb[0].mxu0 %v1216
  %v2551 = vpop.f32.mrb[0].mxu0
  %v2552 = vadd.f32 %v520, %v2551
  %v2553 = vpop.f32.mrb[0].mxu0
  %2554 = vmatprep.mubr.f32.mxu0 0.0
  %2555 = vmatmul.mubr.f32.gmra.mrb[0].mxu0 %v1219
  %v2556 = vpop.f32.mrb[0].mxu0
  %v2557 = vadd.f32 %v521, %v2556
  %v2558 = vpop.f32.mrb[0].mxu0
  %2559 = vmatprep.mubr.f32.mxu0 0.0
  %2560 = vmatmul.mubr.f32.gmra.mrb[0].mxu0 %v1222
  %v2561 = vpop.f32.mrb[0].mxu0
  %v2562 = vadd.f32 %v522, %v2561
  %v2563 = vpop.f32.mrb[0].mxu0
  %2564 = vmatprep.mubr.f32.mxu0 0.0
  %2565 = vmatmul.mubr.f32.gmra.mrb[0].mxu0 %v1225
  %v2566 = vpop.f32.mrb[0].mxu0
  %v2567 = vadd.f32 %v523, %v2566
  %v2568 = vpop.f32.mrb[0].mxu0
  %2569 = vmatprep.mubr.f32.mxu0 0.0
  %2570 = vmatmul.mubr.f32.gmra.mrb[0].mxu0 %v1228
  %v2571 = vpop.f32.mrb[0].mxu0
  %v2572 = vadd.f32 %v524, %v2571
  %v2573 = vpop.f32.mrb[0].mxu0
  %2574 = vmatprep.mubr.f32.mxu0 0.0
  %2575 = vmatmul.mubr.f32.gmra.mrb[0].mxu0 %v1231
  %v2576 = vpop.f32.mrb[0].mxu0
  %v2577 = vadd.f32 %v525, %v2576
  %v2578 = vpop.f32.mrb[0].mxu0
  %2579 = vmatprep.mubr.f32.mxu0 0.0
  %2580 = vmatmul.mubr.f32.gmra.mrb[0].mxu0 %v1234
  %v2581 = vpop.f32.mrb[0].mxu0
  %v2582 = vadd.f32 %v526, %v2581
  %v2583 = vpop.f32.mrb[0].mxu0
  %2584 = vmatprep.mubr.f32.mxu0 0.0
  %2585 = vmatmul.mubr.f32.gmra.mrb[0].mxu0 %v1237
  %v2586 = vpop.f32.mrb[0].mxu0
  %v2587 = vadd.f32 %v527, %v2586
  %v2588 = vpop.f32.mrb[0].mxu0
  %2589 = vmatprep.mubr.f32.mxu0 0.0
  %2590 = vmatmul.mubr.f32.gmra.mrb[0].mxu0 %v1240
  %v2591 = vpop.f32.mrb[0].mxu0
  %v2592 = vadd.f32 %v528, %v2591
  %v2593 = vpop.f32.mrb[0].mxu0
  %2594 = vmatprep.mubr.f32.mxu0 0.0
  %2595 = vmatmul.mubr.f32.gmra.mrb[0].mxu0 %v1243
  %v2596 = vpop.f32.mrb[0].mxu0
  %v2597 = vadd.f32 %v529, %v2596
  %v2598 = vpop.f32.mrb[0].mxu0
  %2599 = vmatprep.mubr.f32.mxu0 0.0
  %2600 = vmatmul.mubr.f32.gmra.mrb[0].mxu0 %v1246
  %v2601 = vpop.f32.mrb[0].mxu0
  %v2602 = vadd.f32 %v530, %v2601
  %v2603 = vpop.f32.mrb[0].mxu0
  %2604 = vmatprep.mubr.f32.mxu0 0.0
  %2605 = vmatmul.mubr.f32.gmra.mrb[0].mxu0 %v1249
  %v2606 = vpop.f32.mrb[0].mxu0
  %v2607 = vadd.f32 %v531, %v2606
  %v2608 = vpop.f32.mrb[0].mxu0
  %2609 = vmatprep.mubr.f32.mxu0 0.0
  %2610 = vmatmul.mubr.f32.gmra.mrb[0].mxu0 %v1252
  %v2611 = vpop.f32.mrb[0].mxu0
  %v2612 = vadd.f32 %v532, %v2611
  %v2613 = vpop.f32.mrb[0].mxu0
  %2614 = vmatprep.mubr.f32.mxu0 0.0
  %2615 = vmatmul.mubr.f32.gmra.mrb[0].mxu0 %v1255
  %v2616 = vpop.f32.mrb[0].mxu0
  %v2617 = vadd.f32 %v533, %v2616
  %v2618 = vpop.f32.mrb[0].mxu0
  %2619 = vmatprep.mubr.f32.mxu0 0.0
  %2620 = vmatmul.mubr.f32.gmra.mrb[0].mxu0 %v1258
  %v2621 = vpop.f32.mrb[0].mxu0
  %v2622 = vadd.f32 %v534, %v2621
  %v2623 = vpop.f32.mrb[0].mxu0
  %2624 = vmatprep.mubr.f32.mxu0 0.0
  %2625 = vmatmul.mubr.f32.gmra.mrb[0].mxu0 %v1261
  %v2626 = vpop.f32.mrb[0].mxu0
  %v2627 = vadd.f32 %v535, %v2626
  %v2628 = vpop.f32.mrb[0].mxu0
  %2629 = vmatprep.mubr.f32.mxu0 0.0
  %2630 = vmatmul.mubr.f32.gmra.mrb[0].mxu0 %v1264
  %v2631 = vpop.f32.mrb[0].mxu0
  %v2632 = vadd.f32 %v536, %v2631
  %v2633 = vpop.f32.mrb[0].mxu0
  %2634 = vmatprep.mubr.f32.mxu0 0.0
  %2635 = vmatmul.mubr.f32.gmra.mrb[0].mxu0 %v1267
  %v2636 = vpop.f32.mrb[0].mxu0
  %v2637 = vadd.f32 %v537, %v2636
  %v2638 = vpop.f32.mrb[0].mxu0
  %2639 = vmatprep.mubr.f32.mxu0 0.0
  %2640 = vmatmul.mubr.f32.gmra.mrb[0].mxu0 %v1270
  %v2641 = vpop.f32.mrb[0].mxu0
  %v2642 = vadd.f32 %v538, %v2641
  %v2643 = vpop.f32.mrb[0].mxu0
  %2644 = vmatprep.mubr.f32.mxu0 0.0
  %2645 = vmatmul.mubr.f32.gmra.mrb[0].mxu0 %v1273
  %v2646 = vpop.f32.mrb[0].mxu0
  %v2647 = vadd.f32 %v539, %v2646
  %v2648 = vpop.f32.mrb[0].mxu0
  %2649 = vmatprep.mubr.f32.mxu0 0.0
  %2650 = vmatmul.mubr.f32.gmra.mrb[0].mxu0 %v1276
  %v2651 = vpop.f32.mrb[0].mxu0
  %v2652 = vadd.f32 %v540, %v2651
  %v2653 = vpop.f32.mrb[0].mxu0
  %2654 = vmatprep.mubr.f32.mxu0 0.0
  %2655 = vmatmul.mubr.f32.gmra.mrb[0].mxu0 %v1279
  %v2656 = vpop.f32.mrb[0].mxu0
  %v2657 = vadd.f32 %v541, %v2656
  %v2658 = vpop.f32.mrb[0].mxu0
  %2659 = vmatprep.mubr.f32.mxu0 0.0
  %2660 = vmatmul.mubr.f32.gmra.mrb[0].mxu0 %v1282
  %v2661 = vpop.f32.mrb[0].mxu0
  %v2662 = vadd.f32 %v542, %v2661
  %v2663 = vpop.f32.mrb[0].mxu0
  %2664 = vmatprep.mubr.f32.mxu0 0.0
  %2665 = vmatmul.mubr.f32.gmra.mrb[0].mxu0 %v1285
  %v2666 = vpop.f32.mrb[0].mxu0
  %v2667 = vadd.f32 %v543, %v2666
  %v2668 = vpop.f32.mrb[0].mxu0
  %2669 = vmatprep.mubr.f32.mxu0 0.0
  %2670 = vmatmul.mubr.f32.gmra.mrb[0].mxu0 %v1288
  %v2671 = vpop.f32.mrb[0].mxu0
  %v2672 = vadd.f32 %v544, %v2671
  %v2673 = vpop.f32.mrb[0].mxu0
  %2674 = vmatprep.mubr.f32.mxu0 0.0
  %2675 = vmatmul.mubr.f32.gmra.mrb[0].mxu0 %v1291
  %v2676 = vpop.f32.mrb[0].mxu0
  %v2677 = vadd.f32 %v545, %v2676
  %v2678 = vpop.f32.mrb[0].mxu0
  %2679 = vmatprep.mubr.f32.mxu0 0.0
  %2680 = vmatmul.mubr.f32.gmra.mrb[0].mxu0 %v1294
  %v2681 = vpop.f32.mrb[0].mxu0
  %v2682 = vadd.f32 %v546, %v2681
  %v2683 = vpop.f32.mrb[0].mxu0
  %2684 = vmatprep.mubr.f32.mxu0 0.0
  %2685 = vmatmul.mubr.f32.gmra.mrb[0].mxu0 %v1297
  %v2686 = vpop.f32.mrb[0].mxu0
  %v2687 = vadd.f32 %v547, %v2686
  %v2688 = vpop.f32.mrb[0].mxu0
  %2689 = vmatprep.mubr.f32.mxu0 0.0
  %2690 = vmatmul.mubr.f32.gmra.mrb[0].mxu0 %v1300
  %v2691 = vpop.f32.mrb[0].mxu0
  %v2692 = vadd.f32 %v548, %v2691
  %v2693 = vpop.f32.mrb[0].mxu0
  %2694 = vmatprep.mubr.f32.mxu0 0.0
  %2695 = vmatmul.mubr.f32.gmra.mrb[0].mxu0 %v1303
  %v2696 = vpop.f32.mrb[0].mxu0
  %v2697 = vadd.f32 %v549, %v2696
  %v2698 = vpop.f32.mrb[0].mxu0
  %2699 = vmatprep.mubr.f32.mxu0 0.0
  %2700 = vmatmul.mubr.f32.gmra.mrb[0].mxu0 %v1306
  %v2701 = vpop.f32.mrb[0].mxu0
  %v2702 = vadd.f32 %v550, %v2701
  %v2703 = vpop.f32.mrb[0].mxu0
  %2704 = vmatprep.mubr.f32.mxu0 0.0
  %2705 = vmatmul.mubr.f32.gmra.mrb[0].mxu0 %v1309
  %v2706 = vpop.f32.mrb[0].mxu0
  %v2707 = vadd.f32 %v551, %v2706
  %v2708 = vpop.f32.mrb[0].mxu0
  %2709 = vmatprep.mubr.f32.mxu0 0.0
  %2710 = vmatmul.mubr.f32.gmra.mrb[0].mxu0 %v1312
  %v2711 = vpop.f32.mrb[0].mxu0
  %v2712 = vadd.f32 %v552, %v2711
  %v2713 = vpop.f32.mrb[0].mxu0
  %2714 = vmatprep.mubr.f32.mxu0 0.0
  %2715 = vmatmul.mubr.f32.gmra.mrb[0].mxu0 %v1315
  %v2716 = vpop.f32.mrb[0].mxu0
  %v2717 = vadd.f32 %v553, %v2716
  %v2718 = vpop.f32.mrb[0].mxu0
  %2719 = vmatprep.mubr.f32.mxu0 0.0
  %2720 = vmatmul.mubr.f32.gmra.mrb[0].mxu0 %v1318
  %v2721 = vpop.f32.mrb[0].mxu0
  %v2722 = vadd.f32 %v554, %v2721
  %v2723 = vpop.f32.mrb[0].mxu0
  %2724 = vmatprep.mubr.f32.mxu0 0.0
  %2725 = vmatmul.mubr.f32.gmra.mrb[0].mxu0 %v1321
  %v2726 = vpop.f32.mrb[0].mxu0
  %v2727 = vadd.f32 %v555, %v2726
  %v2728 = vpop.f32.mrb[0].mxu0
  %2729 = vmatprep.mubr.f32.mxu0 0.0
  %2730 = vmatmul.mubr.f32.gmra.mrb[0].mxu0 %v1324
  %v2731 = vpop.f32.mrb[0].mxu0
  %v2732 = vadd.f32 %v556, %v2731
  %v2733 = vpop.f32.mrb[0].mxu0
  %2734 = vmatprep.mubr.f32.mxu0 0.0
  %2735 = vmatmul.mubr.f32.gmra.mrb[0].mxu0 %v1327
  %v2736 = vpop.f32.mrb[0].mxu0
  %v2737 = vadd.f32 %v557, %v2736
  %v2738 = vpop.f32.mrb[0].mxu0
  %2739 = vmatprep.mubr.f32.mxu0 0.0
  %2740 = vmatmul.mubr.f32.gmra.mrb[0].mxu0 %v1330
  %v2741 = vpop.f32.mrb[0].mxu0
  %v2742 = vadd.f32 %v558, %v2741
  %v2743 = vpop.f32.mrb[0].mxu0
  %2744 = vmatprep.mubr.f32.mxu0 0.0
  %2745 = vmatmul.mubr.f32.gmra.mrb[0].mxu0 %v1333
  %v2746 = vpop.f32.mrb[0].mxu0
  %v2747 = vadd.f32 %v559, %v2746
  %v2748 = vpop.f32.mrb[0].mxu0
  %2749 = vmatprep.mubr.f32.mxu0 0.0
  %2750 = vmatmul.mubr.f32.gmra.mrb[0].mxu0 %v1336
  %v2751 = vpop.f32.mrb[0].mxu0
  %v2752 = vadd.f32 %v560, %v2751
  %v2753 = vpop.f32.mrb[0].mxu0
  %2754 = vmatprep.mubr.f32.mxu0 0.0
  %2755 = vmatmul.mubr.f32.gmra.mrb[0].mxu0 %v1339
  %v2756 = vpop.f32.mrb[0].mxu0
  %v2757 = vadd.f32 %v561, %v2756
  %v2758 = vpop.f32.mrb[0].mxu0
  %2759 = vmatprep.mubr.f32.mxu0 0.0
  %2760 = vmatmul.mubr.f32.gmra.mrb[0].mxu0 %v1342
  %v2761 = vpop.f32.mrb[0].mxu0
  %v2762 = vadd.f32 %v562, %v2761
  %v2763 = vpop.f32.mrb[0].mxu0
  %2764 = vmatprep.mubr.f32.mxu0 0.0
  %2765 = vmatmul.mubr.f32.gmra.mrb[0].mxu0 %v1345
  %v2766 = vpop.f32.mrb[0].mxu0
  %v2767 = vadd.f32 %v563, %v2766
  %v2768 = vpop.f32.mrb[0].mxu0
  %2769 = vmatprep.mubr.f32.mxu0 0.0
  %2770 = vmatmul.mubr.f32.gmra.mrb[0].mxu0 %v1348
  %v2771 = vpop.f32.mrb[0].mxu0
  %v2772 = vadd.f32 %v564, %v2771
  %v2773 = vpop.f32.mrb[0].mxu0
  %2774 = vmatprep.mubr.f32.mxu0 0.0
  %2775 = vmatmul.mubr.f32.gmra.mrb[0].mxu0 %v1351
  %v2776 = vpop.f32.mrb[0].mxu0
  %v2777 = vadd.f32 %v565, %v2776
  %v2778 = vpop.f32.mrb[0].mxu0
  %2779 = vmatprep.mubr.f32.mxu0 0.0
  %2780 = vmatmul.mubr.f32.gmra.mrb[0].mxu0 %v1354
  %v2781 = vpop.f32.mrb[0].mxu0
  %v2782 = vadd.f32 %v566, %v2781
  %v2783 = vpop.f32.mrb[0].mxu0
  %2784 = vmatprep.mubr.f32.mxu0 0.0
  %2785 = vmatmul.mubr.f32.gmra.mrb[0].mxu0 %v1357
  %v2786 = vpop.f32.mrb[0].mxu0
  %v2787 = vadd.f32 %v567, %v2786
  %v2788 = vpop.f32.mrb[0].mxu0
  %2789 = vmatprep.mubr.f32.mxu0 0.0
  %2790 = vmatmul.mubr.f32.gmra.mrb[0].mxu0 %v1360
  %v2791 = vpop.f32.mrb[0].mxu0
  %v2792 = vadd.f32 %v568, %v2791
  %v2793 = vpop.f32.mrb[0].mxu0
  %2794 = vmatprep.mubr.f32.mxu0 0.0
  %2795 = vmatmul.mubr.f32.gmra.mrb[0].mxu0 %v1363
  %v2796 = vpop.f32.mrb[0].mxu0
  %v2797 = vadd.f32 %v569, %v2796
  %v2798 = vpop.f32.mrb[0].mxu0
  %2799 = vmatprep.mubr.f32.mxu0 0.0
  %2800 = vmatmul.mubr.f32.gmra.mrb[0].mxu0 %v1366
  %v2801 = vpop.f32.mrb[0].mxu0
  %v2802 = vadd.f32 %v570, %v2801
  %v2803 = vpop.f32.mrb[0].mxu0
  %2804 = vmatprep.mubr.f32.mxu0 0.0
  %2805 = vmatmul.mubr.f32.gmra.mrb[0].mxu0 %v1369
  %v2806 = vpop.f32.mrb[0].mxu0
  %v2807 = vadd.f32 %v571, %v2806
  %v2808 = vpop.f32.mrb[0].mxu0
  %2809 = vmatprep.mubr.f32.mxu0 0.0
  %2810 = vmatmul.mubr.f32.gmra.mrb[0].mxu0 %v1372
  %v2811 = vpop.f32.mrb[0].mxu0
  %v2812 = vadd.f32 %v572, %v2811
  %v2813 = vpop.f32.mrb[0].mxu0
  %2814 = vmatprep.mubr.f32.mxu0 0.0
  %2815 = vmatmul.mubr.f32.gmra.mrb[0].mxu0 %v1375
  %v2816 = vpop.f32.mrb[0].mxu0
  %v2817 = vadd.f32 %v573, %v2816
  %v2818 = vpop.f32.mrb[0].mxu0
  %2819 = vmatprep.mubr.f32.mxu0 0.0
  %2820 = vmatmul.mubr.f32.gmra.mrb[0].mxu0 %v1378
  %v2821 = vpop.f32.mrb[0].mxu0
  %v2822 = vadd.f32 %v574, %v2821
  %v2823 = vpop.f32.mrb[0].mxu0
  %2824 = vmatprep.mubr.f32.mxu0 0.0
  %2825 = vmatmul.mubr.f32.gmra.mrb[0].mxu0 %v1381
  %v2826 = vpop.f32.mrb[0].mxu0
  %v2827 = vadd.f32 %v575, %v2826
  %v2828 = vpop.f32.mrb[0].mxu0
  %2829 = vmatprep.mubr.f32.mxu0 0.0
  %2830 = vmatmul.mubr.f32.gmra.mrb[0].mxu0 %v1384
  %v2831 = vpop.f32.mrb[0].mxu0
  %v2832 = vadd.f32 %v576, %v2831
  %v2833 = vpop.f32.mrb[0].mxu0
  %2834 = vmatprep.mubr.f32.mxu0 0.0
  %2835 = vmatmul.mubr.f32.gmra.mrb[0].mxu0 %v1387
  %v2836 = vpop.f32.mrb[0].mxu0
  %v2837 = vadd.f32 %v577, %v2836
  %v2838 = vpop.f32.mrb[0].mxu0
  %2839 = vmatprep.mubr.f32.mxu0 0.0
  %2840 = vmatmul.mubr.f32.gmra.mrb[0].mxu0 %v1390
  %v2841 = vpop.f32.mrb[0].mxu0
  %v2842 = vadd.f32 %v578, %v2841
  %v2843 = vpop.f32.mrb[0].mxu0
  %2844 = vmatprep.mubr.f32.mxu0 0.0
  %2845 = vmatmul.mubr.f32.gmra.mrb[0].mxu0 %v1393
  %v2846 = vpop.f32.mrb[0].mxu0
  %v2847 = vadd.f32 %v579, %v2846
  %v2848 = vpop.f32.mrb[0].mxu0
  %2849 = vmatprep.mubr.f32.mxu0 0.0
  %2850 = vmatmul.mubr.f32.gmra.mrb[0].mxu0 %v1396
  %v2851 = vpop.f32.mrb[0].mxu0
  %v2852 = vadd.f32 %v580, %v2851
  %v2853 = vpop.f32.mrb[0].mxu0
  %2854 = vmatprep.mubr.f32.mxu0 0.0
  %2855 = vmatmul.mubr.f32.gmra.mrb[0].mxu0 %v1399
  %v2856 = vpop.f32.mrb[0].mxu0
  %v2857 = vadd.f32 %v581, %v2856
  %v2858 = vpop.f32.mrb[0].mxu0
  %2859 = vmatprep.mubr.f32.mxu0 0.0
  %2860 = vmatmul.mubr.f32.gmra.mrb[0].mxu0 %v1402
  %v2861 = vpop.f32.mrb[0].mxu0
  %v2862 = vadd.f32 %v582, %v2861
  %v2863 = vpop.f32.mrb[0].mxu0
  %2864 = vmatprep.mubr.f32.mxu0 0.0
  %2865 = vmatmul.mubr.f32.gmra.mrb[0].mxu0 %v1405
  %v2866 = vpop.f32.mrb[0].mxu0
  %v2867 = vadd.f32 %v583, %v2866
  %v2868 = vpop.f32.mrb[0].mxu0
  %2869 = vmatprep.mubr.f32.mxu0 0.0
  %2870 = vmatmul.mubr.f32.gmra.mrb[0].mxu0 %v1408
  %v2871 = vpop.f32.mrb[0].mxu0
  %v2872 = vadd.f32 %v584, %v2871
  %v2873 = vpop.f32.mrb[0].mxu0
  %2874 = vmatprep.mubr.f32.mxu0 0.0
  %2875 = vmatmul.mubr.f32.gmra.mrb[0].mxu0 %v1411
  %v2876 = vpop.f32.mrb[0].mxu0
  %v2877 = vadd.f32 %v585, %v2876
  %v2878 = vpop.f32.mrb[0].mxu0
  %2879 = vmatprep.mubr.f32.mxu0 0.0
  %2880 = vmatmul.mubr.f32.gmra.mrb[0].mxu0 %v1414
  %v2881 = vpop.f32.mrb[0].mxu0
  %v2882 = vadd.f32 %v586, %v2881
  %v2883 = vpop.f32.mrb[0].mxu0
  %2884 = vmatprep.mubr.f32.mxu0 0.0
  %2885 = vmatmul.mubr.f32.gmra.mrb[0].mxu0 %v1417
  %v2886 = vpop.f32.mrb[0].mxu0
  %v2887 = vadd.f32 %v587, %v2886
  %v2888 = vpop.f32.mrb[0].mxu0
  %2889 = vmatprep.mubr.f32.mxu0 0.0
  %2890 = vmatmul.mubr.f32.gmra.mrb[0].mxu0 %v1420
  %v2891 = vpop.f32.mrb[0].mxu0
  %v2892 = vadd.f32 %v588, %v2891
  %v2893 = vpop.f32.mrb[0].mxu0
  %2894 = vmatprep.mubr.f32.mxu0 0.0
  %2895 = vmatmul.mubr.f32.gmra.mrb[0].mxu0 %v1423
  %v2896 = vpop.f32.mrb[0].mxu0
  %v2897 = vadd.f32 %v589, %v2896
  %v2898 = vpop.f32.mrb[0].mxu0
  %2899 = vmatprep.mubr.f32.mxu0 0.0
  %2900 = vmatmul.mubr.f32.gmra.mrb[0].mxu0 %v1426
  %v2901 = vpop.f32.mrb[0].mxu0
  %v2902 = vadd.f32 %v590, %v2901
  %v2903 = vpop.f32.mrb[0].mxu0
  %2904 = vmatprep.mubr.f32.mxu0 0.0
  %2905 = vmatmul.mubr.f32.gmra.mrb[0].mxu0 %v1429
  %v2906 = vpop.f32.mrb[0].mxu0
  %v2907 = vadd.f32 %v591, %v2906
  %v2908 = vpop.f32.mrb[0].mxu0
  %2909 = vmatprep.mubr.f32.mxu0 0.0
  %2910 = vmatmul.mubr.f32.gmra.mrb[0].mxu0 %v1432
  %v2911 = vpop.f32.mrb[0].mxu0
  %v2912 = vadd.f32 %v592, %v2911
  %v2913 = vpop.f32.mrb[0].mxu0
  %2914 = vmatprep.mubr.f32.mxu0 0.0
  %2915 = vmatmul.mubr.f32.gmra.mrb[0].mxu0 %v1435
  %v2916 = vpop.f32.mrb[0].mxu0
  %v2917 = vadd.f32 %v593, %v2916
  %v2918 = vpop.f32.mrb[0].mxu0
  %2919 = vmatprep.mubr.f32.mxu0 0.0
  %2920 = vmatmul.mubr.f32.gmra.mrb[0].mxu0 %v1438
  %v2921 = vpop.f32.mrb[0].mxu0
  %v2922 = vadd.f32 %v594, %v2921
  %v2923 = vpop.f32.mrb[0].mxu0
  %2924 = vmatprep.mubr.f32.mxu0 0.0
  %2925 = vmatmul.mubr.f32.gmra.mrb[0].mxu0 %v1441
  %v2926 = vpop.f32.mrb[0].mxu0
  %v2927 = vadd.f32 %v595, %v2926
  %v2928 = vpop.f32.mrb[0].mxu0
  %2929 = vmatprep.mubr.f32.mxu0 0.0
  %2930 = vmatmul.mubr.f32.gmra.mrb[0].mxu0 %v1444
  %v2931 = vpop.f32.mrb[0].mxu0
  %v2932 = vadd.f32 %v596, %v2931
  %v2933 = vpop.f32.mrb[0].mxu0
  %2934 = vmatprep.mubr.f32.mxu0 0.0
  %2935 = vmatmul.mubr.f32.gmra.mrb[0].mxu0 %v1447
  %v2936 = vpop.f32.mrb[0].mxu0
  %v2937 = vadd.f32 %v597, %v2936
  %v2938 = vpop.f32.mrb[0].mxu0
  %2939 = vmatprep.mubr.f32.mxu0 0.0
  %2940 = vmatmul.mubr.f32.gmra.mrb[0].mxu0 %v1450
  %v2941 = vpop.f32.mrb[0].mxu0
  %v2942 = vadd.f32 %v598, %v2941
  %v2943 = vpop.f32.mrb[0].mxu0
  %2944 = vmatprep.mubr.f32.mxu0 0.0
  %2945 = vmatmul.mubr.f32.gmra.mrb[0].mxu0 %v1453
  %v2946 = vpop.f32.mrb[0].mxu0
  %v2947 = vadd.f32 %v599, %v2946
  %v2948 = vpop.f32.mrb[0].mxu0
  %2949 = vmatprep.mubr.f32.mxu0 0.0
  %2950 = vmatmul.mubr.f32.gmra.mrb[0].mxu0 %v1456
  %v2951 = vpop.f32.mrb[0].mxu0
  %v2952 = vadd.f32 %v600, %v2951
  %v2953 = vpop.f32.mrb[0].mxu0
  %2954 = vmatprep.mubr.f32.mxu0 0.0
  %2955 = vmatmul.mubr.f32.gmra.mrb[0].mxu0 %v1459
  %v2956 = vpop.f32.mrb[0].mxu0
  %v2957 = vadd.f32 %v601, %v2956
  %v2958 = vpop.f32.mrb[0].mxu0
  %2959 = vmatprep.mubr.f32.mxu0 0.0
  %2960 = vmatmul.mubr.f32.gmra.mrb[0].mxu0 %v1462
  %v2961 = vpop.f32.mrb[0].mxu0
  %v2962 = vadd.f32 %v602, %v2961
  %v2963 = vpop.f32.mrb[0].mxu0
  %2964 = vmatprep.mubr.f32.mxu0 0.0
  %2965 = vmatmul.mubr.f32.gmra.mrb[0].mxu0 %v1465
  %v2966 = vpop.f32.mrb[0].mxu0
  %v2967 = vadd.f32 %v603, %v2966
  %v2968 = vpop.f32.mrb[0].mxu0
  %2969 = vmatprep.mubr.f32.mxu0 0.0
  %2970 = vmatmul.mubr.f32.gmra.mrb[0].mxu0 %v1468
  %v2971 = vpop.f32.mrb[0].mxu0
  %v2972 = vadd.f32 %v604, %v2971
  %v2973 = vpop.f32.mrb[0].mxu0
  %2974 = vdwg.mxu0
  %v2975 = vxor.u32 %v1537, 2147483648
  %v2976 = vxor.u32 %v1542, 2147483648
  %v2977 = vxor.u32 %v1547, 2147483648
  %v2978 = vxor.u32 %v1552, 2147483648
  %v2979 = vxor.u32 %v1557, 2147483648
  %v2980 = vxor.u32 %v1562, 2147483648
  %v2981 = vxor.u32 %v1567, 2147483648
  %v2982 = vxor.u32 %v1572, 2147483648
  %v2983 = vxor.u32 %v1577, 2147483648
  %v2984 = vxor.u32 %v1582, 2147483648
  %v2985 = vxor.u32 %v1587, 2147483648
  %v2986 = vxor.u32 %v1592, 2147483648
  %v2987 = vxor.u32 %v1597, 2147483648
  %v2988 = vxor.u32 %v1602, 2147483648
  %v2989 = vxor.u32 %v1607, 2147483648
  %v2990 = vxor.u32 %v1612, 2147483648
  %v2991 = vxor.u32 %v1617, 2147483648
  %v2992 = vxor.u32 %v1622, 2147483648
  %v2993 = vxor.u32 %v1627, 2147483648
  %v2994 = vxor.u32 %v1632, 2147483648
  %v2995 = vxor.u32 %v1637, 2147483648
  %v2996 = vxor.u32 %v1642, 2147483648
  %v2997 = vxor.u32 %v1647, 2147483648
  %v2998 = vxor.u32 %v1652, 2147483648
  %v2999 = vxor.u32 %v1657, 2147483648
  %v3000 = vxor.u32 %v1662, 2147483648
  %v3001 = vxor.u32 %v1667, 2147483648
  %v3002 = vxor.u32 %v1672, 2147483648
  %v3003 = vxor.u32 %v1677, 2147483648
  %v3004 = vxor.u32 %v1682, 2147483648
  %v3005 = vxor.u32 %v1687, 2147483648
  %v3006 = vxor.u32 %v1692, 2147483648
  %v3007 = vxor.u32 %v1697, 2147483648
  %v3008 = vxor.u32 %v1702, 2147483648
  %v3009 = vxor.u32 %v1707, 2147483648
  %v3010 = vxor.u32 %v1712, 2147483648
  %v3011 = vxor.u32 %v1717, 2147483648
  %v3012 = vxor.u32 %v1722, 2147483648
  %v3013 = vxor.u32 %v1727, 2147483648
  %v3014 = vxor.u32 %v1732, 2147483648
  %v3015 = vxor.u32 %v1737, 2147483648
  %v3016 = vxor.u32 %v1742, 2147483648
  %v3017 = vxor.u32 %v1747, 2147483648
  %v3018 = vxor.u32 %v1752, 2147483648
  %v3019 = vxor.u32 %v1757, 2147483648
  %v3020 = vxor.u32 %v1762, 2147483648
  %v3021 = vxor.u32 %v1767, 2147483648
  %v3022 = vxor.u32 %v1772, 2147483648
  %v3023 = vxor.u32 %v1777, 2147483648
  %v3024 = vxor.u32 %v1782, 2147483648
  %v3025 = vxor.u32 %v1787, 2147483648
  %v3026 = vxor.u32 %v1792, 2147483648
  %v3027 = vxor.u32 %v1797, 2147483648
  %v3028 = vxor.u32 %v1802, 2147483648
  %v3029 = vxor.u32 %v1807, 2147483648
  %v3030 = vxor.u32 %v1812, 2147483648
  %v3031 = vxor.u32 %v1817, 2147483648
  %v3032 = vxor.u32 %v1822, 2147483648
  %v3033 = vxor.u32 %v1827, 2147483648
  %v3034 = vxor.u32 %v1832, 2147483648
  %v3035 = vxor.u32 %v1837, 2147483648
  %v3036 = vxor.u32 %v1842, 2147483648
  %v3037 = vxor.u32 %v1847, 2147483648
  %v3038 = vxor.u32 %v1852, 2147483648
  %v3039 = vxor.u32 %v1857, 2147483648
  %v3040 = vxor.u32 %v1862, 2147483648
  %v3041 = vxor.u32 %v1867, 2147483648
  %v3042 = vxor.u32 %v1872, 2147483648
  %v3043 = vxor.u32 %v1877, 2147483648
  %v3044 = vxor.u32 %v1882, 2147483648
  %v3045 = vxor.u32 %v1887, 2147483648
  %v3046 = vxor.u32 %v1892, 2147483648
  %v3047 = vxor.u32 %v1897, 2147483648
  %v3048 = vxor.u32 %v1902, 2147483648
  %v3049 = vxor.u32 %v1907, 2147483648
  %v3050 = vxor.u32 %v1912, 2147483648
  %v3051 = vxor.u32 %v1917, 2147483648
  %v3052 = vxor.u32 %v1922, 2147483648
  %v3053 = vxor.u32 %v1927, 2147483648
  %v3054 = vxor.u32 %v1932, 2147483648
  %v3055 = vxor.u32 %v1937, 2147483648
  %v3056 = vxor.u32 %v1942, 2147483648
  %v3057 = vxor.u32 %v1947, 2147483648
  %v3058 = vxor.u32 %v1952, 2147483648
  %v3059 = vxor.u32 %v1957, 2147483648
  %v3060 = vxor.u32 %v1962, 2147483648
  %v3061 = vxor.u32 %v1967, 2147483648
  %v3062 = vxor.u32 %v1972, 2147483648
  %v3063 = vxor.u32 %v1977, 2147483648
  %v3064 = vxor.u32 %v1982, 2147483648
  %v3065 = vxor.u32 %v1987, 2147483648
  %v3066 = vxor.u32 %v1992, 2147483648
  %v3067 = vxor.u32 %v1997, 2147483648
  %v3068 = vxor.u32 %v2002, 2147483648
  %v3069 = vxor.u32 %v2007, 2147483648
  %v3070 = vxor.u32 %v2012, 2147483648
  %v3071 = vxor.u32 %v2017, 2147483648
  %v3072 = vxor.u32 %v2022, 2147483648
  %v3073 = vxor.u32 %v2027, 2147483648
  %v3074 = vxor.u32 %v2032, 2147483648
  %v3075 = vxor.u32 %v2037, 2147483648
  %v3076 = vxor.u32 %v2042, 2147483648
  %v3077 = vxor.u32 %v2047, 2147483648
  %v3078 = vxor.u32 %v2052, 2147483648
  %v3079 = vxor.u32 %v2057, 2147483648
  %v3080 = vxor.u32 %v2062, 2147483648
  %v3081 = vxor.u32 %v2067, 2147483648
  %v3082 = vxor.u32 %v2072, 2147483648
  %v3083 = vxor.u32 %v2077, 2147483648
  %v3084 = vxor.u32 %v2082, 2147483648
  %v3085 = vxor.u32 %v2087, 2147483648
  %v3086 = vxor.u32 %v2092, 2147483648
  %v3087 = vxor.u32 %v2097, 2147483648
  %v3088 = vxor.u32 %v2102, 2147483648
  %v3089 = vxor.u32 %v2107, 2147483648
  %v3090 = vxor.u32 %v2112, 2147483648
  %v3091 = vxor.u32 %v2117, 2147483648
  %v3092 = vxor.u32 %v2122, 2147483648
  %v3093 = vxor.u32 %v2127, 2147483648
  %v3094 = vxor.u32 %v2132, 2147483648
  %v3095 = vxor.u32 %v2137, 2147483648
  %v3096 = vxor.u32 %v2142, 2147483648
  %v3097 = vxor.u32 %v2147, 2147483648
  %v3098 = vxor.u32 %v2152, 2147483648
  %v3099 = vxor.u32 %v2157, 2147483648
  %v3100 = vxor.u32 %v2162, 2147483648
  %v3101 = vxor.u32 %v2167, 2147483648
  %v3102 = vxor.u32 %v2172, 2147483648
  %v3103 = vxor.u32 %v2177, 2147483648
  %v3104 = vxor.u32 %v2182, 2147483648
  %v3105 = vxor.u32 %v2187, 2147483648
  %v3106 = vxor.u32 %v2192, 2147483648
  %v3107 = vxor.u32 %v2197, 2147483648
  %v3108 = vxor.u32 %v2202, 2147483648
  %v3109 = vxor.u32 %v2207, 2147483648
  %v3110 = vxor.u32 %v2212, 2147483648
  %v3111 = vxor.u32 %v2217, 2147483648
  %v3112 = vxor.u32 %v2222, 2147483648
  %v3113 = vxor.u32 %v2227, 2147483648
  %v3114 = vxor.u32 %v2232, 2147483648
  %v3115 = vxor.u32 %v2237, 2147483648
  %v3116 = vxor.u32 %v2242, 2147483648
  %v3117 = vxor.u32 %v2247, 2147483648
  %v3118 = vxor.u32 %v2252, 2147483648
  %v3119 = vxor.u32 %v2257, 2147483648
  %v3120 = vxor.u32 %v2262, 2147483648
  %v3121 = vxor.u32 %v2267, 2147483648
  %v3122 = vxor.u32 %v2272, 2147483648
  %v3123 = vxor.u32 %v2277, 2147483648
  %v3124 = vxor.u32 %v2282, 2147483648
  %v3125 = vxor.u32 %v2287, 2147483648
  %v3126 = vxor.u32 %v2292, 2147483648
  %v3127 = vxor.u32 %v2297, 2147483648
  %v3128 = vxor.u32 %v2302, 2147483648
  %v3129 = vxor.u32 %v2307, 2147483648
  %v3130 = vxor.u32 %v2312, 2147483648
  %v3131 = vxor.u32 %v2317, 2147483648
  %v3132 = vxor.u32 %v2322, 2147483648
  %v3133 = vxor.u32 %v2327, 2147483648
  %v3134 = vxor.u32 %v2332, 2147483648
  %v3135 = vxor.u32 %v2337, 2147483648
  %v3136 = vxor.u32 %v2342, 2147483648
  %v3137 = vxor.u32 %v2347, 2147483648
  %v3138 = vxor.u32 %v2352, 2147483648
  %v3139 = vxor.u32 %v2357, 2147483648
  %v3140 = vxor.u32 %v2362, 2147483648
  %v3141 = vxor.u32 %v2367, 2147483648
  %v3142 = vxor.u32 %v2372, 2147483648
  %v3143 = vxor.u32 %v2377, 2147483648
  %v3144 = vxor.u32 %v2382, 2147483648
  %v3145 = vxor.u32 %v2387, 2147483648
  %v3146 = vxor.u32 %v2392, 2147483648
  %v3147 = vxor.u32 %v2397, 2147483648
  %v3148 = vxor.u32 %v2402, 2147483648
  %v3149 = vxor.u32 %v2407, 2147483648
  %v3150 = vxor.u32 %v2412, 2147483648
  %v3151 = vxor.u32 %v2417, 2147483648
  %v3152 = vxor.u32 %v2422, 2147483648
  %v3153 = vxor.u32 %v2427, 2147483648
  %v3154 = vxor.u32 %v2432, 2147483648
  %v3155 = vxor.u32 %v2437, 2147483648
  %v3156 = vxor.u32 %v2442, 2147483648
  %v3157 = vxor.u32 %v2447, 2147483648
  %v3158 = vxor.u32 %v2452, 2147483648
  %v3159 = vxor.u32 %v2457, 2147483648
  %v3160 = vxor.u32 %v2462, 2147483648
  %v3161 = vxor.u32 %v2467, 2147483648
  %v3162 = vxor.u32 %v2472, 2147483648
  %v3163 = vxor.u32 %v2477, 2147483648
  %v3164 = vxor.u32 %v2482, 2147483648
  %v3165 = vxor.u32 %v2487, 2147483648
  %v3166 = vxor.u32 %v2492, 2147483648
  %v3167 = vxor.u32 %v2497, 2147483648
  %v3168 = vxor.u32 %v2502, 2147483648
  %v3169 = vxor.u32 %v2507, 2147483648
  %v3170 = vxor.u32 %v2512, 2147483648
  %v3171 = vxor.u32 %v2517, 2147483648
  %v3172 = vxor.u32 %v2522, 2147483648
  %v3173 = vxor.u32 %v2527, 2147483648
  %v3174 = vxor.u32 %v2532, 2147483648
  %v3175 = vxor.u32 %v2537, 2147483648
  %v3176 = vxor.u32 %v2542, 2147483648
  %v3177 = vxor.u32 %v2547, 2147483648
  %v3178 = vxor.u32 %v2552, 2147483648
  %v3179 = vxor.u32 %v2557, 2147483648
  %v3180 = vxor.u32 %v2562, 2147483648
  %v3181 = vxor.u32 %v2567, 2147483648
  %v3182 = vxor.u32 %v2572, 2147483648
  %v3183 = vxor.u32 %v2577, 2147483648
  %v3184 = vxor.u32 %v2582, 2147483648
  %v3185 = vxor.u32 %v2587, 2147483648
  %v3186 = vxor.u32 %v2592, 2147483648
  %v3187 = vxor.u32 %v2597, 2147483648
  %v3188 = vxor.u32 %v2602, 2147483648
  %v3189 = vxor.u32 %v2607, 2147483648
  %v3190 = vxor.u32 %v2612, 2147483648
  %v3191 = vxor.u32 %v2617, 2147483648
  %v3192 = vxor.u32 %v2622, 2147483648
  %v3193 = vxor.u32 %v2627, 2147483648
  %v3194 = vxor.u32 %v2632, 2147483648
  %v3195 = vxor.u32 %v2637, 2147483648
  %v3196 = vxor.u32 %v2642, 2147483648
  %v3197 = vxor.u32 %v2647, 2147483648
  %v3198 = vxor.u32 %v2652, 2147483648
  %v3199 = vxor.u32 %v2657, 2147483648
  %v3200 = vxor.u32 %v2662, 2147483648
  %v3201 = vxor.u32 %v2667, 2147483648
  %v3202 = vxor.u32 %v2672, 2147483648
  %v3203 = vxor.u32 %v2677, 2147483648
  %v3204 = vxor.u32 %v2682, 2147483648
  %v3205 = vxor.u32 %v2687, 2147483648
  %v3206 = vxor.u32 %v2692, 2147483648
  %v3207 = vxor.u32 %v2697, 2147483648
  %v3208 = vxor.u32 %v2702, 2147483648
  %v3209 = vxor.u32 %v2707, 2147483648
  %v3210 = vxor.u32 %v2712, 2147483648
  %v3211 = vxor.u32 %v2717, 2147483648
  %v3212 = vxor.u32 %v2722, 2147483648
  %v3213 = vxor.u32 %v2727, 2147483648
  %v3214 = vxor.u32 %v2732, 2147483648
  %v3215 = vxor.u32 %v2737, 2147483648
  %v3216 = vxor.u32 %v2742, 2147483648
  %v3217 = vxor.u32 %v2747, 2147483648
  %v3218 = vxor.u32 %v2752, 2147483648
  %v3219 = vxor.u32 %v2757, 2147483648
  %v3220 = vxor.u32 %v2762, 2147483648
  %v3221 = vxor.u32 %v2767, 2147483648
  %v3222 = vxor.u32 %v2772, 2147483648
  %v3223 = vxor.u32 %v2777, 2147483648
  %v3224 = vxor.u32 %v2782, 2147483648
  %v3225 = vxor.u32 %v2787, 2147483648
  %v3226 = vxor.u32 %v2792, 2147483648
  %v3227 = vxor.u32 %v2797, 2147483648
  %v3228 = vxor.u32 %v2802, 2147483648
  %v3229 = vxor.u32 %v2807, 2147483648
  %v3230 = vxor.u32 %v2812, 2147483648
  %v3231 = vxor.u32 %v2817, 2147483648
  %v3232 = vxor.u32 %v2822, 2147483648
  %v3233 = vxor.u32 %v2827, 2147483648
  %v3234 = vxor.u32 %v2832, 2147483648
  %v3235 = vxor.u32 %v2837, 2147483648
  %v3236 = vxor.u32 %v2842, 2147483648
  %v3237 = vxor.u32 %v2847, 2147483648
  %v3238 = vxor.u32 %v2852, 2147483648
  %v3239 = vxor.u32 %v2857, 2147483648
  %v3240 = vxor.u32 %v2862, 2147483648
  %v3241 = vxor.u32 %v2867, 2147483648
  %v3242 = vxor.u32 %v2872, 2147483648
  %v3243 = vxor.u32 %v2877, 2147483648
  %v3244 = vxor.u32 %v2882, 2147483648
  %v3245 = vxor.u32 %v2887, 2147483648
  %v3246 = vxor.u32 %v2892, 2147483648
  %v3247 = vxor.u32 %v2897, 2147483648
  %v3248 = vxor.u32 %v2902, 2147483648
  %v3249 = vxor.u32 %v2907, 2147483648
  %v3250 = vxor.u32 %v2912, 2147483648
  %v3251 = vxor.u32 %v2917, 2147483648
  %v3252 = vxor.u32 %v2922, 2147483648
  %v3253 = vxor.u32 %v2927, 2147483648
  %v3254 = vxor.u32 %v2932, 2147483648
  %v3255 = vxor.u32 %v2937, 2147483648
  %v3256 = vxor.u32 %v2942, 2147483648
  %v3257 = vxor.u32 %v2947, 2147483648
  %v3258 = vxor.u32 %v2952, 2147483648
  %v3259 = vxor.u32 %v2957, 2147483648
  %v3260 = vxor.u32 %v2962, 2147483648
  %v3261 = vxor.u32 %v2967, 2147483648
  %v3262 = vxor.u32 %v2972, 2147483648
  %v3263 = vmul.f32 %v2975, 1.442695
  %v3264 = vpow.pop %v3263
  %v3265 = vmul.f32 %v2976, 1.442695
  %v3266 = vpow.pop %v3265
  %v3267 = vmul.f32 %v2977, 1.442695
  %v3268 = vpow.pop %v3267
  %v3269 = vmul.f32 %v2978, 1.442695
  %v3270 = vpow.pop %v3269
  %v3271 = vmul.f32 %v2979, 1.442695
  %v3272 = vpow.pop %v3271
  %v3273 = vmul.f32 %v2980, 1.442695
  %v3274 = vpow.pop %v3273
  %v3275 = vmul.f32 %v2981, 1.442695
  %v3276 = vpow.pop %v3275
  %v3277 = vmul.f32 %v2982, 1.442695
  %v3278 = vpow.pop %v3277
  %v3279 = vmul.f32 %v2983, 1.442695
  %v3280 = vpow.pop %v3279
  %v3281 = vmul.f32 %v2984, 1.442695
  %v3282 = vpow.pop %v3281
  %v3283 = vmul.f32 %v2985, 1.442695
  %v3284 = vpow.pop %v3283
  %v3285 = vmul.f32 %v2986, 1.442695
  %v3286 = vpow.pop %v3285
  %v3287 = vmul.f32 %v2987, 1.442695
  %v3288 = vpow.pop %v3287
  %v3289 = vmul.f32 %v2988, 1.442695
  %v3290 = vpow.pop %v3289
  %v3291 = vmul.f32 %v2989, 1.442695
  %v3292 = vpow.pop %v3291
  %v3293 = vmul.f32 %v2990, 1.442695
  %v3294 = vpow.pop %v3293
  %v3295 = vmul.f32 %v2991, 1.442695
  %v3296 = vpow.pop %v3295
  %v3297 = vmul.f32 %v2992, 1.442695
  %v3298 = vpow.pop %v3297
  %v3299 = vmul.f32 %v2993, 1.442695
  %v3300 = vpow.pop %v3299
  %v3301 = vmul.f32 %v2994, 1.442695
  %v3302 = vpow.pop %v3301
  %v3303 = vmul.f32 %v2995, 1.442695
  %v3304 = vpow.pop %v3303
  %v3305 = vmul.f32 %v2996, 1.442695
  %v3306 = vpow.pop %v3305
  %v3307 = vmul.f32 %v2997, 1.442695
  %v3308 = vpow.pop %v3307
  %v3309 = vmul.f32 %v2998, 1.442695
  %v3310 = vpow.pop %v3309
  %v3311 = vmul.f32 %v2999, 1.442695
  %v3312 = vpow.pop %v3311
  %v3313 = vmul.f32 %v3000, 1.442695
  %v3314 = vpow.pop %v3313
  %v3315 = vmul.f32 %v3001, 1.442695
  %v3316 = vpow.pop %v3315
  %v3317 = vmul.f32 %v3002, 1.442695
  %v3318 = vpow.pop %v3317
  %v3319 = vmul.f32 %v3003, 1.442695
  %v3320 = vpow.pop %v3319
  %v3321 = vmul.f32 %v3004, 1.442695
  %v3322 = vpow.pop %v3321
  %v3323 = vmul.f32 %v3005, 1.442695
  %v3324 = vpow.pop %v3323
  %v3325 = vmul.f32 %v3006, 1.442695
  %v3326 = vpow.pop %v3325
  %v3327 = vmul.f32 %v3007, 1.442695
  %v3328 = vpow.pop %v3327
  %v3329 = vmul.f32 %v3008, 1.442695
  %v3330 = vpow.pop %v3329
  %v3331 = vmul.f32 %v3009, 1.442695
  %v3332 = vpow.pop %v3331
  %v3333 = vmul.f32 %v3010, 1.442695
  %v3334 = vpow.pop %v3333
  %v3335 = vmul.f32 %v3011, 1.442695
  %v3336 = vpow.pop %v3335
  %v3337 = vmul.f32 %v3012, 1.442695
  %v3338 = vpow.pop %v3337
  %v3339 = vmul.f32 %v3013, 1.442695
  %v3340 = vpow.pop %v3339
  %v3341 = vmul.f32 %v3014, 1.442695
  %v3342 = vpow.pop %v3341
  %v3343 = vmul.f32 %v3015, 1.442695
  %v3344 = vpow.pop %v3343
  %v3345 = vmul.f32 %v3016, 1.442695
  %v3346 = vpow.pop %v3345
  %v3347 = vmul.f32 %v3017, 1.442695
  %v3348 = vpow.pop %v3347
  %v3349 = vmul.f32 %v3018, 1.442695
  %v3350 = vpow.pop %v3349
  %v3351 = vmul.f32 %v3019, 1.442695
  %v3352 = vpow.pop %v3351
  %v3353 = vmul.f32 %v3020, 1.442695
  %v3354 = vpow.pop %v3353
  %v3355 = vmul.f32 %v3021, 1.442695
  %v3356 = vpow.pop %v3355
  %v3357 = vmul.f32 %v3022, 1.442695
  %v3358 = vpow.pop %v3357
  %v3359 = vmul.f32 %v3023, 1.442695
  %v3360 = vpow.pop %v3359
  %v3361 = vmul.f32 %v3024, 1.442695
  %v3362 = vpow.pop %v3361
  %v3363 = vmul.f32 %v3025, 1.442695
  %v3364 = vpow.pop %v3363
  %v3365 = vmul.f32 %v3026, 1.442695
  %v3366 = vpow.pop %v3365
  %v3367 = vmul.f32 %v3027, 1.442695
  %v3368 = vpow.pop %v3367
  %v3369 = vmul.f32 %v3028, 1.442695
  %v3370 = vpow.pop %v3369
  %v3371 = vmul.f32 %v3029, 1.442695
  %v3372 = vpow.pop %v3371
  %v3373 = vmul.f32 %v3030, 1.442695
  %v3374 = vpow.pop %v3373
  %v3375 = vmul.f32 %v3031, 1.442695
  %v3376 = vpow.pop %v3375
  %v3377 = vmul.f32 %v3032, 1.442695
  %v3378 = vpow.pop %v3377
  %v3379 = vmul.f32 %v3033, 1.442695
  %v3380 = vpow.pop %v3379
  %v3381 = vmul.f32 %v3034, 1.442695
  %v3382 = vpow.pop %v3381
  %v3383 = vmul.f32 %v3035, 1.442695
  %v3384 = vpow.pop %v3383
  %v3385 = vmul.f32 %v3036, 1.442695
  %v3386 = vpow.pop %v3385
  %v3387 = vmul.f32 %v3037, 1.442695
  %v3388 = vpow.pop %v3387
  %v3389 = vmul.f32 %v3038, 1.442695
  %v3390 = vpow.pop %v3389
  %v3391 = vmul.f32 %v3039, 1.442695
  %v3392 = vpow.pop %v3391
  %v3393 = vmul.f32 %v3040, 1.442695
  %v3394 = vpow.pop %v3393
  %v3395 = vmul.f32 %v3041, 1.442695
  %v3396 = vpow.pop %v3395
  %v3397 = vmul.f32 %v3042, 1.442695
  %v3398 = vpow.pop %v3397
  %v3399 = vmul.f32 %v3043, 1.442695
  %v3400 = vpow.pop %v3399
  %v3401 = vmul.f32 %v3044, 1.442695
  %v3402 = vpow.pop %v3401
  %v3403 = vmul.f32 %v3045, 1.442695
  %v3404 = vpow.pop %v3403
  %v3405 = vmul.f32 %v3046, 1.442695
  %v3406 = vpow.pop %v3405
  %v3407 = vmul.f32 %v3047, 1.442695
  %v3408 = vpow.pop %v3407
  %v3409 = vmul.f32 %v3048, 1.442695
  %v3410 = vpow.pop %v3409
  %v3411 = vmul.f32 %v3049, 1.442695
  %v3412 = vpow.pop %v3411
  %v3413 = vmul.f32 %v3050, 1.442695
  %v3414 = vpow.pop %v3413
  %v3415 = vmul.f32 %v3051, 1.442695
  %v3416 = vpow.pop %v3415
  %v3417 = vmul.f32 %v3052, 1.442695
  %v3418 = vpow.pop %v3417
  %v3419 = vmul.f32 %v3053, 1.442695
  %v3420 = vpow.pop %v3419
  %v3421 = vmul.f32 %v3054, 1.442695
  %v3422 = vpow.pop %v3421
  %v3423 = vmul.f32 %v3055, 1.442695
  %v3424 = vpow.pop %v3423
  %v3425 = vmul.f32 %v3056, 1.442695
  %v3426 = vpow.pop %v3425
  %v3427 = vmul.f32 %v3057, 1.442695
  %v3428 = vpow.pop %v3427
  %v3429 = vmul.f32 %v3058, 1.442695
  %v3430 = vpow.pop %v3429
  %v3431 = vmul.f32 %v3059, 1.442695
  %v3432 = vpow.pop %v3431
  %v3433 = vmul.f32 %v3060, 1.442695
  %v3434 = vpow.pop %v3433
  %v3435 = vmul.f32 %v3061, 1.442695
  %v3436 = vpow.pop %v3435
  %v3437 = vmul.f32 %v3062, 1.442695
  %v3438 = vpow.pop %v3437
  %v3439 = vmul.f32 %v3063, 1.442695
  %v3440 = vpow.pop %v3439
  %v3441 = vmul.f32 %v3064, 1.442695
  %v3442 = vpow.pop %v3441
  %v3443 = vmul.f32 %v3065, 1.442695
  %v3444 = vpow.pop %v3443
  %v3445 = vmul.f32 %v3066, 1.442695
  %v3446 = vpow.pop %v3445
  %v3447 = vmul.f32 %v3067, 1.442695
  %v3448 = vpow.pop %v3447
  %v3449 = vmul.f32 %v3068, 1.442695
  %v3450 = vpow.pop %v3449
  %v3451 = vmul.f32 %v3069, 1.442695
  %v3452 = vpow.pop %v3451
  %v3453 = vmul.f32 %v3070, 1.442695
  %v3454 = vpow.pop %v3453
  %v3455 = vmul.f32 %v3071, 1.442695
  %v3456 = vpow.pop %v3455
  %v3457 = vmul.f32 %v3072, 1.442695
  %v3458 = vpow.pop %v3457
  %v3459 = vmul.f32 %v3073, 1.442695
  %v3460 = vpow.pop %v3459
  %v3461 = vmul.f32 %v3074, 1.442695
  %v3462 = vpow.pop %v3461
  %v3463 = vmul.f32 %v3075, 1.442695
  %v3464 = vpow.pop %v3463
  %v3465 = vmul.f32 %v3076, 1.442695
  %v3466 = vpow.pop %v3465
  %v3467 = vmul.f32 %v3077, 1.442695
  %v3468 = vpow.pop %v3467
  %v3469 = vmul.f32 %v3078, 1.442695
  %v3470 = vpow.pop %v3469
  %v3471 = vmul.f32 %v3079, 1.442695
  %v3472 = vpow.pop %v3471
  %v3473 = vmul.f32 %v3080, 1.442695
  %v3474 = vpow.pop %v3473
  %v3475 = vmul.f32 %v3081, 1.442695
  %v3476 = vpow.pop %v3475
  %v3477 = vmul.f32 %v3082, 1.442695
  %v3478 = vpow.pop %v3477
  %v3479 = vmul.f32 %v3083, 1.442695
  %v3480 = vpow.pop %v3479
  %v3481 = vmul.f32 %v3084, 1.442695
  %v3482 = vpow.pop %v3481
  %v3483 = vmul.f32 %v3085, 1.442695
  %v3484 = vpow.pop %v3483
  %v3485 = vmul.f32 %v3086, 1.442695
  %v3486 = vpow.pop %v3485
  %v3487 = vmul.f32 %v3087, 1.442695
  %v3488 = vpow.pop %v3487
  %v3489 = vmul.f32 %v3088, 1.442695
  %v3490 = vpow.pop %v3489
  %v3491 = vmul.f32 %v3089, 1.442695
  %v3492 = vpow.pop %v3491
  %v3493 = vmul.f32 %v3090, 1.442695
  %v3494 = vpow.pop %v3493
  %v3495 = vmul.f32 %v3091, 1.442695
  %v3496 = vpow.pop %v3495
  %v3497 = vmul.f32 %v3092, 1.442695
  %v3498 = vpow.pop %v3497
  %v3499 = vmul.f32 %v3093, 1.442695
  %v3500 = vpow.pop %v3499
  %v3501 = vmul.f32 %v3094, 1.442695
  %v3502 = vpow.pop %v3501
  %v3503 = vmul.f32 %v3095, 1.442695
  %v3504 = vpow.pop %v3503
  %v3505 = vmul.f32 %v3096, 1.442695
  %v3506 = vpow.pop %v3505
  %v3507 = vmul.f32 %v3097, 1.442695
  %v3508 = vpow.pop %v3507
  %v3509 = vmul.f32 %v3098, 1.442695
  %v3510 = vpow.pop %v3509
  %v3511 = vmul.f32 %v3099, 1.442695
  %v3512 = vpow.pop %v3511
  %v3513 = vmul.f32 %v3100, 1.442695
  %v3514 = vpow.pop %v3513
  %v3515 = vmul.f32 %v3101, 1.442695
  %v3516 = vpow.pop %v3515
  %v3517 = vmul.f32 %v3102, 1.442695
  %v3518 = vpow.pop %v3517
  %v3519 = vmul.f32 %v3103, 1.442695
  %v3520 = vpow.pop %v3519
  %v3521 = vmul.f32 %v3104, 1.442695
  %v3522 = vpow.pop %v3521
  %v3523 = vmul.f32 %v3105, 1.442695
  %v3524 = vpow.pop %v3523
  %v3525 = vmul.f32 %v3106, 1.442695
  %v3526 = vpow.pop %v3525
  %v3527 = vmul.f32 %v3107, 1.442695
  %v3528 = vpow.pop %v3527
  %v3529 = vmul.f32 %v3108, 1.442695
  %v3530 = vpow.pop %v3529
  %v3531 = vmul.f32 %v3109, 1.442695
  %v3532 = vpow.pop %v3531
  %v3533 = vmul.f32 %v3110, 1.442695
  %v3534 = vpow.pop %v3533
  %v3535 = vmul.f32 %v3111, 1.442695
  %v3536 = vpow.pop %v3535
  %v3537 = vmul.f32 %v3112, 1.442695
  %v3538 = vpow.pop %v3537
  %v3539 = vmul.f32 %v3113, 1.442695
  %v3540 = vpow.pop %v3539
  %v3541 = vmul.f32 %v3114, 1.442695
  %v3542 = vpow.pop %v3541
  %v3543 = vmul.f32 %v3115, 1.442695
  %v3544 = vpow.pop %v3543
  %v3545 = vmul.f32 %v3116, 1.442695
  %v3546 = vpow.pop %v3545
  %v3547 = vmul.f32 %v3117, 1.442695
  %v3548 = vpow.pop %v3547
  %v3549 = vmul.f32 %v3118, 1.442695
  %v3550 = vpow.pop %v3549
  %v3551 = vmul.f32 %v3119, 1.442695
  %v3552 = vpow.pop %v3551
  %v3553 = vmul.f32 %v3120, 1.442695
  %v3554 = vpow.pop %v3553
  %v3555 = vmul.f32 %v3121, 1.442695
  %v3556 = vpow.pop %v3555
  %v3557 = vmul.f32 %v3122, 1.442695
  %v3558 = vpow.pop %v3557
  %v3559 = vmul.f32 %v3123, 1.442695
  %v3560 = vpow.pop %v3559
  %v3561 = vmul.f32 %v3124, 1.442695
  %v3562 = vpow.pop %v3561
  %v3563 = vmul.f32 %v3125, 1.442695
  %v3564 = vpow.pop %v3563
  %v3565 = vmul.f32 %v3126, 1.442695
  %v3566 = vpow.pop %v3565
  %v3567 = vmul.f32 %v3127, 1.442695
  %v3568 = vpow.pop %v3567
  %v3569 = vmul.f32 %v3128, 1.442695
  %v3570 = vpow.pop %v3569
  %v3571 = vmul.f32 %v3129, 1.442695
  %v3572 = vpow.pop %v3571
  %v3573 = vmul.f32 %v3130, 1.442695
  %v3574 = vpow.pop %v3573
  %v3575 = vmul.f32 %v3131, 1.442695
  %v3576 = vpow.pop %v3575
  %v3577 = vmul.f32 %v3132, 1.442695
  %v3578 = vpow.pop %v3577
  %v3579 = vmul.f32 %v3133, 1.442695
  %v3580 = vpow.pop %v3579
  %v3581 = vmul.f32 %v3134, 1.442695
  %v3582 = vpow.pop %v3581
  %v3583 = vmul.f32 %v3135, 1.442695
  %v3584 = vpow.pop %v3583
  %v3585 = vmul.f32 %v3136, 1.442695
  %v3586 = vpow.pop %v3585
  %v3587 = vmul.f32 %v3137, 1.442695
  %v3588 = vpow.pop %v3587
  %v3589 = vmul.f32 %v3138, 1.442695
  %v3590 = vpow.pop %v3589
  %v3591 = vmul.f32 %v3139, 1.442695
  %v3592 = vpow.pop %v3591
  %v3593 = vmul.f32 %v3140, 1.442695
  %v3594 = vpow.pop %v3593
  %v3595 = vmul.f32 %v3141, 1.442695
  %v3596 = vpow.pop %v3595
  %v3597 = vmul.f32 %v3142, 1.442695
  %v3598 = vpow.pop %v3597
  %v3599 = vmul.f32 %v3143, 1.442695
  %v3600 = vpow.pop %v3599
  %v3601 = vmul.f32 %v3144, 1.442695
  %v3602 = vpow.pop %v3601
  %v3603 = vmul.f32 %v3145, 1.442695
  %v3604 = vpow.pop %v3603
  %v3605 = vmul.f32 %v3146, 1.442695
  %v3606 = vpow.pop %v3605
  %v3607 = vmul.f32 %v3147, 1.442695
  %v3608 = vpow.pop %v3607
  %v3609 = vmul.f32 %v3148, 1.442695
  %v3610 = vpow.pop %v3609
  %v3611 = vmul.f32 %v3149, 1.442695
  %v3612 = vpow.pop %v3611
  %v3613 = vmul.f32 %v3150, 1.442695
  %v3614 = vpow.pop %v3613
  %v3615 = vmul.f32 %v3151, 1.442695
  %v3616 = vpow.pop %v3615
  %v3617 = vmul.f32 %v3152, 1.442695
  %v3618 = vpow.pop %v3617
  %v3619 = vmul.f32 %v3153, 1.442695
  %v3620 = vpow.pop %v3619
  %v3621 = vmul.f32 %v3154, 1.442695
  %v3622 = vpow.pop %v3621
  %v3623 = vmul.f32 %v3155, 1.442695
  %v3624 = vpow.pop %v3623
  %v3625 = vmul.f32 %v3156, 1.442695
  %v3626 = vpow.pop %v3625
  %v3627 = vmul.f32 %v3157, 1.442695
  %v3628 = vpow.pop %v3627
  %v3629 = vmul.f32 %v3158, 1.442695
  %v3630 = vpow.pop %v3629
  %v3631 = vmul.f32 %v3159, 1.442695
  %v3632 = vpow.pop %v3631
  %v3633 = vmul.f32 %v3160, 1.442695
  %v3634 = vpow.pop %v3633
  %v3635 = vmul.f32 %v3161, 1.442695
  %v3636 = vpow.pop %v3635
  %v3637 = vmul.f32 %v3162, 1.442695
  %v3638 = vpow.pop %v3637
  %v3639 = vmul.f32 %v3163, 1.442695
  %v3640 = vpow.pop %v3639
  %v3641 = vmul.f32 %v3164, 1.442695
  %v3642 = vpow.pop %v3641
  %v3643 = vmul.f32 %v3165, 1.442695
  %v3644 = vpow.pop %v3643
  %v3645 = vmul.f32 %v3166, 1.442695
  %v3646 = vpow.pop %v3645
  %v3647 = vmul.f32 %v3167, 1.442695
  %v3648 = vpow.pop %v3647
  %v3649 = vmul.f32 %v3168, 1.442695
  %v3650 = vpow.pop %v3649
  %v3651 = vmul.f32 %v3169, 1.442695
  %v3652 = vpow.pop %v3651
  %v3653 = vmul.f32 %v3170, 1.442695
  %v3654 = vpow.pop %v3653
  %v3655 = vmul.f32 %v3171, 1.442695
  %v3656 = vpow.pop %v3655
  %v3657 = vmul.f32 %v3172, 1.442695
  %v3658 = vpow.pop %v3657
  %v3659 = vmul.f32 %v3173, 1.442695
  %v3660 = vpow.pop %v3659
  %v3661 = vmul.f32 %v3174, 1.442695
  %v3662 = vpow.pop %v3661
  %v3663 = vmul.f32 %v3175, 1.442695
  %v3664 = vpow.pop %v3663
  %v3665 = vmul.f32 %v3176, 1.442695
  %v3666 = vpow.pop %v3665
  %v3667 = vmul.f32 %v3177, 1.442695
  %v3668 = vpow.pop %v3667
  %v3669 = vmul.f32 %v3178, 1.442695
  %v3670 = vpow.pop %v3669
  %v3671 = vmul.f32 %v3179, 1.442695
  %v3672 = vpow.pop %v3671
  %v3673 = vmul.f32 %v3180, 1.442695
  %v3674 = vpow.pop %v3673
  %v3675 = vmul.f32 %v3181, 1.442695
  %v3676 = vpow.pop %v3675
  %v3677 = vmul.f32 %v3182, 1.442695
  %v3678 = vpow.pop %v3677
  %v3679 = vmul.f32 %v3183, 1.442695
  %v3680 = vpow.pop %v3679
  %v3681 = vmul.f32 %v3184, 1.442695
  %v3682 = vpow.pop %v3681
  %v3683 = vmul.f32 %v3185, 1.442695
  %v3684 = vpow.pop %v3683
  %v3685 = vmul.f32 %v3186, 1.442695
  %v3686 = vpow.pop %v3685
  %v3687 = vmul.f32 %v3187, 1.442695
  %v3688 = vpow.pop %v3687
  %v3689 = vmul.f32 %v3188, 1.442695
  %v3690 = vpow.pop %v3689
  %v3691 = vmul.f32 %v3189, 1.442695
  %v3692 = vpow.pop %v3691
  %v3693 = vmul.f32 %v3190, 1.442695
  %v3694 = vpow.pop %v3693
  %v3695 = vmul.f32 %v3191, 1.442695
  %v3696 = vpow.pop %v3695
  %v3697 = vmul.f32 %v3192, 1.442695
  %v3698 = vpow.pop %v3697
  %v3699 = vmul.f32 %v3193, 1.442695
  %v3700 = vpow.pop %v3699
  %v3701 = vmul.f32 %v3194, 1.442695
  %v3702 = vpow.pop %v3701
  %v3703 = vmul.f32 %v3195, 1.442695
  %v3704 = vpow.pop %v3703
  %v3705 = vmul.f32 %v3196, 1.442695
  %v3706 = vpow.pop %v3705
  %v3707 = vmul.f32 %v3197, 1.442695
  %v3708 = vpow.pop %v3707
  %v3709 = vmul.f32 %v3198, 1.442695
  %v3710 = vpow.pop %v3709
  %v3711 = vmul.f32 %v3199, 1.442695
  %v3712 = vpow.pop %v3711
  %v3713 = vmul.f32 %v3200, 1.442695
  %v3714 = vpow.pop %v3713
  %v3715 = vmul.f32 %v3201, 1.442695
  %v3716 = vpow.pop %v3715
  %v3717 = vmul.f32 %v3202, 1.442695
  %v3718 = vpow.pop %v3717
  %v3719 = vmul.f32 %v3203, 1.442695
  %v3720 = vpow.pop %v3719
  %v3721 = vmul.f32 %v3204, 1.442695
  %v3722 = vpow.pop %v3721
  %v3723 = vmul.f32 %v3205, 1.442695
  %v3724 = vpow.pop %v3723
  %v3725 = vmul.f32 %v3206, 1.442695
  %v3726 = vpow.pop %v3725
  %v3727 = vmul.f32 %v3207, 1.442695
  %v3728 = vpow.pop %v3727
  %v3729 = vmul.f32 %v3208, 1.442695
  %v3730 = vpow.pop %v3729
  %v3731 = vmul.f32 %v3209, 1.442695
  %v3732 = vpow.pop %v3731
  %v3733 = vmul.f32 %v3210, 1.442695
  %v3734 = vpow.pop %v3733
  %v3735 = vmul.f32 %v3211, 1.442695
  %v3736 = vpow.pop %v3735
  %v3737 = vmul.f32 %v3212, 1.442695
  %v3738 = vpow.pop %v3737
  %v3739 = vmul.f32 %v3213, 1.442695
  %v3740 = vpow.pop %v3739
  %v3741 = vmul.f32 %v3214, 1.442695
  %v3742 = vpow.pop %v3741
  %v3743 = vmul.f32 %v3215, 1.442695
  %v3744 = vpow.pop %v3743
  %v3745 = vmul.f32 %v3216, 1.442695
  %v3746 = vpow.pop %v3745
  %v3747 = vmul.f32 %v3217, 1.442695
  %v3748 = vpow.pop %v3747
  %v3749 = vmul.f32 %v3218, 1.442695
  %v3750 = vpow.pop %v3749
  %v3751 = vmul.f32 %v3219, 1.442695
  %v3752 = vpow.pop %v3751
  %v3753 = vmul.f32 %v3220, 1.442695
  %v3754 = vpow.pop %v3753
  %v3755 = vmul.f32 %v3221, 1.442695
  %v3756 = vpow.pop %v3755
  %v3757 = vmul.f32 %v3222, 1.442695
  %v3758 = vpow.pop %v3757
  %v3759 = vmul.f32 %v3223, 1.442695
  %v3760 = vpow.pop %v3759
  %v3761 = vmul.f32 %v3224, 1.442695
  %v3762 = vpow.pop %v3761
  %v3763 = vmul.f32 %v3225, 1.442695
  %v3764 = vpow.pop %v3763
  %v3765 = vmul.f32 %v3226, 1.442695
  %v3766 = vpow.pop %v3765
  %v3767 = vmul.f32 %v3227, 1.442695
  %v3768 = vpow.pop %v3767
  %v3769 = vmul.f32 %v3228, 1.442695
  %v3770 = vpow.pop %v3769
  %v3771 = vmul.f32 %v3229, 1.442695
  %v3772 = vpow.pop %v3771
  %v3773 = vmul.f32 %v3230, 1.442695
  %v3774 = vpow.pop %v3773
  %v3775 = vmul.f32 %v3231, 1.442695
  %v3776 = vpow.pop %v3775
  %v3777 = vmul.f32 %v3232, 1.442695
  %v3778 = vpow.pop %v3777
  %v3779 = vmul.f32 %v3233, 1.442695
  %v3780 = vpow.pop %v3779
  %v3781 = vmul.f32 %v3234, 1.442695
  %v3782 = vpow.pop %v3781
  %v3783 = vmul.f32 %v3235, 1.442695
  %v3784 = vpow.pop %v3783
  %v3785 = vmul.f32 %v3236, 1.442695
  %v3786 = vpow.pop %v3785
  %v3787 = vmul.f32 %v3237, 1.442695
  %v3788 = vpow.pop %v3787
  %v3789 = vmul.f32 %v3238, 1.442695
  %v3790 = vpow.pop %v3789
  %v3791 = vmul.f32 %v3239, 1.442695
  %v3792 = vpow.pop %v3791
  %v3793 = vmul.f32 %v3240, 1.442695
  %v3794 = vpow.pop %v3793
  %v3795 = vmul.f32 %v3241, 1.442695
  %v3796 = vpow.pop %v3795
  %v3797 = vmul.f32 %v3242, 1.442695
  %v3798 = vpow.pop %v3797
  %v3799 = vmul.f32 %v3243, 1.442695
  %v3800 = vpow.pop %v3799
  %v3801 = vmul.f32 %v3244, 1.442695
  %v3802 = vpow.pop %v3801
  %v3803 = vmul.f32 %v3245, 1.442695
  %v3804 = vpow.pop %v3803
  %v3805 = vmul.f32 %v3246, 1.442695
  %v3806 = vpow.pop %v3805
  %v3807 = vmul.f32 %v3247, 1.442695
  %v3808 = vpow.pop %v3807
  %v3809 = vmul.f32 %v3248, 1.442695
  %v3810 = vpow.pop %v3809
  %v3811 = vmul.f32 %v3249, 1.442695
  %v3812 = vpow.pop %v3811
  %v3813 = vmul.f32 %v3250, 1.442695
  %v3814 = vpow.pop %v3813
  %v3815 = vmul.f32 %v3251, 1.442695
  %v3816 = vpow.pop %v3815
  %v3817 = vmul.f32 %v3252, 1.442695
  %v3818 = vpow.pop %v3817
  %v3819 = vmul.f32 %v3253, 1.442695
  %v3820 = vpow.pop %v3819
  %v3821 = vmul.f32 %v3254, 1.442695
  %v3822 = vpow.pop %v3821
  %v3823 = vmul.f32 %v3255, 1.442695
  %v3824 = vpow.pop %v3823
  %v3825 = vmul.f32 %v3256, 1.442695
  %v3826 = vpow.pop %v3825
  %v3827 = vmul.f32 %v3257, 1.442695
  %v3828 = vpow.pop %v3827
  %v3829 = vmul.f32 %v3258, 1.442695
  %v3830 = vpow.pop %v3829
  %v3831 = vmul.f32 %v3259, 1.442695
  %v3832 = vpow.pop %v3831
  %v3833 = vmul.f32 %v3260, 1.442695
  %v3834 = vpow.pop %v3833
  %v3835 = vmul.f32 %v3261, 1.442695
  %v3836 = vpow.pop %v3835
  %v3837 = vmul.f32 %v3262, 1.442695
  %v3838 = vpow.pop %v3837
  %v3839 = vadd.f32 %v3264, 1.0
  %v3840 = vadd.f32 %v3266, 1.0
  %v3841 = vadd.f32 %v3268, 1.0
  %v3842 = vadd.f32 %v3270, 1.0
  %v3843 = vadd.f32 %v3272, 1.0
  %v3844 = vadd.f32 %v3274, 1.0
  %v3845 = vadd.f32 %v3276, 1.0
  %v3846 = vadd.f32 %v3278, 1.0
  %v3847 = vadd.f32 %v3280, 1.0
  %v3848 = vadd.f32 %v3282, 1.0
  %v3849 = vadd.f32 %v3284, 1.0
  %v3850 = vadd.f32 %v3286, 1.0
  %v3851 = vadd.f32 %v3288, 1.0
  %v3852 = vadd.f32 %v3290, 1.0
  %v3853 = vadd.f32 %v3292, 1.0
  %v3854 = vadd.f32 %v3294, 1.0
  %v3855 = vadd.f32 %v3296, 1.0
  %v3856 = vadd.f32 %v3298, 1.0
  %v3857 = vadd.f32 %v3300, 1.0
  %v3858 = vadd.f32 %v3302, 1.0
  %v3859 = vadd.f32 %v3304, 1.0
  %v3860 = vadd.f32 %v3306, 1.0
  %v3861 = vadd.f32 %v3308, 1.0
  %v3862 = vadd.f32 %v3310, 1.0
  %v3863 = vadd.f32 %v3312, 1.0
  %v3864 = vadd.f32 %v3314, 1.0
  %v3865 = vadd.f32 %v3316, 1.0
  %v3866 = vadd.f32 %v3318, 1.0
  %v3867 = vadd.f32 %v3320, 1.0
  %v3868 = vadd.f32 %v3322, 1.0
  %v3869 = vadd.f32 %v3324, 1.0
  %v3870 = vadd.f32 %v3326, 1.0
  %v3871 = vadd.f32 %v3328, 1.0
  %v3872 = vadd.f32 %v3330, 1.0
  %v3873 = vadd.f32 %v3332, 1.0
  %v3874 = vadd.f32 %v3334, 1.0
  %v3875 = vadd.f32 %v3336, 1.0
  %v3876 = vadd.f32 %v3338, 1.0
  %v3877 = vadd.f32 %v3340, 1.0
  %v3878 = vadd.f32 %v3342, 1.0
  %v3879 = vadd.f32 %v3344, 1.0
  %v3880 = vadd.f32 %v3346, 1.0
  %v3881 = vadd.f32 %v3348, 1.0
  %v3882 = vadd.f32 %v3350, 1.0
  %v3883 = vadd.f32 %v3352, 1.0
  %v3884 = vadd.f32 %v3354, 1.0
  %v3885 = vadd.f32 %v3356, 1.0
  %v3886 = vadd.f32 %v3358, 1.0
  %v3887 = vadd.f32 %v3360, 1.0
  %v3888 = vadd.f32 %v3362, 1.0
  %v3889 = vadd.f32 %v3364, 1.0
  %v3890 = vadd.f32 %v3366, 1.0
  %v3891 = vadd.f32 %v3368, 1.0
  %v3892 = vadd.f32 %v3370, 1.0
  %v3893 = vadd.f32 %v3372, 1.0
  %v3894 = vadd.f32 %v3374, 1.0
  %v3895 = vadd.f32 %v3376, 1.0
  %v3896 = vadd.f32 %v3378, 1.0
  %v3897 = vadd.f32 %v3380, 1.0
  %v3898 = vadd.f32 %v3382, 1.0
  %v3899 = vadd.f32 %v3384, 1.0
  %v3900 = vadd.f32 %v3386, 1.0
  %v3901 = vadd.f32 %v3388, 1.0
  %v3902 = vadd.f32 %v3390, 1.0
  %v3903 = vadd.f32 %v3392, 1.0
  %v3904 = vadd.f32 %v3394, 1.0
  %v3905 = vadd.f32 %v3396, 1.0
  %v3906 = vadd.f32 %v3398, 1.0
  %v3907 = vadd.f32 %v3400, 1.0
  %v3908 = vadd.f32 %v3402, 1.0
  %v3909 = vadd.f32 %v3404, 1.0
  %v3910 = vadd.f32 %v3406, 1.0
  %v3911 = vadd.f32 %v3408, 1.0
  %v3912 = vadd.f32 %v3410, 1.0
  %v3913 = vadd.f32 %v3412, 1.0
  %v3914 = vadd.f32 %v3414, 1.0
  %v3915 = vadd.f32 %v3416, 1.0
  %v3916 = vadd.f32 %v3418, 1.0
  %v3917 = vadd.f32 %v3420, 1.0
  %v3918 = vadd.f32 %v3422, 1.0
  %v3919 = vadd.f32 %v3424, 1.0
  %v3920 = vadd.f32 %v3426, 1.0
  %v3921 = vadd.f32 %v3428, 1.0
  %v3922 = vadd.f32 %v3430, 1.0
  %v3923 = vadd.f32 %v3432, 1.0
  %v3924 = vadd.f32 %v3434, 1.0
  %v3925 = vadd.f32 %v3436, 1.0
  %v3926 = vadd.f32 %v3438, 1.0
  %v3927 = vadd.f32 %v3440, 1.0
  %v3928 = vadd.f32 %v3442, 1.0
  %v3929 = vadd.f32 %v3444, 1.0
  %v3930 = vadd.f32 %v3446, 1.0
  %v3931 = vadd.f32 %v3448, 1.0
  %v3932 = vadd.f32 %v3450, 1.0
  %v3933 = vadd.f32 %v3452, 1.0
  %v3934 = vadd.f32 %v3454, 1.0
  %v3935 = vadd.f32 %v3456, 1.0
  %v3936 = vadd.f32 %v3458, 1.0
  %v3937 = vadd.f32 %v3460, 1.0
  %v3938 = vadd.f32 %v3462, 1.0
  %v3939 = vadd.f32 %v3464, 1.0
  %v3940 = vadd.f32 %v3466, 1.0
  %v3941 = vadd.f32 %v3468, 1.0
  %v3942 = vadd.f32 %v3470, 1.0
  %v3943 = vadd.f32 %v3472, 1.0
  %v3944 = vadd.f32 %v3474, 1.0
  %v3945 = vadd.f32 %v3476, 1.0
  %v3946 = vadd.f32 %v3478, 1.0
  %v3947 = vadd.f32 %v3480, 1.0
  %v3948 = vadd.f32 %v3482, 1.0
  %v3949 = vadd.f32 %v3484, 1.0
  %v3950 = vadd.f32 %v3486, 1.0
  %v3951 = vadd.f32 %v3488, 1.0
  %v3952 = vadd.f32 %v3490, 1.0
  %v3953 = vadd.f32 %v3492, 1.0
  %v3954 = vadd.f32 %v3494, 1.0
  %v3955 = vadd.f32 %v3496, 1.0
  %v3956 = vadd.f32 %v3498, 1.0
  %v3957 = vadd.f32 %v3500, 1.0
  %v3958 = vadd.f32 %v3502, 1.0
  %v3959 = vadd.f32 %v3504, 1.0
  %v3960 = vadd.f32 %v3506, 1.0
  %v3961 = vadd.f32 %v3508, 1.0
  %v3962 = vadd.f32 %v3510, 1.0
  %v3963 = vadd.f32 %v3512, 1.0
  %v3964 = vadd.f32 %v3514, 1.0
  %v3965 = vadd.f32 %v3516, 1.0
  %v3966 = vadd.f32 %v3518, 1.0
  %v3967 = vadd.f32 %v3520, 1.0
  %v3968 = vadd.f32 %v3522, 1.0
  %v3969 = vadd.f32 %v3524, 1.0
  %v3970 = vadd.f32 %v3526, 1.0
  %v3971 = vadd.f32 %v3528, 1.0
  %v3972 = vadd.f32 %v3530, 1.0
  %v3973 = vadd.f32 %v3532, 1.0
  %v3974 = vadd.f32 %v3534, 1.0
  %v3975 = vadd.f32 %v3536, 1.0
  %v3976 = vadd.f32 %v3538, 1.0
  %v3977 = vadd.f32 %v3540, 1.0
  %v3978 = vadd.f32 %v3542, 1.0
  %v3979 = vadd.f32 %v3544, 1.0
  %v3980 = vadd.f32 %v3546, 1.0
  %v3981 = vadd.f32 %v3548, 1.0
  %v3982 = vadd.f32 %v3550, 1.0
  %v3983 = vadd.f32 %v3552, 1.0
  %v3984 = vadd.f32 %v3554, 1.0
  %v3985 = vadd.f32 %v3556, 1.0
  %v3986 = vadd.f32 %v3558, 1.0
  %v3987 = vadd.f32 %v3560, 1.0
  %v3988 = vadd.f32 %v3562, 1.0
  %v3989 = vadd.f32 %v3564, 1.0
  %v3990 = vadd.f32 %v3566, 1.0
  %v3991 = vadd.f32 %v3568, 1.0
  %v3992 = vadd.f32 %v3570, 1.0
  %v3993 = vadd.f32 %v3572, 1.0
  %v3994 = vadd.f32 %v3574, 1.0
  %v3995 = vadd.f32 %v3576, 1.0
  %v3996 = vadd.f32 %v3578, 1.0
  %v3997 = vadd.f32 %v3580, 1.0
  %v3998 = vadd.f32 %v3582, 1.0
  %v3999 = vadd.f32 %v3584, 1.0
  %v4000 = vadd.f32 %v3586, 1.0
  %v4001 = vadd.f32 %v3588, 1.0
  %v4002 = vadd.f32 %v3590, 1.0
  %v4003 = vadd.f32 %v3592, 1.0
  %v4004 = vadd.f32 %v3594, 1.0
  %v4005 = vadd.f32 %v3596, 1.0
  %v4006 = vadd.f32 %v3598, 1.0
  %v4007 = vadd.f32 %v3600, 1.0
  %v4008 = vadd.f32 %v3602, 1.0
  %v4009 = vadd.f32 %v3604, 1.0
  %v4010 = vadd.f32 %v3606, 1.0
  %v4011 = vadd.f32 %v3608, 1.0
  %v4012 = vadd.f32 %v3610, 1.0
  %v4013 = vadd.f32 %v3612, 1.0
  %v4014 = vadd.f32 %v3614, 1.0
  %v4015 = vadd.f32 %v3616, 1.0
  %v4016 = vadd.f32 %v3618, 1.0
  %v4017 = vadd.f32 %v3620, 1.0
  %v4018 = vadd.f32 %v3622, 1.0
  %v4019 = vadd.f32 %v3624, 1.0
  %v4020 = vadd.f32 %v3626, 1.0
  %v4021 = vadd.f32 %v3628, 1.0
  %v4022 = vadd.f32 %v3630, 1.0
  %v4023 = vadd.f32 %v3632, 1.0
  %v4024 = vadd.f32 %v3634, 1.0
  %v4025 = vadd.f32 %v3636, 1.0
  %v4026 = vadd.f32 %v3638, 1.0
  %v4027 = vadd.f32 %v3640, 1.0
  %v4028 = vadd.f32 %v3642, 1.0
  %v4029 = vadd.f32 %v3644, 1.0
  %v4030 = vadd.f32 %v3646, 1.0
  %v4031 = vadd.f32 %v3648, 1.0
  %v4032 = vadd.f32 %v3650, 1.0
  %v4033 = vadd.f32 %v3652, 1.0
  %v4034 = vadd.f32 %v3654, 1.0
  %v4035 = vadd.f32 %v3656, 1.0
  %v4036 = vadd.f32 %v3658, 1.0
  %v4037 = vadd.f32 %v3660, 1.0
  %v4038 = vadd.f32 %v3662, 1.0
  %v4039 = vadd.f32 %v3664, 1.0
  %v4040 = vadd.f32 %v3666, 1.0
  %v4041 = vadd.f32 %v3668, 1.0
  %v4042 = vadd.f32 %v3670, 1.0
  %v4043 = vadd.f32 %v3672, 1.0
  %v4044 = vadd.f32 %v3674, 1.0
  %v4045 = vadd.f32 %v3676, 1.0
  %v4046 = vadd.f32 %v3678, 1.0
  %v4047 = vadd.f32 %v3680, 1.0
  %v4048 = vadd.f32 %v3682, 1.0
  %v4049 = vadd.f32 %v3684, 1.0
  %v4050 = vadd.f32 %v3686, 1.0
  %v4051 = vadd.f32 %v3688, 1.0
  %v4052 = vadd.f32 %v3690, 1.0
  %v4053 = vadd.f32 %v3692, 1.0
  %v4054 = vadd.f32 %v3694, 1.0
  %v4055 = vadd.f32 %v3696, 1.0
  %v4056 = vadd.f32 %v3698, 1.0
  %v4057 = vadd.f32 %v3700, 1.0
  %v4058 = vadd.f32 %v3702, 1.0
  %v4059 = vadd.f32 %v3704, 1.0
  %v4060 = vadd.f32 %v3706, 1.0
  %v4061 = vadd.f32 %v3708, 1.0
  %v4062 = vadd.f32 %v3710, 1.0
  %v4063 = vadd.f32 %v3712, 1.0
  %v4064 = vadd.f32 %v3714, 1.0
  %v4065 = vadd.f32 %v3716, 1.0
  %v4066 = vadd.f32 %v3718, 1.0
  %v4067 = vadd.f32 %v3720, 1.0
  %v4068 = vadd.f32 %v3722, 1.0
  %v4069 = vadd.f32 %v3724, 1.0
  %v4070 = vadd.f32 %v3726, 1.0
  %v4071 = vadd.f32 %v3728, 1.0
  %v4072 = vadd.f32 %v3730, 1.0
  %v4073 = vadd.f32 %v3732, 1.0
  %v4074 = vadd.f32 %v3734, 1.0
  %v4075 = vadd.f32 %v3736, 1.0
  %v4076 = vadd.f32 %v3738, 1.0
  %v4077 = vadd.f32 %v3740, 1.0
  %v4078 = vadd.f32 %v3742, 1.0
  %v4079 = vadd.f32 %v3744, 1.0
  %v4080 = vadd.f32 %v3746, 1.0
  %v4081 = vadd.f32 %v3748, 1.0
  %v4082 = vadd.f32 %v3750, 1.0
  %v4083 = vadd.f32 %v3752, 1.0
  %v4084 = vadd.f32 %v3754, 1.0
  %v4085 = vadd.f32 %v3756, 1.0
  %v4086 = vadd.f32 %v3758, 1.0
  %v4087 = vadd.f32 %v3760, 1.0
  %v4088 = vadd.f32 %v3762, 1.0
  %v4089 = vadd.f32 %v3764, 1.0
  %v4090 = vadd.f32 %v3766, 1.0
  %v4091 = vadd.f32 %v3768, 1.0
  %v4092 = vadd.f32 %v3770, 1.0
  %v4093 = vadd.f32 %v3772, 1.0
  %v4094 = vadd.f32 %v3774, 1.0
  %v4095 = vadd.f32 %v3776, 1.0
  %v4096 = vadd.f32 %v3778, 1.0
  %v4097 = vadd.f32 %v3780, 1.0
  %v4098 = vadd.f32 %v3782, 1.0
  %v4099 = vadd.f32 %v3784, 1.0
  %v4100 = vadd.f32 %v3786, 1.0
  %v4101 = vadd.f32 %v3788, 1.0
  %v4102 = vadd.f32 %v3790, 1.0
  %v4103 = vadd.f32 %v3792, 1.0
  %v4104 = vadd.f32 %v3794, 1.0
  %v4105 = vadd.f32 %v3796, 1.0
  %v4106 = vadd.f32 %v3798, 1.0
  %v4107 = vadd.f32 %v3800, 1.0
  %v4108 = vadd.f32 %v3802, 1.0
  %v4109 = vadd.f32 %v3804, 1.0
  %v4110 = vadd.f32 %v3806, 1.0
  %v4111 = vadd.f32 %v3808, 1.0
  %v4112 = vadd.f32 %v3810, 1.0
  %v4113 = vadd.f32 %v3812, 1.0
  %v4114 = vadd.f32 %v3814, 1.0
  %v4115 = vadd.f32 %v3816, 1.0
  %v4116 = vadd.f32 %v3818, 1.0
  %v4117 = vadd.f32 %v3820, 1.0
  %v4118 = vadd.f32 %v3822, 1.0
  %v4119 = vadd.f32 %v3824, 1.0
  %v4120 = vadd.f32 %v3826, 1.0
  %v4121 = vadd.f32 %v3828, 1.0
  %v4122 = vadd.f32 %v3830, 1.0
  %v4123 = vadd.f32 %v3832, 1.0
  %v4124 = vadd.f32 %v3834, 1.0
  %v4125 = vadd.f32 %v3836, 1.0
  %v4126 = vadd.f32 %v3838, 1.0
  %v4127 = vrcp.pop %v3839
  %v4128 = vmul.f32 1.0, %v4127
  %v4129 = vrcp.pop %v3840
  %v4130 = vmul.f32 1.0, %v4129
  %v4131 = vrcp.pop %v3841
  %v4132 = vmul.f32 1.0, %v4131
  %v4133 = vrcp.pop %v3842
  %v4134 = vmul.f32 1.0, %v4133
  %v4135 = vrcp.pop %v3843
  %v4136 = vmul.f32 1.0, %v4135
  %v4137 = vrcp.pop %v3844
  %v4138 = vmul.f32 1.0, %v4137
  %v4139 = vrcp.pop %v3845
  %v4140 = vmul.f32 1.0, %v4139
  %v4141 = vrcp.pop %v3846
  %v4142 = vmul.f32 1.0, %v4141
  %v4143 = vrcp.pop %v3847
  %v4144 = vmul.f32 1.0, %v4143
  %v4145 = vrcp.pop %v3848
  %v4146 = vmul.f32 1.0, %v4145
  %v4147 = vrcp.pop %v3849
  %v4148 = vmul.f32 1.0, %v4147
  %v4149 = vrcp.pop %v3850
  %v4150 = vmul.f32 1.0, %v4149
  %v4151 = vrcp.pop %v3851
  %v4152 = vmul.f32 1.0, %v4151
  %v4153 = vrcp.pop %v3852
  %v4154 = vmul.f32 1.0, %v4153
  %v4155 = vrcp.pop %v3853
  %v4156 = vmul.f32 1.0, %v4155
  %v4157 = vrcp.pop %v3854
  %v4158 = vmul.f32 1.0, %v4157
  %v4159 = vrcp.pop %v3855
  %v4160 = vmul.f32 1.0, %v4159
  %v4161 = vrcp.pop %v3856
  %v4162 = vmul.f32 1.0, %v4161
  %v4163 = vrcp.pop %v3857
  %v4164 = vmul.f32 1.0, %v4163
  %v4165 = vrcp.pop %v3858
  %v4166 = vmul.f32 1.0, %v4165
  %v4167 = vrcp.pop %v3859
  %v4168 = vmul.f32 1.0, %v4167
  %v4169 = vrcp.pop %v3860
  %v4170 = vmul.f32 1.0, %v4169
  %v4171 = vrcp.pop %v3861
  %v4172 = vmul.f32 1.0, %v4171
  %v4173 = vrcp.pop %v3862
  %v4174 = vmul.f32 1.0, %v4173
  %v4175 = vrcp.pop %v3863
  %v4176 = vmul.f32 1.0, %v4175
  %v4177 = vrcp.pop %v3864
  %v4178 = vmul.f32 1.0, %v4177
  %v4179 = vrcp.pop %v3865
  %v4180 = vmul.f32 1.0, %v4179
  %v4181 = vrcp.pop %v3866
  %v4182 = vmul.f32 1.0, %v4181
  %v4183 = vrcp.pop %v3867
  %v4184 = vmul.f32 1.0, %v4183
  %v4185 = vrcp.pop %v3868
  %v4186 = vmul.f32 1.0, %v4185
  %v4187 = vrcp.pop %v3869
  %v4188 = vmul.f32 1.0, %v4187
  %v4189 = vrcp.pop %v3870
  %v4190 = vmul.f32 1.0, %v4189
  %v4191 = vrcp.pop %v3871
  %v4192 = vmul.f32 1.0, %v4191
  %v4193 = vrcp.pop %v3872
  %v4194 = vmul.f32 1.0, %v4193
  %v4195 = vrcp.pop %v3873
  %v4196 = vmul.f32 1.0, %v4195
  %v4197 = vrcp.pop %v3874
  %v4198 = vmul.f32 1.0, %v4197
  %v4199 = vrcp.pop %v3875
  %v4200 = vmul.f32 1.0, %v4199
  %v4201 = vrcp.pop %v3876
  %v4202 = vmul.f32 1.0, %v4201
  %v4203 = vrcp.pop %v3877
  %v4204 = vmul.f32 1.0, %v4203
  %v4205 = vrcp.pop %v3878
  %v4206 = vmul.f32 1.0, %v4205
  %v4207 = vrcp.pop %v3879
  %v4208 = vmul.f32 1.0, %v4207
  %v4209 = vrcp.pop %v3880
  %v4210 = vmul.f32 1.0, %v4209
  %v4211 = vrcp.pop %v3881
  %v4212 = vmul.f32 1.0, %v4211
  %v4213 = vrcp.pop %v3882
  %v4214 = vmul.f32 1.0, %v4213
  %v4215 = vrcp.pop %v3883
  %v4216 = vmul.f32 1.0, %v4215
  %v4217 = vrcp.pop %v3884
  %v4218 = vmul.f32 1.0, %v4217
  %v4219 = vrcp.pop %v3885
  %v4220 = vmul.f32 1.0, %v4219
  %v4221 = vrcp.pop %v3886
  %v4222 = vmul.f32 1.0, %v4221
  %v4223 = vrcp.pop %v3887
  %v4224 = vmul.f32 1.0, %v4223
  %v4225 = vrcp.pop %v3888
  %v4226 = vmul.f32 1.0, %v4225
  %v4227 = vrcp.pop %v3889
  %v4228 = vmul.f32 1.0, %v4227
  %v4229 = vrcp.pop %v3890
  %v4230 = vmul.f32 1.0, %v4229
  %v4231 = vrcp.pop %v3891
  %v4232 = vmul.f32 1.0, %v4231
  %v4233 = vrcp.pop %v3892
  %v4234 = vmul.f32 1.0, %v4233
  %v4235 = vrcp.pop %v3893
  %v4236 = vmul.f32 1.0, %v4235
  %v4237 = vrcp.pop %v3894
  %v4238 = vmul.f32 1.0, %v4237
  %v4239 = vrcp.pop %v3895
  %v4240 = vmul.f32 1.0, %v4239
  %v4241 = vrcp.pop %v3896
  %v4242 = vmul.f32 1.0, %v4241
  %v4243 = vrcp.pop %v3897
  %v4244 = vmul.f32 1.0, %v4243
  %v4245 = vrcp.pop %v3898
  %v4246 = vmul.f32 1.0, %v4245
  %v4247 = vrcp.pop %v3899
  %v4248 = vmul.f32 1.0, %v4247
  %v4249 = vrcp.pop %v3900
  %v4250 = vmul.f32 1.0, %v4249
  %v4251 = vrcp.pop %v3901
  %v4252 = vmul.f32 1.0, %v4251
  %v4253 = vrcp.pop %v3902
  %v4254 = vmul.f32 1.0, %v4253
  %v4255 = vrcp.pop %v3903
  %v4256 = vmul.f32 1.0, %v4255
  %v4257 = vrcp.pop %v3904
  %v4258 = vmul.f32 1.0, %v4257
  %v4259 = vrcp.pop %v3905
  %v4260 = vmul.f32 1.0, %v4259
  %v4261 = vrcp.pop %v3906
  %v4262 = vmul.f32 1.0, %v4261
  %v4263 = vrcp.pop %v3907
  %v4264 = vmul.f32 1.0, %v4263
  %v4265 = vrcp.pop %v3908
  %v4266 = vmul.f32 1.0, %v4265
  %v4267 = vrcp.pop %v3909
  %v4268 = vmul.f32 1.0, %v4267
  %v4269 = vrcp.pop %v3910
  %v4270 = vmul.f32 1.0, %v4269
  %v4271 = vrcp.pop %v3911
  %v4272 = vmul.f32 1.0, %v4271
  %v4273 = vrcp.pop %v3912
  %v4274 = vmul.f32 1.0, %v4273
  %v4275 = vrcp.pop %v3913
  %v4276 = vmul.f32 1.0, %v4275
  %v4277 = vrcp.pop %v3914
  %v4278 = vmul.f32 1.0, %v4277
  %v4279 = vrcp.pop %v3915
  %v4280 = vmul.f32 1.0, %v4279
  %v4281 = vrcp.pop %v3916
  %v4282 = vmul.f32 1.0, %v4281
  %v4283 = vrcp.pop %v3917
  %v4284 = vmul.f32 1.0, %v4283
  %v4285 = vrcp.pop %v3918
  %v4286 = vmul.f32 1.0, %v4285
  %v4287 = vrcp.pop %v3919
  %v4288 = vmul.f32 1.0, %v4287
  %v4289 = vrcp.pop %v3920
  %v4290 = vmul.f32 1.0, %v4289
  %v4291 = vrcp.pop %v3921
  %v4292 = vmul.f32 1.0, %v4291
  %v4293 = vrcp.pop %v3922
  %v4294 = vmul.f32 1.0, %v4293
  %v4295 = vrcp.pop %v3923
  %v4296 = vmul.f32 1.0, %v4295
  %v4297 = vrcp.pop %v3924
  %v4298 = vmul.f32 1.0, %v4297
  %v4299 = vrcp.pop %v3925
  %v4300 = vmul.f32 1.0, %v4299
  %v4301 = vrcp.pop %v3926
  %v4302 = vmul.f32 1.0, %v4301
  %v4303 = vrcp.pop %v3927
  %v4304 = vmul.f32 1.0, %v4303
  %v4305 = vrcp.pop %v3928
  %v4306 = vmul.f32 1.0, %v4305
  %v4307 = vrcp.pop %v3929
  %v4308 = vmul.f32 1.0, %v4307
  %v4309 = vrcp.pop %v3930
  %v4310 = vmul.f32 1.0, %v4309
  %v4311 = vrcp.pop %v3931
  %v4312 = vmul.f32 1.0, %v4311
  %v4313 = vrcp.pop %v3932
  %v4314 = vmul.f32 1.0, %v4313
  %v4315 = vrcp.pop %v3933
  %v4316 = vmul.f32 1.0, %v4315
  %v4317 = vrcp.pop %v3934
  %v4318 = vmul.f32 1.0, %v4317
  %v4319 = vrcp.pop %v3935
  %v4320 = vmul.f32 1.0, %v4319
  %v4321 = vrcp.pop %v3936
  %v4322 = vmul.f32 1.0, %v4321
  %v4323 = vrcp.pop %v3937
  %v4324 = vmul.f32 1.0, %v4323
  %v4325 = vrcp.pop %v3938
  %v4326 = vmul.f32 1.0, %v4325
  %v4327 = vrcp.pop %v3939
  %v4328 = vmul.f32 1.0, %v4327
  %v4329 = vrcp.pop %v3940
  %v4330 = vmul.f32 1.0, %v4329
  %v4331 = vrcp.pop %v3941
  %v4332 = vmul.f32 1.0, %v4331
  %v4333 = vrcp.pop %v3942
  %v4334 = vmul.f32 1.0, %v4333
  %v4335 = vrcp.pop %v3943
  %v4336 = vmul.f32 1.0, %v4335
  %v4337 = vrcp.pop %v3944
  %v4338 = vmul.f32 1.0, %v4337
  %v4339 = vrcp.pop %v3945
  %v4340 = vmul.f32 1.0, %v4339
  %v4341 = vrcp.pop %v3946
  %v4342 = vmul.f32 1.0, %v4341
  %v4343 = vrcp.pop %v3947
  %v4344 = vmul.f32 1.0, %v4343
  %v4345 = vrcp.pop %v3948
  %v4346 = vmul.f32 1.0, %v4345
  %v4347 = vrcp.pop %v3949
  %v4348 = vmul.f32 1.0, %v4347
  %v4349 = vrcp.pop %v3950
  %v4350 = vmul.f32 1.0, %v4349
  %v4351 = vrcp.pop %v3951
  %v4352 = vmul.f32 1.0, %v4351
  %v4353 = vrcp.pop %v3952
  %v4354 = vmul.f32 1.0, %v4353
  %v4355 = vrcp.pop %v3953
  %v4356 = vmul.f32 1.0, %v4355
  %v4357 = vrcp.pop %v3954
  %v4358 = vmul.f32 1.0, %v4357
  %v4359 = vrcp.pop %v3955
  %v4360 = vmul.f32 1.0, %v4359
  %v4361 = vrcp.pop %v3956
  %v4362 = vmul.f32 1.0, %v4361
  %v4363 = vrcp.pop %v3957
  %v4364 = vmul.f32 1.0, %v4363
  %v4365 = vrcp.pop %v3958
  %v4366 = vmul.f32 1.0, %v4365
  %v4367 = vrcp.pop %v3959
  %v4368 = vmul.f32 1.0, %v4367
  %v4369 = vrcp.pop %v3960
  %v4370 = vmul.f32 1.0, %v4369
  %v4371 = vrcp.pop %v3961
  %v4372 = vmul.f32 1.0, %v4371
  %v4373 = vrcp.pop %v3962
  %v4374 = vmul.f32 1.0, %v4373
  %v4375 = vrcp.pop %v3963
  %v4376 = vmul.f32 1.0, %v4375
  %v4377 = vrcp.pop %v3964
  %v4378 = vmul.f32 1.0, %v4377
  %v4379 = vrcp.pop %v3965
  %v4380 = vmul.f32 1.0, %v4379
  %v4381 = vrcp.pop %v3966
  %v4382 = vmul.f32 1.0, %v4381
  %v4383 = vrcp.pop %v3967
  %v4384 = vmul.f32 1.0, %v4383
  %v4385 = vrcp.pop %v3968
  %v4386 = vmul.f32 1.0, %v4385
  %v4387 = vrcp.pop %v3969
  %v4388 = vmul.f32 1.0, %v4387
  %v4389 = vrcp.pop %v3970
  %v4390 = vmul.f32 1.0, %v4389
  %v4391 = vrcp.pop %v3971
  %v4392 = vmul.f32 1.0, %v4391
  %v4393 = vrcp.pop %v3972
  %v4394 = vmul.f32 1.0, %v4393
  %v4395 = vrcp.pop %v3973
  %v4396 = vmul.f32 1.0, %v4395
  %v4397 = vrcp.pop %v3974
  %v4398 = vmul.f32 1.0, %v4397
  %v4399 = vrcp.pop %v3975
  %v4400 = vmul.f32 1.0, %v4399
  %v4401 = vrcp.pop %v3976
  %v4402 = vmul.f32 1.0, %v4401
  %v4403 = vrcp.pop %v3977
  %v4404 = vmul.f32 1.0, %v4403
  %v4405 = vrcp.pop %v3978
  %v4406 = vmul.f32 1.0, %v4405
  %v4407 = vrcp.pop %v3979
  %v4408 = vmul.f32 1.0, %v4407
  %v4409 = vrcp.pop %v3980
  %v4410 = vmul.f32 1.0, %v4409
  %v4411 = vrcp.pop %v3981
  %v4412 = vmul.f32 1.0, %v4411
  %v4413 = vrcp.pop %v3982
  %v4414 = vmul.f32 1.0, %v4413
  %v4415 = vrcp.pop %v3983
  %v4416 = vmul.f32 1.0, %v4415
  %v4417 = vrcp.pop %v3984
  %v4418 = vmul.f32 1.0, %v4417
  %v4419 = vrcp.pop %v3985
  %v4420 = vmul.f32 1.0, %v4419
  %v4421 = vrcp.pop %v3986
  %v4422 = vmul.f32 1.0, %v4421
  %v4423 = vrcp.pop %v3987
  %v4424 = vmul.f32 1.0, %v4423
  %v4425 = vrcp.pop %v3988
  %v4426 = vmul.f32 1.0, %v4425
  %v4427 = vrcp.pop %v3989
  %v4428 = vmul.f32 1.0, %v4427
  %v4429 = vrcp.pop %v3990
  %v4430 = vmul.f32 1.0, %v4429
  %v4431 = vrcp.pop %v3991
  %v4432 = vmul.f32 1.0, %v4431
  %v4433 = vrcp.pop %v3992
  %v4434 = vmul.f32 1.0, %v4433
  %v4435 = vrcp.pop %v3993
  %v4436 = vmul.f32 1.0, %v4435
  %v4437 = vrcp.pop %v3994
  %v4438 = vmul.f32 1.0, %v4437
  %v4439 = vrcp.pop %v3995
  %v4440 = vmul.f32 1.0, %v4439
  %v4441 = vrcp.pop %v3996
  %v4442 = vmul.f32 1.0, %v4441
  %v4443 = vrcp.pop %v3997
  %v4444 = vmul.f32 1.0, %v4443
  %v4445 = vrcp.pop %v3998
  %v4446 = vmul.f32 1.0, %v4445
  %v4447 = vrcp.pop %v3999
  %v4448 = vmul.f32 1.0, %v4447
  %v4449 = vrcp.pop %v4000
  %v4450 = vmul.f32 1.0, %v4449
  %v4451 = vrcp.pop %v4001
  %v4452 = vmul.f32 1.0, %v4451
  %v4453 = vrcp.pop %v4002
  %v4454 = vmul.f32 1.0, %v4453
  %v4455 = vrcp.pop %v4003
  %v4456 = vmul.f32 1.0, %v4455
  %v4457 = vrcp.pop %v4004
  %v4458 = vmul.f32 1.0, %v4457
  %v4459 = vrcp.pop %v4005
  %v4460 = vmul.f32 1.0, %v4459
  %v4461 = vrcp.pop %v4006
  %v4462 = vmul.f32 1.0, %v4461
  %v4463 = vrcp.pop %v4007
  %v4464 = vmul.f32 1.0, %v4463
  %v4465 = vrcp.pop %v4008
  %v4466 = vmul.f32 1.0, %v4465
  %v4467 = vrcp.pop %v4009
  %v4468 = vmul.f32 1.0, %v4467
  %v4469 = vrcp.pop %v4010
  %v4470 = vmul.f32 1.0, %v4469
  %v4471 = vrcp.pop %v4011
  %v4472 = vmul.f32 1.0, %v4471
  %v4473 = vrcp.pop %v4012
  %v4474 = vmul.f32 1.0, %v4473
  %v4475 = vrcp.pop %v4013
  %v4476 = vmul.f32 1.0, %v4475
  %v4477 = vrcp.pop %v4014
  %v4478 = vmul.f32 1.0, %v4477
  %v4479 = vrcp.pop %v4015
  %v4480 = vmul.f32 1.0, %v4479
  %v4481 = vrcp.pop %v4016
  %v4482 = vmul.f32 1.0, %v4481
  %v4483 = vrcp.pop %v4017
  %v4484 = vmul.f32 1.0, %v4483
  %v4485 = vrcp.pop %v4018
  %v4486 = vmul.f32 1.0, %v4485
  %v4487 = vrcp.pop %v4019
  %v4488 = vmul.f32 1.0, %v4487
  %v4489 = vrcp.pop %v4020
  %v4490 = vmul.f32 1.0, %v4489
  %v4491 = vrcp.pop %v4021
  %v4492 = vmul.f32 1.0, %v4491
  %v4493 = vrcp.pop %v4022
  %v4494 = vmul.f32 1.0, %v4493
  %v4495 = vrcp.pop %v4023
  %v4496 = vmul.f32 1.0, %v4495
  %v4497 = vrcp.pop %v4024
  %v4498 = vmul.f32 1.0, %v4497
  %v4499 = vrcp.pop %v4025
  %v4500 = vmul.f32 1.0, %v4499
  %v4501 = vrcp.pop %v4026
  %v4502 = vmul.f32 1.0, %v4501
  %v4503 = vrcp.pop %v4027
  %v4504 = vmul.f32 1.0, %v4503
  %v4505 = vrcp.pop %v4028
  %v4506 = vmul.f32 1.0, %v4505
  %v4507 = vrcp.pop %v4029
  %v4508 = vmul.f32 1.0, %v4507
  %v4509 = vrcp.pop %v4030
  %v4510 = vmul.f32 1.0, %v4509
  %v4511 = vrcp.pop %v4031
  %v4512 = vmul.f32 1.0, %v4511
  %v4513 = vrcp.pop %v4032
  %v4514 = vmul.f32 1.0, %v4513
  %v4515 = vrcp.pop %v4033
  %v4516 = vmul.f32 1.0, %v4515
  %v4517 = vrcp.pop %v4034
  %v4518 = vmul.f32 1.0, %v4517
  %v4519 = vrcp.pop %v4035
  %v4520 = vmul.f32 1.0, %v4519
  %v4521 = vrcp.pop %v4036
  %v4522 = vmul.f32 1.0, %v4521
  %v4523 = vrcp.pop %v4037
  %v4524 = vmul.f32 1.0, %v4523
  %v4525 = vrcp.pop %v4038
  %v4526 = vmul.f32 1.0, %v4525
  %v4527 = vrcp.pop %v4039
  %v4528 = vmul.f32 1.0, %v4527
  %v4529 = vrcp.pop %v4040
  %v4530 = vmul.f32 1.0, %v4529
  %v4531 = vrcp.pop %v4041
  %v4532 = vmul.f32 1.0, %v4531
  %v4533 = vrcp.pop %v4042
  %v4534 = vmul.f32 1.0, %v4533
  %v4535 = vrcp.pop %v4043
  %v4536 = vmul.f32 1.0, %v4535
  %v4537 = vrcp.pop %v4044
  %v4538 = vmul.f32 1.0, %v4537
  %v4539 = vrcp.pop %v4045
  %v4540 = vmul.f32 1.0, %v4539
  %v4541 = vrcp.pop %v4046
  %v4542 = vmul.f32 1.0, %v4541
  %v4543 = vrcp.pop %v4047
  %v4544 = vmul.f32 1.0, %v4543
  %v4545 = vrcp.pop %v4048
  %v4546 = vmul.f32 1.0, %v4545
  %v4547 = vrcp.pop %v4049
  %v4548 = vmul.f32 1.0, %v4547
  %v4549 = vrcp.pop %v4050
  %v4550 = vmul.f32 1.0, %v4549
  %v4551 = vrcp.pop %v4051
  %v4552 = vmul.f32 1.0, %v4551
  %v4553 = vrcp.pop %v4052
  %v4554 = vmul.f32 1.0, %v4553
  %v4555 = vrcp.pop %v4053
  %v4556 = vmul.f32 1.0, %v4555
  %v4557 = vrcp.pop %v4054
  %v4558 = vmul.f32 1.0, %v4557
  %v4559 = vrcp.pop %v4055
  %v4560 = vmul.f32 1.0, %v4559
  %v4561 = vrcp.pop %v4056
  %v4562 = vmul.f32 1.0, %v4561
  %v4563 = vrcp.pop %v4057
  %v4564 = vmul.f32 1.0, %v4563
  %v4565 = vrcp.pop %v4058
  %v4566 = vmul.f32 1.0, %v4565
  %v4567 = vrcp.pop %v4059
  %v4568 = vmul.f32 1.0, %v4567
  %v4569 = vrcp.pop %v4060
  %v4570 = vmul.f32 1.0, %v4569
  %v4571 = vrcp.pop %v4061
  %v4572 = vmul.f32 1.0, %v4571
  %v4573 = vrcp.pop %v4062
  %v4574 = vmul.f32 1.0, %v4573
  %v4575 = vrcp.pop %v4063
  %v4576 = vmul.f32 1.0, %v4575
  %v4577 = vrcp.pop %v4064
  %v4578 = vmul.f32 1.0, %v4577
  %v4579 = vrcp.pop %v4065
  %v4580 = vmul.f32 1.0, %v4579
  %v4581 = vrcp.pop %v4066
  %v4582 = vmul.f32 1.0, %v4581
  %v4583 = vrcp.pop %v4067
  %v4584 = vmul.f32 1.0, %v4583
  %v4585 = vrcp.pop %v4068
  %v4586 = vmul.f32 1.0, %v4585
  %v4587 = vrcp.pop %v4069
  %v4588 = vmul.f32 1.0, %v4587
  %v4589 = vrcp.pop %v4070
  %v4590 = vmul.f32 1.0, %v4589
  %v4591 = vrcp.pop %v4071
  %v4592 = vmul.f32 1.0, %v4591
  %v4593 = vrcp.pop %v4072
  %v4594 = vmul.f32 1.0, %v4593
  %v4595 = vrcp.pop %v4073
  %v4596 = vmul.f32 1.0, %v4595
  %v4597 = vrcp.pop %v4074
  %v4598 = vmul.f32 1.0, %v4597
  %v4599 = vrcp.pop %v4075
  %v4600 = vmul.f32 1.0, %v4599
  %v4601 = vrcp.pop %v4076
  %v4602 = vmul.f32 1.0, %v4601
  %v4603 = vrcp.pop %v4077
  %v4604 = vmul.f32 1.0, %v4603
  %v4605 = vrcp.pop %v4078
  %v4606 = vmul.f32 1.0, %v4605
  %v4607 = vrcp.pop %v4079
  %v4608 = vmul.f32 1.0, %v4607
  %v4609 = vrcp.pop %v4080
  %v4610 = vmul.f32 1.0, %v4609
  %v4611 = vrcp.pop %v4081
  %v4612 = vmul.f32 1.0, %v4611
  %v4613 = vrcp.pop %v4082
  %v4614 = vmul.f32 1.0, %v4613
  %v4615 = vrcp.pop %v4083
  %v4616 = vmul.f32 1.0, %v4615
  %v4617 = vrcp.pop %v4084
  %v4618 = vmul.f32 1.0, %v4617
  %v4619 = vrcp.pop %v4085
  %v4620 = vmul.f32 1.0, %v4619
  %v4621 = vrcp.pop %v4086
  %v4622 = vmul.f32 1.0, %v4621
  %v4623 = vrcp.pop %v4087
  %v4624 = vmul.f32 1.0, %v4623
  %v4625 = vrcp.pop %v4088
  %v4626 = vmul.f32 1.0, %v4625
  %v4627 = vrcp.pop %v4089
  %v4628 = vmul.f32 1.0, %v4627
  %v4629 = vrcp.pop %v4090
  %v4630 = vmul.f32 1.0, %v4629
  %v4631 = vrcp.pop %v4091
  %v4632 = vmul.f32 1.0, %v4631
  %v4633 = vrcp.pop %v4092
  %v4634 = vmul.f32 1.0, %v4633
  %v4635 = vrcp.pop %v4093
  %v4636 = vmul.f32 1.0, %v4635
  %v4637 = vrcp.pop %v4094
  %v4638 = vmul.f32 1.0, %v4637
  %v4639 = vrcp.pop %v4095
  %v4640 = vmul.f32 1.0, %v4639
  %v4641 = vrcp.pop %v4096
  %v4642 = vmul.f32 1.0, %v4641
  %v4643 = vrcp.pop %v4097
  %v4644 = vmul.f32 1.0, %v4643
  %v4645 = vrcp.pop %v4098
  %v4646 = vmul.f32 1.0, %v4645
  %v4647 = vrcp.pop %v4099
  %v4648 = vmul.f32 1.0, %v4647
  %v4649 = vrcp.pop %v4100
  %v4650 = vmul.f32 1.0, %v4649
  %v4651 = vrcp.pop %v4101
  %v4652 = vmul.f32 1.0, %v4651
  %v4653 = vrcp.pop %v4102
  %v4654 = vmul.f32 1.0, %v4653
  %v4655 = vrcp.pop %v4103
  %v4656 = vmul.f32 1.0, %v4655
  %v4657 = vrcp.pop %v4104
  %v4658 = vmul.f32 1.0, %v4657
  %v4659 = vrcp.pop %v4105
  %v4660 = vmul.f32 1.0, %v4659
  %v4661 = vrcp.pop %v4106
  %v4662 = vmul.f32 1.0, %v4661
  %v4663 = vrcp.pop %v4107
  %v4664 = vmul.f32 1.0, %v4663
  %v4665 = vrcp.pop %v4108
  %v4666 = vmul.f32 1.0, %v4665
  %v4667 = vrcp.pop %v4109
  %v4668 = vmul.f32 1.0, %v4667
  %v4669 = vrcp.pop %v4110
  %v4670 = vmul.f32 1.0, %v4669
  %v4671 = vrcp.pop %v4111
  %v4672 = vmul.f32 1.0, %v4671
  %v4673 = vrcp.pop %v4112
  %v4674 = vmul.f32 1.0, %v4673
  %v4675 = vrcp.pop %v4113
  %v4676 = vmul.f32 1.0, %v4675
  %v4677 = vrcp.pop %v4114
  %v4678 = vmul.f32 1.0, %v4677
  %v4679 = vrcp.pop %v4115
  %v4680 = vmul.f32 1.0, %v4679
  %v4681 = vrcp.pop %v4116
  %v4682 = vmul.f32 1.0, %v4681
  %v4683 = vrcp.pop %v4117
  %v4684 = vmul.f32 1.0, %v4683
  %v4685 = vrcp.pop %v4118
  %v4686 = vmul.f32 1.0, %v4685
  %v4687 = vrcp.pop %v4119
  %v4688 = vmul.f32 1.0, %v4687
  %v4689 = vrcp.pop %v4120
  %v4690 = vmul.f32 1.0, %v4689
  %v4691 = vrcp.pop %v4121
  %v4692 = vmul.f32 1.0, %v4691
  %v4693 = vrcp.pop %v4122
  %v4694 = vmul.f32 1.0, %v4693
  %v4695 = vrcp.pop %v4123
  %v4696 = vmul.f32 1.0, %v4695
  %v4697 = vrcp.pop %v4124
  %v4698 = vmul.f32 1.0, %v4697
  %v4699 = vrcp.pop %v4125
  %v4700 = vmul.f32 1.0, %v4699
  %v4701 = vrcp.pop %v4126
  %v4702 = vmul.f32 1.0, %v4701
  %v4703 = vld [vmem:[%s3] sm:$0xff]
  %v4704 = vld [vmem:[%s3 + $0x8] sm:$0xff]
  %v4705 = vld [vmem:[%s3 + $0x10] sm:$0xff]
  %v4706 = vld [vmem:[%s3 + $0x18] sm:$0xff]
  %v4707 = vld [vmem:[%s3 + $0x20] sm:$0xff]
  %v4708 = vld [vmem:[%s3 + $0x28] sm:$0xff]
  %v4709 = vld [vmem:[%s3 + $0x30] sm:$0xff]
  %v4710 = vld [vmem:[%s3 + $0x38] sm:$0xff]
  %v4711 = vld [vmem:[%s3 + $0x40] sm:$0xff]
  %v4712 = vld [vmem:[%s3 + $0x48] sm:$0xff]
  %v4713 = vld [vmem:[%s3 + $0x50] sm:$0xff]
  %v4714 = vld [vmem:[%s3 + $0x58] sm:$0xff]
  %v4715 = vld [vmem:[%s3 + $0x60] sm:$0xff]
  %v4716 = vld [vmem:[%s3 + $0x68] sm:$0xff]
  %v4717 = vld [vmem:[%s3 + $0x70] sm:$0xff]
  %v4718 = vld [vmem:[%s3 + $0x78] sm:$0xff]
  %v4719 = vld [vmem:[%s3 + $0x80] sm:$0xff]
  %v4720 = vld [vmem:[%s3 + $0x88] sm:$0xff]
  %v4721 = vld [vmem:[%s3 + $0x90] sm:$0xff]
  %v4722 = vld [vmem:[%s3 + $0x98] sm:$0xff]
  %v4723 = vld [vmem:[%s3 + $0xa0] sm:$0xff]
  %v4724 = vld [vmem:[%s3 + $0xa8] sm:$0xff]
  %v4725 = vld [vmem:[%s3 + $0xb0] sm:$0xff]
  %v4726 = vld [vmem:[%s3 + $0xb8] sm:$0xff]
  %v4727 = vld [vmem:[%s3 + $0xc0] sm:$0xff]
  %v4728 = vld [vmem:[%s3 + $0xc8] sm:$0xff]
  %v4729 = vld [vmem:[%s3 + $0xd0] sm:$0xff]
  %v4730 = vld [vmem:[%s3 + $0xd8] sm:$0xff]
  %v4731 = vld [vmem:[%s3 + $0xe0] sm:$0xff]
  %v4732 = vld [vmem:[%s3 + $0xe8] sm:$0xff]
  %v4733 = vld [vmem:[%s3 + $0xf0] sm:$0xff]
  %v4734 = vld [vmem:[%s3 + $0xf8] sm:$0xff]
  %v4735 = vld [vmem:[%s3 + $0x100] sm:$0xff]
  %v4736 = vld [vmem:[%s3 + $0x108] sm:$0xff]
  %v4737 = vld [vmem:[%s3 + $0x110] sm:$0xff]
  %v4738 = vld [vmem:[%s3 + $0x118] sm:$0xff]
  %v4739 = vld [vmem:[%s3 + $0x120] sm:$0xff]
  %v4740 = vld [vmem:[%s3 + $0x128] sm:$0xff]
  %v4741 = vld [vmem:[%s3 + $0x130] sm:$0xff]
  %v4742 = vld [vmem:[%s3 + $0x138] sm:$0xff]
  %v4743 = vld [vmem:[%s3 + $0x140] sm:$0xff]
  %v4744 = vld [vmem:[%s3 + $0x148] sm:$0xff]
  %v4745 = vld [vmem:[%s3 + $0x150] sm:$0xff]
  %v4746 = vld [vmem:[%s3 + $0x158] sm:$0xff]
  %v4747 = vld [vmem:[%s3 + $0x160] sm:$0xff]
  %v4748 = vld [vmem:[%s3 + $0x168] sm:$0xff]
  %v4749 = vld [vmem:[%s3 + $0x170] sm:$0xff]
  %v4750 = vld [vmem:[%s3 + $0x178] sm:$0xff]
  %v4751 = vld [vmem:[%s3 + $0x180] sm:$0xff]
  %v4752 = vld [vmem:[%s3 + $0x188] sm:$0xff]
  %v4753 = vld [vmem:[%s3 + $0x190] sm:$0xff]
  %v4754 = vld [vmem:[%s3 + $0x198] sm:$0xff]
  %v4755 = vld [vmem:[%s3 + $0x1a0] sm:$0xff]
  %v4756 = vld [vmem:[%s3 + $0x1a8] sm:$0xff]
  %v4757 = vld [vmem:[%s3 + $0x1b0] sm:$0xff]
  %v4758 = vld [vmem:[%s3 + $0x1b8] sm:$0xff]
  %v4759 = vld [vmem:[%s3 + $0x1c0] sm:$0xff]
  %v4760 = vld [vmem:[%s3 + $0x1c8] sm:$0xff]
  %v4761 = vld [vmem:[%s3 + $0x1d0] sm:$0xff]
  %v4762 = vld [vmem:[%s3 + $0x1d8] sm:$0xff]
  %v4763 = vld [vmem:[%s3 + $0x1e0] sm:$0xff]
  %v4764 = vld [vmem:[%s3 + $0x1e8] sm:$0xff]
  %v4765 = vld [vmem:[%s3 + $0x1f0] sm:$0xff]
  %v4766 = vld [vmem:[%s3 + $0x1f8] sm:$0xff]
  %v4767 = vld [vmem:[%s3 + $0x200] sm:$0xff]
  %v4768 = vld [vmem:[%s3 + $0x208] sm:$0xff]
  %v4769 = vld [vmem:[%s3 + $0x210] sm:$0xff]
  %v4770 = vld [vmem:[%s3 + $0x218] sm:$0xff]
  %v4771 = vld [vmem:[%s3 + $0x220] sm:$0xff]
  %v4772 = vld [vmem:[%s3 + $0x228] sm:$0xff]
  %v4773 = vld [vmem:[%s3 + $0x230] sm:$0xff]
  %v4774 = vld [vmem:[%s3 + $0x238] sm:$0xff]
  %v4775 = vld [vmem:[%s3 + $0x240] sm:$0xff]
  %v4776 = vld [vmem:[%s3 + $0x248] sm:$0xff]
  %v4777 = vld [vmem:[%s3 + $0x250] sm:$0xff]
  %v4778 = vld [vmem:[%s3 + $0x258] sm:$0xff]
  %v4779 = vld [vmem:[%s3 + $0x260] sm:$0xff]
  %v4780 = vld [vmem:[%s3 + $0x268] sm:$0xff]
  %v4781 = vld [vmem:[%s3 + $0x270] sm:$0xff]
  %v4782 = vld [vmem:[%s3 + $0x278] sm:$0xff]
  %v4783 = vld [vmem:[%s3 + $0x280] sm:$0xff]
  %v4784 = vld [vmem:[%s3 + $0x288] sm:$0xff]
  %v4785 = vld [vmem:[%s3 + $0x290] sm:$0xff]
  %v4786 = vld [vmem:[%s3 + $0x298] sm:$0xff]
  %v4787 = vld [vmem:[%s3 + $0x2a0] sm:$0xff]
  %v4788 = vld [vmem:[%s3 + $0x2a8] sm:$0xff]
  %v4789 = vld [vmem:[%s3 + $0x2b0] sm:$0xff]
  %v4790 = vld [vmem:[%s3 + $0x2b8] sm:$0xff]
  %v4791 = vld [vmem:[%s3 + $0x2c0] sm:$0xff]
  %v4792 = vld [vmem:[%s3 + $0x2c8] sm:$0xff]
  %v4793 = vld [vmem:[%s3 + $0x2d0] sm:$0xff]
  %v4794 = vld [vmem:[%s3 + $0x2d8] sm:$0xff]
  %v4795 = vld [vmem:[%s3 + $0x2e0] sm:$0xff]
  %v4796 = vld [vmem:[%s3 + $0x2e8] sm:$0xff]
  %v4797 = vld [vmem:[%s3 + $0x2f0] sm:$0xff]
  %v4798 = vld [vmem:[%s3 + $0x2f8] sm:$0xff]
  %v4799 = vld [vmem:[%s3 + $0x300] sm:$0xff]
  %v4800 = vld [vmem:[%s3 + $0x308] sm:$0xff]
  %v4801 = vld [vmem:[%s3 + $0x310] sm:$0xff]
  %v4802 = vld [vmem:[%s3 + $0x318] sm:$0xff]
  %v4803 = vld [vmem:[%s3 + $0x320] sm:$0xff]
  %v4804 = vld [vmem:[%s3 + $0x328] sm:$0xff]
  %v4805 = vld [vmem:[%s3 + $0x330] sm:$0xff]
  %v4806 = vld [vmem:[%s3 + $0x338] sm:$0xff]
  %v4807 = vld [vmem:[%s3 + $0x340] sm:$0xff]
  %v4808 = vld [vmem:[%s3 + $0x348] sm:$0xff]
  %v4809 = vld [vmem:[%s3 + $0x350] sm:$0xff]
  %v4810 = vld [vmem:[%s3 + $0x358] sm:$0xff]
  %v4811 = vld [vmem:[%s3 + $0x360] sm:$0xff]
  %v4812 = vld [vmem:[%s3 + $0x368] sm:$0xff]
  %v4813 = vld [vmem:[%s3 + $0x370] sm:$0xff]
  %v4814 = vld [vmem:[%s3 + $0x378] sm:$0xff]
  %v4815 = vld [vmem:[%s3 + $0x380] sm:$0xff]
  %v4816 = vld [vmem:[%s3 + $0x388] sm:$0xff]
  %v4817 = vld [vmem:[%s3 + $0x390] sm:$0xff]
  %v4818 = vld [vmem:[%s3 + $0x398] sm:$0xff]
  %v4819 = vld [vmem:[%s3 + $0x3a0] sm:$0xff]
  %v4820 = vld [vmem:[%s3 + $0x3a8] sm:$0xff]
  %v4821 = vld [vmem:[%s3 + $0x3b0] sm:$0xff]
  %v4822 = vld [vmem:[%s3 + $0x3b8] sm:$0xff]
  %v4823 = vld [vmem:[%s3 + $0x3c0] sm:$0xff]
  %v4824 = vld [vmem:[%s3 + $0x3c8] sm:$0xff]
  %v4825 = vld [vmem:[%s3 + $0x3d0] sm:$0xff]
  %v4826 = vld [vmem:[%s3 + $0x3d8] sm:$0xff]
  %v4827 = vld [vmem:[%s3 + $0x3e0] sm:$0xff]
  %v4828 = vld [vmem:[%s3 + $0x3e8] sm:$0xff]
  %v4829 = vld [vmem:[%s3 + $0x3f0] sm:$0xff]
  %v4830 = vld [vmem:[%s3 + $0x3f8] sm:$0xff]
  %v4831 = vld [vmem:[%s3 + $0x400] sm:$0xff]
  %v4832 = vld [vmem:[%s3 + $0x408] sm:$0xff]
  %v4833 = vld [vmem:[%s3 + $0x410] sm:$0xff]
  %v4834 = vld [vmem:[%s3 + $0x418] sm:$0xff]
  %v4835 = vld [vmem:[%s3 + $0x420] sm:$0xff]
  %v4836 = vld [vmem:[%s3 + $0x428] sm:$0xff]
  %v4837 = vld [vmem:[%s3 + $0x430] sm:$0xff]
  %v4838 = vld [vmem:[%s3 + $0x438] sm:$0xff]
  %v4839 = vld [vmem:[%s3 + $0x440] sm:$0xff]
  %v4840 = vld [vmem:[%s3 + $0x448] sm:$0xff]
  %v4841 = vld [vmem:[%s3 + $0x450] sm:$0xff]
  %v4842 = vld [vmem:[%s3 + $0x458] sm:$0xff]
  %v4843 = vld [vmem:[%s3 + $0x460] sm:$0xff]
  %v4844 = vld [vmem:[%s3 + $0x468] sm:$0xff]
  %v4845 = vld [vmem:[%s3 + $0x470] sm:$0xff]
  %v4846 = vld [vmem:[%s3 + $0x478] sm:$0xff]
  %v4847 = vld [vmem:[%s3 + $0x480] sm:$0xff]
  %v4848 = vld [vmem:[%s3 + $0x488] sm:$0xff]
  %v4849 = vld [vmem:[%s3 + $0x490] sm:$0xff]
  %v4850 = vld [vmem:[%s3 + $0x498] sm:$0xff]
  %v4851 = vld [vmem:[%s3 + $0x4a0] sm:$0xff]
  %v4852 = vld [vmem:[%s3 + $0x4a8] sm:$0xff]
  %v4853 = vld [vmem:[%s3 + $0x4b0] sm:$0xff]
  %v4854 = vld [vmem:[%s3 + $0x4b8] sm:$0xff]
  %v4855 = vld [vmem:[%s3 + $0x4c0] sm:$0xff]
  %v4856 = vld [vmem:[%s3 + $0x4c8] sm:$0xff]
  %v4857 = vld [vmem:[%s3 + $0x4d0] sm:$0xff]
  %v4858 = vld [vmem:[%s3 + $0x4d8] sm:$0xff]
  %v4859 = vld [vmem:[%s3 + $0x4e0] sm:$0xff]
  %v4860 = vld [vmem:[%s3 + $0x4e8] sm:$0xff]
  %v4861 = vld [vmem:[%s3 + $0x4f0] sm:$0xff]
  %v4862 = vld [vmem:[%s3 + $0x4f8] sm:$0xff]
  %v4863 = vld [vmem:[%s3 + $0x500] sm:$0xff]
  %v4864 = vld [vmem:[%s3 + $0x508] sm:$0xff]
  %v4865 = vld [vmem:[%s3 + $0x510] sm:$0xff]
  %v4866 = vld [vmem:[%s3 + $0x518] sm:$0xff]
  %v4867 = vld [vmem:[%s3 + $0x520] sm:$0xff]
  %v4868 = vld [vmem:[%s3 + $0x528] sm:$0xff]
  %v4869 = vld [vmem:[%s3 + $0x530] sm:$0xff]
  %v4870 = vld [vmem:[%s3 + $0x538] sm:$0xff]
  %v4871 = vld [vmem:[%s3 + $0x540] sm:$0xff]
  %v4872 = vld [vmem:[%s3 + $0x548] sm:$0xff]
  %v4873 = vld [vmem:[%s3 + $0x550] sm:$0xff]
  %v4874 = vld [vmem:[%s3 + $0x558] sm:$0xff]
  %v4875 = vld [vmem:[%s3 + $0x560] sm:$0xff]
  %v4876 = vld [vmem:[%s3 + $0x568] sm:$0xff]
  %v4877 = vld [vmem:[%s3 + $0x570] sm:$0xff]
  %v4878 = vld [vmem:[%s3 + $0x578] sm:$0xff]
  %v4879 = vld [vmem:[%s3 + $0x580] sm:$0xff]
  %v4880 = vld [vmem:[%s3 + $0x588] sm:$0xff]
  %v4881 = vld [vmem:[%s3 + $0x590] sm:$0xff]
  %v4882 = vld [vmem:[%s3 + $0x598] sm:$0xff]
  %v4883 = vld [vmem:[%s3 + $0x5a0] sm:$0xff]
  %v4884 = vld [vmem:[%s3 + $0x5a8] sm:$0xff]
  %v4885 = vld [vmem:[%s3 + $0x5b0] sm:$0xff]
  %v4886 = vld [vmem:[%s3 + $0x5b8] sm:$0xff]
  %v4887 = vld [vmem:[%s3 + $0x5c0] sm:$0xff]
  %v4888 = vld [vmem:[%s3 + $0x5c8] sm:$0xff]
  %v4889 = vld [vmem:[%s3 + $0x5d0] sm:$0xff]
  %v4890 = vld [vmem:[%s3 + $0x5d8] sm:$0xff]
  %v4891 = vld [vmem:[%s3 + $0x5e0] sm:$0xff]
  %v4892 = vld [vmem:[%s3 + $0x5e8] sm:$0xff]
  %v4893 = vld [vmem:[%s3 + $0x5f0] sm:$0xff]
  %v4894 = vld [vmem:[%s3 + $0x5f8] sm:$0xff]
  %v4895 = vld [vmem:[%s3 + $0x600] sm:$0xff]
  %v4896 = vld [vmem:[%s3 + $0x608] sm:$0xff]
  %v4897 = vld [vmem:[%s3 + $0x610] sm:$0xff]
  %v4898 = vld [vmem:[%s3 + $0x618] sm:$0xff]
  %v4899 = vld [vmem:[%s3 + $0x620] sm:$0xff]
  %v4900 = vld [vmem:[%s3 + $0x628] sm:$0xff]
  %v4901 = vld [vmem:[%s3 + $0x630] sm:$0xff]
  %v4902 = vld [vmem:[%s3 + $0x638] sm:$0xff]
  %v4903 = vld [vmem:[%s3 + $0x640] sm:$0xff]
  %v4904 = vld [vmem:[%s3 + $0x648] sm:$0xff]
  %v4905 = vld [vmem:[%s3 + $0x650] sm:$0xff]
  %v4906 = vld [vmem:[%s3 + $0x658] sm:$0xff]
  %v4907 = vld [vmem:[%s3 + $0x660] sm:$0xff]
  %v4908 = vld [vmem:[%s3 + $0x668] sm:$0xff]
  %v4909 = vld [vmem:[%s3 + $0x670] sm:$0xff]
  %v4910 = vld [vmem:[%s3 + $0x678] sm:$0xff]
  %v4911 = vld [vmem:[%s3 + $0x680] sm:$0xff]
  %v4912 = vld [vmem:[%s3 + $0x688] sm:$0xff]
  %v4913 = vld [vmem:[%s3 + $0x690] sm:$0xff]
  %v4914 = vld [vmem:[%s3 + $0x698] sm:$0xff]
  %v4915 = vld [vmem:[%s3 + $0x6a0] sm:$0xff]
  %v4916 = vld [vmem:[%s3 + $0x6a8] sm:$0xff]
  %v4917 = vld [vmem:[%s3 + $0x6b0] sm:$0xff]
  %v4918 = vld [vmem:[%s3 + $0x6b8] sm:$0xff]
  %v4919 = vld [vmem:[%s3 + $0x6c0] sm:$0xff]
  %v4920 = vld [vmem:[%s3 + $0x6c8] sm:$0xff]
  %v4921 = vld [vmem:[%s3 + $0x6d0] sm:$0xff]
  %v4922 = vld [vmem:[%s3 + $0x6d8] sm:$0xff]
  %v4923 = vld [vmem:[%s3 + $0x6e0] sm:$0xff]
  %v4924 = vld [vmem:[%s3 + $0x6e8] sm:$0xff]
  %v4925 = vld [vmem:[%s3 + $0x6f0] sm:$0xff]
  %v4926 = vld [vmem:[%s3 + $0x6f8] sm:$0xff]
  %v4927 = vld [vmem:[%s3 + $0x700] sm:$0xff]
  %v4928 = vld [vmem:[%s3 + $0x708] sm:$0xff]
  %v4929 = vld [vmem:[%s3 + $0x710] sm:$0xff]
  %v4930 = vld [vmem:[%s3 + $0x718] sm:$0xff]
  %v4931 = vld [vmem:[%s3 + $0x720] sm:$0xff]
  %v4932 = vld [vmem:[%s3 + $0x728] sm:$0xff]
  %v4933 = vld [vmem:[%s3 + $0x730] sm:$0xff]
  %v4934 = vld [vmem:[%s3 + $0x738] sm:$0xff]
  %v4935 = vld [vmem:[%s3 + $0x740] sm:$0xff]
  %v4936 = vld [vmem:[%s3 + $0x748] sm:$0xff]
  %v4937 = vld [vmem:[%s3 + $0x750] sm:$0xff]
  %v4938 = vld [vmem:[%s3 + $0x758] sm:$0xff]
  %v4939 = vld [vmem:[%s3 + $0x760] sm:$0xff]
  %v4940 = vld [vmem:[%s3 + $0x768] sm:$0xff]
  %v4941 = vld [vmem:[%s3 + $0x770] sm:$0xff]
  %v4942 = vld [vmem:[%s3 + $0x778] sm:$0xff]
  %v4943 = vld [vmem:[%s3 + $0x780] sm:$0xff]
  %v4944 = vld [vmem:[%s3 + $0x788] sm:$0xff]
  %v4945 = vld [vmem:[%s3 + $0x790] sm:$0xff]
  %v4946 = vld [vmem:[%s3 + $0x798] sm:$0xff]
  %v4947 = vld [vmem:[%s3 + $0x7a0] sm:$0xff]
  %v4948 = vld [vmem:[%s3 + $0x7a8] sm:$0xff]
  %v4949 = vld [vmem:[%s3 + $0x7b0] sm:$0xff]
  %v4950 = vld [vmem:[%s3 + $0x7b8] sm:$0xff]
  %v4951 = vld [vmem:[%s3 + $0x7c0] sm:$0xff]
  %v4952 = vld [vmem:[%s3 + $0x7c8] sm:$0xff]
  %v4953 = vld [vmem:[%s3 + $0x7d0] sm:$0xff]
  %v4954 = vld [vmem:[%s3 + $0x7d8] sm:$0xff]
  %v4955 = vld [vmem:[%s3 + $0x7e0] sm:$0xff]
  %v4956 = vld [vmem:[%s3 + $0x7e8] sm:$0xff]
  %v4957 = vld [vmem:[%s3 + $0x7f0] sm:$0xff]
  %v4958 = vld [vmem:[%s3 + $0x7f8] sm:$0xff]
  %v4959 = vld [vmem:[%s3 + $0x800] sm:$0xff]
  %v4960 = vld [vmem:[%s3 + $0x808] sm:$0xff]
  %v4961 = vld [vmem:[%s3 + $0x810] sm:$0xff]
  %v4962 = vld [vmem:[%s3 + $0x818] sm:$0xff]
  %v4963 = vld [vmem:[%s3 + $0x820] sm:$0xff]
  %v4964 = vld [vmem:[%s3 + $0x828] sm:$0xff]
  %v4965 = vld [vmem:[%s3 + $0x830] sm:$0xff]
  %v4966 = vld [vmem:[%s3 + $0x838] sm:$0xff]
  %v4967 = vld [vmem:[%s3 + $0x840] sm:$0xff]
  %v4968 = vld [vmem:[%s3 + $0x848] sm:$0xff]
  %v4969 = vld [vmem:[%s3 + $0x850] sm:$0xff]
  %v4970 = vld [vmem:[%s3 + $0x858] sm:$0xff]
  %v4971 = vld [vmem:[%s3 + $0x860] sm:$0xff]
  %v4972 = vld [vmem:[%s3 + $0x868] sm:$0xff]
  %v4973 = vld [vmem:[%s3 + $0x870] sm:$0xff]
  %v4974 = vld [vmem:[%s3 + $0x878] sm:$0xff]
  %v4975 = vld [vmem:[%s3 + $0x880] sm:$0xff]
  %v4976 = vld [vmem:[%s3 + $0x888] sm:$0xff]
  %v4977 = vld [vmem:[%s3 + $0x890] sm:$0xff]
  %v4978 = vld [vmem:[%s3 + $0x898] sm:$0xff]
  %v4979 = vld [vmem:[%s3 + $0x8a0] sm:$0xff]
  %v4980 = vld [vmem:[%s3 + $0x8a8] sm:$0xff]
  %v4981 = vld [vmem:[%s3 + $0x8b0] sm:$0xff]
  %v4982 = vld [vmem:[%s3 + $0x8b8] sm:$0xff]
  %v4983 = vld [vmem:[%s3 + $0x8c0] sm:$0xff]
  %v4984 = vld [vmem:[%s3 + $0x8c8] sm:$0xff]
  %v4985 = vld [vmem:[%s3 + $0x8d0] sm:$0xff]
  %v4986 = vld [vmem:[%s3 + $0x8d8] sm:$0xff]
  %v4987 = vld [vmem:[%s3 + $0x8e0] sm:$0xff]
  %v4988 = vld [vmem:[%s3 + $0x8e8] sm:$0xff]
  %v4989 = vld [vmem:[%s3 + $0x8f0] sm:$0xff]
  %v4990 = vld [vmem:[%s3 + $0x8f8] sm:$0xff]
  %4992 = vset.pattern.permute.xlu0 0
  %4993 = vperm.xlu0 %4992, %v4128
  %v4994 = vpop.permute.xlu0 %4993
  %4997 = vset.pattern.permute.xlu0 0
  %4998 = vperm.xlu0 %4997, %v4130
  %v4999 = vpop.permute.xlu0 %4998
  %5002 = vset.pattern.permute.xlu0 0
  %5003 = vperm.xlu0 %5002, %v4132
  %v5004 = vpop.permute.xlu0 %5003
  %5007 = vset.pattern.permute.xlu0 0
  %5008 = vperm.xlu0 %5007, %v4134
  %v5009 = vpop.permute.xlu0 %5008
  %5012 = vset.pattern.permute.xlu0 0
  %5013 = vperm.xlu0 %5012, %v4136
  %v5014 = vpop.permute.xlu0 %5013
  %5017 = vset.pattern.permute.xlu0 0
  %5018 = vperm.xlu0 %5017, %v4138
  %v5019 = vpop.permute.xlu0 %5018
  %5022 = vset.pattern.permute.xlu0 0
  %5023 = vperm.xlu0 %5022, %v4140
  %v5024 = vpop.permute.xlu0 %5023
  %5027 = vset.pattern.permute.xlu0 0
  %5028 = vperm.xlu0 %5027, %v4142
  %v5029 = vpop.permute.xlu0 %5028
  %5032 = vset.pattern.permute.xlu0 0
  %5033 = vperm.xlu0 %5032, %v4144
  %v5034 = vpop.permute.xlu0 %5033
  %5037 = vset.pattern.permute.xlu0 0
  %5038 = vperm.xlu0 %5037, %v4146
  %v5039 = vpop.permute.xlu0 %5038
  %5042 = vset.pattern.permute.xlu0 0
  %5043 = vperm.xlu0 %5042, %v4148
  %v5044 = vpop.permute.xlu0 %5043
  %5047 = vset.pattern.permute.xlu0 0
  %5048 = vperm.xlu0 %5047, %v4150
  %v5049 = vpop.permute.xlu0 %5048
  %5052 = vset.pattern.permute.xlu0 0
  %5053 = vperm.xlu0 %5052, %v4152
  %v5054 = vpop.permute.xlu0 %5053
  %5057 = vset.pattern.permute.xlu0 0
  %5058 = vperm.xlu0 %5057, %v4154
  %v5059 = vpop.permute.xlu0 %5058
  %5062 = vset.pattern.permute.xlu0 0
  %5063 = vperm.xlu0 %5062, %v4156
  %v5064 = vpop.permute.xlu0 %5063
  %5067 = vset.pattern.permute.xlu0 0
  %5068 = vperm.xlu0 %5067, %v4158
  %v5069 = vpop.permute.xlu0 %5068
  %5072 = vset.pattern.permute.xlu0 0
  %5073 = vperm.xlu0 %5072, %v4160
  %v5074 = vpop.permute.xlu0 %5073
  %5077 = vset.pattern.permute.xlu0 0
  %5078 = vperm.xlu0 %5077, %v4162
  %v5079 = vpop.permute.xlu0 %5078
  %5082 = vset.pattern.permute.xlu0 0
  %5083 = vperm.xlu0 %5082, %v4164
  %v5084 = vpop.permute.xlu0 %5083
  %5087 = vset.pattern.permute.xlu0 0
  %5088 = vperm.xlu0 %5087, %v4166
  %v5089 = vpop.permute.xlu0 %5088
  %5092 = vset.pattern.permute.xlu0 0
  %5093 = vperm.xlu0 %5092, %v4168
  %v5094 = vpop.permute.xlu0 %5093
  %5097 = vset.pattern.permute.xlu0 0
  %5098 = vperm.xlu0 %5097, %v4170
  %v5099 = vpop.permute.xlu0 %5098
  %5102 = vset.pattern.permute.xlu0 0
  %5103 = vperm.xlu0 %5102, %v4172
  %v5104 = vpop.permute.xlu0 %5103
  %5107 = vset.pattern.permute.xlu0 0
  %5108 = vperm.xlu0 %5107, %v4174
  %v5109 = vpop.permute.xlu0 %5108
  %5112 = vset.pattern.permute.xlu0 0
  %5113 = vperm.xlu0 %5112, %v4176
  %v5114 = vpop.permute.xlu0 %5113
  %5117 = vset.pattern.permute.xlu0 0
  %5118 = vperm.xlu0 %5117, %v4178
  %v5119 = vpop.permute.xlu0 %5118
  %5122 = vset.pattern.permute.xlu0 0
  %5123 = vperm.xlu0 %5122, %v4180
  %v5124 = vpop.permute.xlu0 %5123
  %5127 = vset.pattern.permute.xlu0 0
  %5128 = vperm.xlu0 %5127, %v4182
  %v5129 = vpop.permute.xlu0 %5128
  %5132 = vset.pattern.permute.xlu0 0
  %5133 = vperm.xlu0 %5132, %v4184
  %v5134 = vpop.permute.xlu0 %5133
  %5137 = vset.pattern.permute.xlu0 0
  %5138 = vperm.xlu0 %5137, %v4186
  %v5139 = vpop.permute.xlu0 %5138
  %5142 = vset.pattern.permute.xlu0 0
  %5143 = vperm.xlu0 %5142, %v4188
  %v5144 = vpop.permute.xlu0 %5143
  %5147 = vset.pattern.permute.xlu0 0
  %5148 = vperm.xlu0 %5147, %v4190
  %v5149 = vpop.permute.xlu0 %5148
  %5152 = vset.pattern.permute.xlu0 0
  %5153 = vperm.xlu0 %5152, %v4192
  %v5154 = vpop.permute.xlu0 %5153
  %5157 = vset.pattern.permute.xlu0 0
  %5158 = vperm.xlu0 %5157, %v4194
  %v5159 = vpop.permute.xlu0 %5158
  %5162 = vset.pattern.permute.xlu0 0
  %5163 = vperm.xlu0 %5162, %v4196
  %v5164 = vpop.permute.xlu0 %5163
  %5167 = vset.pattern.permute.xlu0 0
  %5168 = vperm.xlu0 %5167, %v4198
  %v5169 = vpop.permute.xlu0 %5168
  %5172 = vset.pattern.permute.xlu0 0
  %5173 = vperm.xlu0 %5172, %v4200
  %v5174 = vpop.permute.xlu0 %5173
  %5177 = vset.pattern.permute.xlu0 0
  %5178 = vperm.xlu0 %5177, %v4202
  %v5179 = vpop.permute.xlu0 %5178
  %5182 = vset.pattern.permute.xlu0 0
  %5183 = vperm.xlu0 %5182, %v4204
  %v5184 = vpop.permute.xlu0 %5183
  %5187 = vset.pattern.permute.xlu0 0
  %5188 = vperm.xlu0 %5187, %v4206
  %v5189 = vpop.permute.xlu0 %5188
  %5192 = vset.pattern.permute.xlu0 0
  %5193 = vperm.xlu0 %5192, %v4208
  %v5194 = vpop.permute.xlu0 %5193
  %5197 = vset.pattern.permute.xlu0 0
  %5198 = vperm.xlu0 %5197, %v4210
  %v5199 = vpop.permute.xlu0 %5198
  %5202 = vset.pattern.permute.xlu0 0
  %5203 = vperm.xlu0 %5202, %v4212
  %v5204 = vpop.permute.xlu0 %5203
  %5207 = vset.pattern.permute.xlu0 0
  %5208 = vperm.xlu0 %5207, %v4214
  %v5209 = vpop.permute.xlu0 %5208
  %5212 = vset.pattern.permute.xlu0 0
  %5213 = vperm.xlu0 %5212, %v4216
  %v5214 = vpop.permute.xlu0 %5213
  %5217 = vset.pattern.permute.xlu0 0
  %5218 = vperm.xlu0 %5217, %v4218
  %v5219 = vpop.permute.xlu0 %5218
  %5222 = vset.pattern.permute.xlu0 0
  %5223 = vperm.xlu0 %5222, %v4220
  %v5224 = vpop.permute.xlu0 %5223
  %5227 = vset.pattern.permute.xlu0 0
  %5228 = vperm.xlu0 %5227, %v4222
  %v5229 = vpop.permute.xlu0 %5228
  %5232 = vset.pattern.permute.xlu0 0
  %5233 = vperm.xlu0 %5232, %v4224
  %v5234 = vpop.permute.xlu0 %5233
  %5237 = vset.pattern.permute.xlu0 0
  %5238 = vperm.xlu0 %5237, %v4226
  %v5239 = vpop.permute.xlu0 %5238
  %5242 = vset.pattern.permute.xlu0 0
  %5243 = vperm.xlu0 %5242, %v4228
  %v5244 = vpop.permute.xlu0 %5243
  %5247 = vset.pattern.permute.xlu0 0
  %5248 = vperm.xlu0 %5247, %v4230
  %v5249 = vpop.permute.xlu0 %5248
  %5252 = vset.pattern.permute.xlu0 0
  %5253 = vperm.xlu0 %5252, %v4232
  %v5254 = vpop.permute.xlu0 %5253
  %5257 = vset.pattern.permute.xlu0 0
  %5258 = vperm.xlu0 %5257, %v4234
  %v5259 = vpop.permute.xlu0 %5258
  %5262 = vset.pattern.permute.xlu0 0
  %5263 = vperm.xlu0 %5262, %v4236
  %v5264 = vpop.permute.xlu0 %5263
  %5267 = vset.pattern.permute.xlu0 0
  %5268 = vperm.xlu0 %5267, %v4238
  %v5269 = vpop.permute.xlu0 %5268
  %5272 = vset.pattern.permute.xlu0 0
  %5273 = vperm.xlu0 %5272, %v4240
  %v5274 = vpop.permute.xlu0 %5273
  %5277 = vset.pattern.permute.xlu0 0
  %5278 = vperm.xlu0 %5277, %v4242
  %v5279 = vpop.permute.xlu0 %5278
  %5282 = vset.pattern.permute.xlu0 0
  %5283 = vperm.xlu0 %5282, %v4244
  %v5284 = vpop.permute.xlu0 %5283
  %5287 = vset.pattern.permute.xlu0 0
  %5288 = vperm.xlu0 %5287, %v4246
  %v5289 = vpop.permute.xlu0 %5288
  %5292 = vset.pattern.permute.xlu0 0
  %5293 = vperm.xlu0 %5292, %v4248
  %v5294 = vpop.permute.xlu0 %5293
  %5297 = vset.pattern.permute.xlu0 0
  %5298 = vperm.xlu0 %5297, %v4250
  %v5299 = vpop.permute.xlu0 %5298
  %5302 = vset.pattern.permute.xlu0 0
  %5303 = vperm.xlu0 %5302, %v4252
  %v5304 = vpop.permute.xlu0 %5303
  %5307 = vset.pattern.permute.xlu0 0
  %5308 = vperm.xlu0 %5307, %v4254
  %v5309 = vpop.permute.xlu0 %5308
  %5312 = vset.pattern.permute.xlu0 0
  %5313 = vperm.xlu0 %5312, %v4256
  %v5314 = vpop.permute.xlu0 %5313
  %5317 = vset.pattern.permute.xlu0 0
  %5318 = vperm.xlu0 %5317, %v4258
  %v5319 = vpop.permute.xlu0 %5318
  %5322 = vset.pattern.permute.xlu0 0
  %5323 = vperm.xlu0 %5322, %v4260
  %v5324 = vpop.permute.xlu0 %5323
  %5327 = vset.pattern.permute.xlu0 0
  %5328 = vperm.xlu0 %5327, %v4262
  %v5329 = vpop.permute.xlu0 %5328
  %5332 = vset.pattern.permute.xlu0 0
  %5333 = vperm.xlu0 %5332, %v4264
  %v5334 = vpop.permute.xlu0 %5333
  %5337 = vset.pattern.permute.xlu0 0
  %5338 = vperm.xlu0 %5337, %v4266
  %v5339 = vpop.permute.xlu0 %5338
  %5342 = vset.pattern.permute.xlu0 0
  %5343 = vperm.xlu0 %5342, %v4268
  %v5344 = vpop.permute.xlu0 %5343
  %5347 = vset.pattern.permute.xlu0 0
  %5348 = vperm.xlu0 %5347, %v4270
  %v5349 = vpop.permute.xlu0 %5348
  %5352 = vset.pattern.permute.xlu0 0
  %5353 = vperm.xlu0 %5352, %v4272
  %v5354 = vpop.permute.xlu0 %5353
  %5357 = vset.pattern.permute.xlu0 0
  %5358 = vperm.xlu0 %5357, %v4274
  %v5359 = vpop.permute.xlu0 %5358
  %5362 = vset.pattern.permute.xlu0 0
  %5363 = vperm.xlu0 %5362, %v4276
  %v5364 = vpop.permute.xlu0 %5363
  %5367 = vset.pattern.permute.xlu0 0
  %5368 = vperm.xlu0 %5367, %v4278
  %v5369 = vpop.permute.xlu0 %5368
  %5372 = vset.pattern.permute.xlu0 0
  %5373 = vperm.xlu0 %5372, %v4280
  %v5374 = vpop.permute.xlu0 %5373
  %5377 = vset.pattern.permute.xlu0 0
  %5378 = vperm.xlu0 %5377, %v4282
  %v5379 = vpop.permute.xlu0 %5378
  %5382 = vset.pattern.permute.xlu0 0
  %5383 = vperm.xlu0 %5382, %v4284
  %v5384 = vpop.permute.xlu0 %5383
  %5387 = vset.pattern.permute.xlu0 0
  %5388 = vperm.xlu0 %5387, %v4286
  %v5389 = vpop.permute.xlu0 %5388
  %5392 = vset.pattern.permute.xlu0 0
  %5393 = vperm.xlu0 %5392, %v4288
  %v5394 = vpop.permute.xlu0 %5393
  %5397 = vset.pattern.permute.xlu0 0
  %5398 = vperm.xlu0 %5397, %v4290
  %v5399 = vpop.permute.xlu0 %5398
  %5402 = vset.pattern.permute.xlu0 0
  %5403 = vperm.xlu0 %5402, %v4292
  %v5404 = vpop.permute.xlu0 %5403
  %5407 = vset.pattern.permute.xlu0 0
  %5408 = vperm.xlu0 %5407, %v4294
  %v5409 = vpop.permute.xlu0 %5408
  %5412 = vset.pattern.permute.xlu0 0
  %5413 = vperm.xlu0 %5412, %v4296
  %v5414 = vpop.permute.xlu0 %5413
  %5417 = vset.pattern.permute.xlu0 0
  %5418 = vperm.xlu0 %5417, %v4298
  %v5419 = vpop.permute.xlu0 %5418
  %5422 = vset.pattern.permute.xlu0 0
  %5423 = vperm.xlu0 %5422, %v4300
  %v5424 = vpop.permute.xlu0 %5423
  %5427 = vset.pattern.permute.xlu0 0
  %5428 = vperm.xlu0 %5427, %v4302
  %v5429 = vpop.permute.xlu0 %5428
  %5432 = vset.pattern.permute.xlu0 0
  %5433 = vperm.xlu0 %5432, %v4304
  %v5434 = vpop.permute.xlu0 %5433
  %5437 = vset.pattern.permute.xlu0 0
  %5438 = vperm.xlu0 %5437, %v4306
  %v5439 = vpop.permute.xlu0 %5438
  %5442 = vset.pattern.permute.xlu0 0
  %5443 = vperm.xlu0 %5442, %v4308
  %v5444 = vpop.permute.xlu0 %5443
  %5447 = vset.pattern.permute.xlu0 0
  %5448 = vperm.xlu0 %5447, %v4310
  %v5449 = vpop.permute.xlu0 %5448
  %5452 = vset.pattern.permute.xlu0 0
  %5453 = vperm.xlu0 %5452, %v4312
  %v5454 = vpop.permute.xlu0 %5453
  %5457 = vset.pattern.permute.xlu0 0
  %5458 = vperm.xlu0 %5457, %v4314
  %v5459 = vpop.permute.xlu0 %5458
  %5462 = vset.pattern.permute.xlu0 0
  %5463 = vperm.xlu0 %5462, %v4316
  %v5464 = vpop.permute.xlu0 %5463
  %5467 = vset.pattern.permute.xlu0 0
  %5468 = vperm.xlu0 %5467, %v4318
  %v5469 = vpop.permute.xlu0 %5468
  %5472 = vset.pattern.permute.xlu0 0
  %5473 = vperm.xlu0 %5472, %v4320
  %v5474 = vpop.permute.xlu0 %5473
  %5477 = vset.pattern.permute.xlu0 0
  %5478 = vperm.xlu0 %5477, %v4322
  %v5479 = vpop.permute.xlu0 %5478
  %5482 = vset.pattern.permute.xlu0 0
  %5483 = vperm.xlu0 %5482, %v4324
  %v5484 = vpop.permute.xlu0 %5483
  %5487 = vset.pattern.permute.xlu0 0
  %5488 = vperm.xlu0 %5487, %v4326
  %v5489 = vpop.permute.xlu0 %5488
  %5492 = vset.pattern.permute.xlu0 0
  %5493 = vperm.xlu0 %5492, %v4328
  %v5494 = vpop.permute.xlu0 %5493
  %5497 = vset.pattern.permute.xlu0 0
  %5498 = vperm.xlu0 %5497, %v4330
  %v5499 = vpop.permute.xlu0 %5498
  %5502 = vset.pattern.permute.xlu0 0
  %5503 = vperm.xlu0 %5502, %v4332
  %v5504 = vpop.permute.xlu0 %5503
  %5507 = vset.pattern.permute.xlu0 0
  %5508 = vperm.xlu0 %5507, %v4334
  %v5509 = vpop.permute.xlu0 %5508
  %5512 = vset.pattern.permute.xlu0 0
  %5513 = vperm.xlu0 %5512, %v4336
  %v5514 = vpop.permute.xlu0 %5513
  %5517 = vset.pattern.permute.xlu0 0
  %5518 = vperm.xlu0 %5517, %v4338
  %v5519 = vpop.permute.xlu0 %5518
  %5522 = vset.pattern.permute.xlu0 0
  %5523 = vperm.xlu0 %5522, %v4340
  %v5524 = vpop.permute.xlu0 %5523
  %5527 = vset.pattern.permute.xlu0 0
  %5528 = vperm.xlu0 %5527, %v4342
  %v5529 = vpop.permute.xlu0 %5528
  %5532 = vset.pattern.permute.xlu0 0
  %5533 = vperm.xlu0 %5532, %v4344
  %v5534 = vpop.permute.xlu0 %5533
  %5537 = vset.pattern.permute.xlu0 0
  %5538 = vperm.xlu0 %5537, %v4346
  %v5539 = vpop.permute.xlu0 %5538
  %5542 = vset.pattern.permute.xlu0 0
  %5543 = vperm.xlu0 %5542, %v4348
  %v5544 = vpop.permute.xlu0 %5543
  %5547 = vset.pattern.permute.xlu0 0
  %5548 = vperm.xlu0 %5547, %v4350
  %v5549 = vpop.permute.xlu0 %5548
  %5552 = vset.pattern.permute.xlu0 0
  %5553 = vperm.xlu0 %5552, %v4352
  %v5554 = vpop.permute.xlu0 %5553
  %5557 = vset.pattern.permute.xlu0 0
  %5558 = vperm.xlu0 %5557, %v4354
  %v5559 = vpop.permute.xlu0 %5558
  %5562 = vset.pattern.permute.xlu0 0
  %5563 = vperm.xlu0 %5562, %v4356
  %v5564 = vpop.permute.xlu0 %5563
  %5567 = vset.pattern.permute.xlu0 0
  %5568 = vperm.xlu0 %5567, %v4358
  %v5569 = vpop.permute.xlu0 %5568
  %5572 = vset.pattern.permute.xlu0 0
  %5573 = vperm.xlu0 %5572, %v4360
  %v5574 = vpop.permute.xlu0 %5573
  %5577 = vset.pattern.permute.xlu0 0
  %5578 = vperm.xlu0 %5577, %v4362
  %v5579 = vpop.permute.xlu0 %5578
  %5582 = vset.pattern.permute.xlu0 0
  %5583 = vperm.xlu0 %5582, %v4364
  %v5584 = vpop.permute.xlu0 %5583
  %5587 = vset.pattern.permute.xlu0 0
  %5588 = vperm.xlu0 %5587, %v4366
  %v5589 = vpop.permute.xlu0 %5588
  %5592 = vset.pattern.permute.xlu0 0
  %5593 = vperm.xlu0 %5592, %v4368
  %v5594 = vpop.permute.xlu0 %5593
  %5597 = vset.pattern.permute.xlu0 0
  %5598 = vperm.xlu0 %5597, %v4370
  %v5599 = vpop.permute.xlu0 %5598
  %5602 = vset.pattern.permute.xlu0 0
  %5603 = vperm.xlu0 %5602, %v4372
  %v5604 = vpop.permute.xlu0 %5603
  %5607 = vset.pattern.permute.xlu0 0
  %5608 = vperm.xlu0 %5607, %v4374
  %v5609 = vpop.permute.xlu0 %5608
  %5612 = vset.pattern.permute.xlu0 0
  %5613 = vperm.xlu0 %5612, %v4376
  %v5614 = vpop.permute.xlu0 %5613
  %5617 = vset.pattern.permute.xlu0 0
  %5618 = vperm.xlu0 %5617, %v4378
  %v5619 = vpop.permute.xlu0 %5618
  %5622 = vset.pattern.permute.xlu0 0
  %5623 = vperm.xlu0 %5622, %v4380
  %v5624 = vpop.permute.xlu0 %5623
  %5627 = vset.pattern.permute.xlu0 0
  %5628 = vperm.xlu0 %5627, %v4382
  %v5629 = vpop.permute.xlu0 %5628
  %5632 = vset.pattern.permute.xlu0 0
  %5633 = vperm.xlu0 %5632, %v4384
  %v5634 = vpop.permute.xlu0 %5633
  %5637 = vset.pattern.permute.xlu0 0
  %5638 = vperm.xlu0 %5637, %v4386
  %v5639 = vpop.permute.xlu0 %5638
  %5642 = vset.pattern.permute.xlu0 0
  %5643 = vperm.xlu0 %5642, %v4388
  %v5644 = vpop.permute.xlu0 %5643
  %5647 = vset.pattern.permute.xlu0 0
  %5648 = vperm.xlu0 %5647, %v4390
  %v5649 = vpop.permute.xlu0 %5648
  %5652 = vset.pattern.permute.xlu0 0
  %5653 = vperm.xlu0 %5652, %v4392
  %v5654 = vpop.permute.xlu0 %5653
  %5657 = vset.pattern.permute.xlu0 0
  %5658 = vperm.xlu0 %5657, %v4394
  %v5659 = vpop.permute.xlu0 %5658
  %5662 = vset.pattern.permute.xlu0 0
  %5663 = vperm.xlu0 %5662, %v4396
  %v5664 = vpop.permute.xlu0 %5663
  %5667 = vset.pattern.permute.xlu0 0
  %5668 = vperm.xlu0 %5667, %v4398
  %v5669 = vpop.permute.xlu0 %5668
  %5672 = vset.pattern.permute.xlu0 0
  %5673 = vperm.xlu0 %5672, %v4400
  %v5674 = vpop.permute.xlu0 %5673
  %5677 = vset.pattern.permute.xlu0 0
  %5678 = vperm.xlu0 %5677, %v4402
  %v5679 = vpop.permute.xlu0 %5678
  %5682 = vset.pattern.permute.xlu0 0
  %5683 = vperm.xlu0 %5682, %v4404
  %v5684 = vpop.permute.xlu0 %5683
  %5687 = vset.pattern.permute.xlu0 0
  %5688 = vperm.xlu0 %5687, %v4406
  %v5689 = vpop.permute.xlu0 %5688
  %5692 = vset.pattern.permute.xlu0 0
  %5693 = vperm.xlu0 %5692, %v4408
  %v5694 = vpop.permute.xlu0 %5693
  %5697 = vset.pattern.permute.xlu0 0
  %5698 = vperm.xlu0 %5697, %v4410
  %v5699 = vpop.permute.xlu0 %5698
  %5702 = vset.pattern.permute.xlu0 0
  %5703 = vperm.xlu0 %5702, %v4412
  %v5704 = vpop.permute.xlu0 %5703
  %5707 = vset.pattern.permute.xlu0 0
  %5708 = vperm.xlu0 %5707, %v4414
  %v5709 = vpop.permute.xlu0 %5708
  %5712 = vset.pattern.permute.xlu0 0
  %5713 = vperm.xlu0 %5712, %v4416
  %v5714 = vpop.permute.xlu0 %5713
  %5717 = vset.pattern.permute.xlu0 0
  %5718 = vperm.xlu0 %5717, %v4418
  %v5719 = vpop.permute.xlu0 %5718
  %5722 = vset.pattern.permute.xlu0 0
  %5723 = vperm.xlu0 %5722, %v4420
  %v5724 = vpop.permute.xlu0 %5723
  %5727 = vset.pattern.permute.xlu0 0
  %5728 = vperm.xlu0 %5727, %v4422
  %v5729 = vpop.permute.xlu0 %5728
  %5732 = vset.pattern.permute.xlu0 0
  %5733 = vperm.xlu0 %5732, %v4424
  %v5734 = vpop.permute.xlu0 %5733
  %5737 = vset.pattern.permute.xlu0 0
  %5738 = vperm.xlu0 %5737, %v4426
  %v5739 = vpop.permute.xlu0 %5738
  %5742 = vset.pattern.permute.xlu0 0
  %5743 = vperm.xlu0 %5742, %v4428
  %v5744 = vpop.permute.xlu0 %5743
  %5747 = vset.pattern.permute.xlu0 0
  %5748 = vperm.xlu0 %5747, %v4430
  %v5749 = vpop.permute.xlu0 %5748
  %5752 = vset.pattern.permute.xlu0 0
  %5753 = vperm.xlu0 %5752, %v4432
  %v5754 = vpop.permute.xlu0 %5753
  %5757 = vset.pattern.permute.xlu0 0
  %5758 = vperm.xlu0 %5757, %v4434
  %v5759 = vpop.permute.xlu0 %5758
  %5762 = vset.pattern.permute.xlu0 0
  %5763 = vperm.xlu0 %5762, %v4436
  %v5764 = vpop.permute.xlu0 %5763
  %5767 = vset.pattern.permute.xlu0 0
  %5768 = vperm.xlu0 %5767, %v4438
  %v5769 = vpop.permute.xlu0 %5768
  %5772 = vset.pattern.permute.xlu0 0
  %5773 = vperm.xlu0 %5772, %v4440
  %v5774 = vpop.permute.xlu0 %5773
  %5777 = vset.pattern.permute.xlu0 0
  %5778 = vperm.xlu0 %5777, %v4442
  %v5779 = vpop.permute.xlu0 %5778
  %5782 = vset.pattern.permute.xlu0 0
  %5783 = vperm.xlu0 %5782, %v4444
  %v5784 = vpop.permute.xlu0 %5783
  %5787 = vset.pattern.permute.xlu0 0
  %5788 = vperm.xlu0 %5787, %v4446
  %v5789 = vpop.permute.xlu0 %5788
  %5792 = vset.pattern.permute.xlu0 0
  %5793 = vperm.xlu0 %5792, %v4448
  %v5794 = vpop.permute.xlu0 %5793
  %5797 = vset.pattern.permute.xlu0 0
  %5798 = vperm.xlu0 %5797, %v4450
  %v5799 = vpop.permute.xlu0 %5798
  %5802 = vset.pattern.permute.xlu0 0
  %5803 = vperm.xlu0 %5802, %v4452
  %v5804 = vpop.permute.xlu0 %5803
  %5807 = vset.pattern.permute.xlu0 0
  %5808 = vperm.xlu0 %5807, %v4454
  %v5809 = vpop.permute.xlu0 %5808
  %5812 = vset.pattern.permute.xlu0 0
  %5813 = vperm.xlu0 %5812, %v4456
  %v5814 = vpop.permute.xlu0 %5813
  %5817 = vset.pattern.permute.xlu0 0
  %5818 = vperm.xlu0 %5817, %v4458
  %v5819 = vpop.permute.xlu0 %5818
  %5822 = vset.pattern.permute.xlu0 0
  %5823 = vperm.xlu0 %5822, %v4460
  %v5824 = vpop.permute.xlu0 %5823
  %5827 = vset.pattern.permute.xlu0 0
  %5828 = vperm.xlu0 %5827, %v4462
  %v5829 = vpop.permute.xlu0 %5828
  %5832 = vset.pattern.permute.xlu0 0
  %5833 = vperm.xlu0 %5832, %v4464
  %v5834 = vpop.permute.xlu0 %5833
  %5837 = vset.pattern.permute.xlu0 0
  %5838 = vperm.xlu0 %5837, %v4466
  %v5839 = vpop.permute.xlu0 %5838
  %5842 = vset.pattern.permute.xlu0 0
  %5843 = vperm.xlu0 %5842, %v4468
  %v5844 = vpop.permute.xlu0 %5843
  %5847 = vset.pattern.permute.xlu0 0
  %5848 = vperm.xlu0 %5847, %v4470
  %v5849 = vpop.permute.xlu0 %5848
  %5852 = vset.pattern.permute.xlu0 0
  %5853 = vperm.xlu0 %5852, %v4472
  %v5854 = vpop.permute.xlu0 %5853
  %5857 = vset.pattern.permute.xlu0 0
  %5858 = vperm.xlu0 %5857, %v4474
  %v5859 = vpop.permute.xlu0 %5858
  %5862 = vset.pattern.permute.xlu0 0
  %5863 = vperm.xlu0 %5862, %v4476
  %v5864 = vpop.permute.xlu0 %5863
  %5867 = vset.pattern.permute.xlu0 0
  %5868 = vperm.xlu0 %5867, %v4478
  %v5869 = vpop.permute.xlu0 %5868
  %5872 = vset.pattern.permute.xlu0 0
  %5873 = vperm.xlu0 %5872, %v4480
  %v5874 = vpop.permute.xlu0 %5873
  %5877 = vset.pattern.permute.xlu0 0
  %5878 = vperm.xlu0 %5877, %v4482
  %v5879 = vpop.permute.xlu0 %5878
  %5882 = vset.pattern.permute.xlu0 0
  %5883 = vperm.xlu0 %5882, %v4484
  %v5884 = vpop.permute.xlu0 %5883
  %5887 = vset.pattern.permute.xlu0 0
  %5888 = vperm.xlu0 %5887, %v4486
  %v5889 = vpop.permute.xlu0 %5888
  %5892 = vset.pattern.permute.xlu0 0
  %5893 = vperm.xlu0 %5892, %v4488
  %v5894 = vpop.permute.xlu0 %5893
  %5897 = vset.pattern.permute.xlu0 0
  %5898 = vperm.xlu0 %5897, %v4490
  %v5899 = vpop.permute.xlu0 %5898
  %5902 = vset.pattern.permute.xlu0 0
  %5903 = vperm.xlu0 %5902, %v4492
  %v5904 = vpop.permute.xlu0 %5903
  %5907 = vset.pattern.permute.xlu0 0
  %5908 = vperm.xlu0 %5907, %v4494
  %v5909 = vpop.permute.xlu0 %5908
  %5912 = vset.pattern.permute.xlu0 0
  %5913 = vperm.xlu0 %5912, %v4496
  %v5914 = vpop.permute.xlu0 %5913
  %5917 = vset.pattern.permute.xlu0 0
  %5918 = vperm.xlu0 %5917, %v4498
  %v5919 = vpop.permute.xlu0 %5918
  %5922 = vset.pattern.permute.xlu0 0
  %5923 = vperm.xlu0 %5922, %v4500
  %v5924 = vpop.permute.xlu0 %5923
  %5927 = vset.pattern.permute.xlu0 0
  %5928 = vperm.xlu0 %5927, %v4502
  %v5929 = vpop.permute.xlu0 %5928
  %5932 = vset.pattern.permute.xlu0 0
  %5933 = vperm.xlu0 %5932, %v4504
  %v5934 = vpop.permute.xlu0 %5933
  %5937 = vset.pattern.permute.xlu0 0
  %5938 = vperm.xlu0 %5937, %v4506
  %v5939 = vpop.permute.xlu0 %5938
  %5942 = vset.pattern.permute.xlu0 0
  %5943 = vperm.xlu0 %5942, %v4508
  %v5944 = vpop.permute.xlu0 %5943
  %5947 = vset.pattern.permute.xlu0 0
  %5948 = vperm.xlu0 %5947, %v4510
  %v5949 = vpop.permute.xlu0 %5948
  %5952 = vset.pattern.permute.xlu0 0
  %5953 = vperm.xlu0 %5952, %v4512
  %v5954 = vpop.permute.xlu0 %5953
  %5957 = vset.pattern.permute.xlu0 0
  %5958 = vperm.xlu0 %5957, %v4514
  %v5959 = vpop.permute.xlu0 %5958
  %5962 = vset.pattern.permute.xlu0 0
  %5963 = vperm.xlu0 %5962, %v4516
  %v5964 = vpop.permute.xlu0 %5963
  %5967 = vset.pattern.permute.xlu0 0
  %5968 = vperm.xlu0 %5967, %v4518
  %v5969 = vpop.permute.xlu0 %5968
  %5972 = vset.pattern.permute.xlu0 0
  %5973 = vperm.xlu0 %5972, %v4520
  %v5974 = vpop.permute.xlu0 %5973
  %5977 = vset.pattern.permute.xlu0 0
  %5978 = vperm.xlu0 %5977, %v4522
  %v5979 = vpop.permute.xlu0 %5978
  %5982 = vset.pattern.permute.xlu0 0
  %5983 = vperm.xlu0 %5982, %v4524
  %v5984 = vpop.permute.xlu0 %5983
  %5987 = vset.pattern.permute.xlu0 0
  %5988 = vperm.xlu0 %5987, %v4526
  %v5989 = vpop.permute.xlu0 %5988
  %5992 = vset.pattern.permute.xlu0 0
  %5993 = vperm.xlu0 %5992, %v4528
  %v5994 = vpop.permute.xlu0 %5993
  %5997 = vset.pattern.permute.xlu0 0
  %5998 = vperm.xlu0 %5997, %v4530
  %v5999 = vpop.permute.xlu0 %5998
  %6002 = vset.pattern.permute.xlu0 0
  %6003 = vperm.xlu0 %6002, %v4532
  %v6004 = vpop.permute.xlu0 %6003
  %6007 = vset.pattern.permute.xlu0 0
  %6008 = vperm.xlu0 %6007, %v4534
  %v6009 = vpop.permute.xlu0 %6008
  %6012 = vset.pattern.permute.xlu0 0
  %6013 = vperm.xlu0 %6012, %v4536
  %v6014 = vpop.permute.xlu0 %6013
  %6017 = vset.pattern.permute.xlu0 0
  %6018 = vperm.xlu0 %6017, %v4538
  %v6019 = vpop.permute.xlu0 %6018
  %6022 = vset.pattern.permute.xlu0 0
  %6023 = vperm.xlu0 %6022, %v4540
  %v6024 = vpop.permute.xlu0 %6023
  %6027 = vset.pattern.permute.xlu0 0
  %6028 = vperm.xlu0 %6027, %v4542
  %v6029 = vpop.permute.xlu0 %6028
  %6032 = vset.pattern.permute.xlu0 0
  %6033 = vperm.xlu0 %6032, %v4544
  %v6034 = vpop.permute.xlu0 %6033
  %6037 = vset.pattern.permute.xlu0 0
  %6038 = vperm.xlu0 %6037, %v4546
  %v6039 = vpop.permute.xlu0 %6038
  %6042 = vset.pattern.permute.xlu0 0
  %6043 = vperm.xlu0 %6042, %v4548
  %v6044 = vpop.permute.xlu0 %6043
  %6047 = vset.pattern.permute.xlu0 0
  %6048 = vperm.xlu0 %6047, %v4550
  %v6049 = vpop.permute.xlu0 %6048
  %6052 = vset.pattern.permute.xlu0 0
  %6053 = vperm.xlu0 %6052, %v4552
  %v6054 = vpop.permute.xlu0 %6053
  %6057 = vset.pattern.permute.xlu0 0
  %6058 = vperm.xlu0 %6057, %v4554
  %v6059 = vpop.permute.xlu0 %6058
  %6062 = vset.pattern.permute.xlu0 0
  %6063 = vperm.xlu0 %6062, %v4556
  %v6064 = vpop.permute.xlu0 %6063
  %6067 = vset.pattern.permute.xlu0 0
  %6068 = vperm.xlu0 %6067, %v4558
  %v6069 = vpop.permute.xlu0 %6068
  %6072 = vset.pattern.permute.xlu0 0
  %6073 = vperm.xlu0 %6072, %v4560
  %v6074 = vpop.permute.xlu0 %6073
  %6077 = vset.pattern.permute.xlu0 0
  %6078 = vperm.xlu0 %6077, %v4562
  %v6079 = vpop.permute.xlu0 %6078
  %6082 = vset.pattern.permute.xlu0 0
  %6083 = vperm.xlu0 %6082, %v4564
  %v6084 = vpop.permute.xlu0 %6083
  %6087 = vset.pattern.permute.xlu0 0
  %6088 = vperm.xlu0 %6087, %v4566
  %v6089 = vpop.permute.xlu0 %6088
  %6092 = vset.pattern.permute.xlu0 0
  %6093 = vperm.xlu0 %6092, %v4568
  %v6094 = vpop.permute.xlu0 %6093
  %6097 = vset.pattern.permute.xlu0 0
  %6098 = vperm.xlu0 %6097, %v4570
  %v6099 = vpop.permute.xlu0 %6098
  %6102 = vset.pattern.permute.xlu0 0
  %6103 = vperm.xlu0 %6102, %v4572
  %v6104 = vpop.permute.xlu0 %6103
  %6107 = vset.pattern.permute.xlu0 0
  %6108 = vperm.xlu0 %6107, %v4574
  %v6109 = vpop.permute.xlu0 %6108
  %6112 = vset.pattern.permute.xlu0 0
  %6113 = vperm.xlu0 %6112, %v4576
  %v6114 = vpop.permute.xlu0 %6113
  %6117 = vset.pattern.permute.xlu0 0
  %6118 = vperm.xlu0 %6117, %v4578
  %v6119 = vpop.permute.xlu0 %6118
  %6122 = vset.pattern.permute.xlu0 0
  %6123 = vperm.xlu0 %6122, %v4580
  %v6124 = vpop.permute.xlu0 %6123
  %6127 = vset.pattern.permute.xlu0 0
  %6128 = vperm.xlu0 %6127, %v4582
  %v6129 = vpop.permute.xlu0 %6128
  %6132 = vset.pattern.permute.xlu0 0
  %6133 = vperm.xlu0 %6132, %v4584
  %v6134 = vpop.permute.xlu0 %6133
  %6137 = vset.pattern.permute.xlu0 0
  %6138 = vperm.xlu0 %6137, %v4586
  %v6139 = vpop.permute.xlu0 %6138
  %6142 = vset.pattern.permute.xlu0 0
  %6143 = vperm.xlu0 %6142, %v4588
  %v6144 = vpop.permute.xlu0 %6143
  %6147 = vset.pattern.permute.xlu0 0
  %6148 = vperm.xlu0 %6147, %v4590
  %v6149 = vpop.permute.xlu0 %6148
  %6152 = vset.pattern.permute.xlu0 0
  %6153 = vperm.xlu0 %6152, %v4592
  %v6154 = vpop.permute.xlu0 %6153
  %6157 = vset.pattern.permute.xlu0 0
  %6158 = vperm.xlu0 %6157, %v4594
  %v6159 = vpop.permute.xlu0 %6158
  %6162 = vset.pattern.permute.xlu0 0
  %6163 = vperm.xlu0 %6162, %v4596
  %v6164 = vpop.permute.xlu0 %6163
  %6167 = vset.pattern.permute.xlu0 0
  %6168 = vperm.xlu0 %6167, %v4598
  %v6169 = vpop.permute.xlu0 %6168
  %6172 = vset.pattern.permute.xlu0 0
  %6173 = vperm.xlu0 %6172, %v4600
  %v6174 = vpop.permute.xlu0 %6173
  %6177 = vset.pattern.permute.xlu0 0
  %6178 = vperm.xlu0 %6177, %v4602
  %v6179 = vpop.permute.xlu0 %6178
  %6182 = vset.pattern.permute.xlu0 0
  %6183 = vperm.xlu0 %6182, %v4604
  %v6184 = vpop.permute.xlu0 %6183
  %6187 = vset.pattern.permute.xlu0 0
  %6188 = vperm.xlu0 %6187, %v4606
  %v6189 = vpop.permute.xlu0 %6188
  %6192 = vset.pattern.permute.xlu0 0
  %6193 = vperm.xlu0 %6192, %v4608
  %v6194 = vpop.permute.xlu0 %6193
  %6197 = vset.pattern.permute.xlu0 0
  %6198 = vperm.xlu0 %6197, %v4610
  %v6199 = vpop.permute.xlu0 %6198
  %6202 = vset.pattern.permute.xlu0 0
  %6203 = vperm.xlu0 %6202, %v4612
  %v6204 = vpop.permute.xlu0 %6203
  %6207 = vset.pattern.permute.xlu0 0
  %6208 = vperm.xlu0 %6207, %v4614
  %v6209 = vpop.permute.xlu0 %6208
  %6212 = vset.pattern.permute.xlu0 0
  %6213 = vperm.xlu0 %6212, %v4616
  %v6214 = vpop.permute.xlu0 %6213
  %6217 = vset.pattern.permute.xlu0 0
  %6218 = vperm.xlu0 %6217, %v4618
  %v6219 = vpop.permute.xlu0 %6218
  %6222 = vset.pattern.permute.xlu0 0
  %6223 = vperm.xlu0 %6222, %v4620
  %v6224 = vpop.permute.xlu0 %6223
  %6227 = vset.pattern.permute.xlu0 0
  %6228 = vperm.xlu0 %6227, %v4622
  %v6229 = vpop.permute.xlu0 %6228
  %6232 = vset.pattern.permute.xlu0 0
  %6233 = vperm.xlu0 %6232, %v4624
  %v6234 = vpop.permute.xlu0 %6233
  %6237 = vset.pattern.permute.xlu0 0
  %6238 = vperm.xlu0 %6237, %v4626
  %v6239 = vpop.permute.xlu0 %6238
  %6242 = vset.pattern.permute.xlu0 0
  %6243 = vperm.xlu0 %6242, %v4628
  %v6244 = vpop.permute.xlu0 %6243
  %6247 = vset.pattern.permute.xlu0 0
  %6248 = vperm.xlu0 %6247, %v4630
  %v6249 = vpop.permute.xlu0 %6248
  %6252 = vset.pattern.permute.xlu0 0
  %6253 = vperm.xlu0 %6252, %v4632
  %v6254 = vpop.permute.xlu0 %6253
  %6257 = vset.pattern.permute.xlu0 0
  %6258 = vperm.xlu0 %6257, %v4634
  %v6259 = vpop.permute.xlu0 %6258
  %6262 = vset.pattern.permute.xlu0 0
  %6263 = vperm.xlu0 %6262, %v4636
  %v6264 = vpop.permute.xlu0 %6263
  %6267 = vset.pattern.permute.xlu0 0
  %6268 = vperm.xlu0 %6267, %v4638
  %v6269 = vpop.permute.xlu0 %6268
  %6272 = vset.pattern.permute.xlu0 0
  %6273 = vperm.xlu0 %6272, %v4640
  %v6274 = vpop.permute.xlu0 %6273
  %6277 = vset.pattern.permute.xlu0 0
  %6278 = vperm.xlu0 %6277, %v4642
  %v6279 = vpop.permute.xlu0 %6278
  %6282 = vset.pattern.permute.xlu0 0
  %6283 = vperm.xlu0 %6282, %v4644
  %v6284 = vpop.permute.xlu0 %6283
  %6287 = vset.pattern.permute.xlu0 0
  %6288 = vperm.xlu0 %6287, %v4646
  %v6289 = vpop.permute.xlu0 %6288
  %6292 = vset.pattern.permute.xlu0 0
  %6293 = vperm.xlu0 %6292, %v4648
  %v6294 = vpop.permute.xlu0 %6293
  %6297 = vset.pattern.permute.xlu0 0
  %6298 = vperm.xlu0 %6297, %v4650
  %v6299 = vpop.permute.xlu0 %6298
  %6302 = vset.pattern.permute.xlu0 0
  %6303 = vperm.xlu0 %6302, %v4652
  %v6304 = vpop.permute.xlu0 %6303
  %6307 = vset.pattern.permute.xlu0 0
  %6308 = vperm.xlu0 %6307, %v4654
  %v6309 = vpop.permute.xlu0 %6308
  %6312 = vset.pattern.permute.xlu0 0
  %6313 = vperm.xlu0 %6312, %v4656
  %v6314 = vpop.permute.xlu0 %6313
  %6317 = vset.pattern.permute.xlu0 0
  %6318 = vperm.xlu0 %6317, %v4658
  %v6319 = vpop.permute.xlu0 %6318
  %6322 = vset.pattern.permute.xlu0 0
  %6323 = vperm.xlu0 %6322, %v4660
  %v6324 = vpop.permute.xlu0 %6323
  %6327 = vset.pattern.permute.xlu0 0
  %6328 = vperm.xlu0 %6327, %v4662
  %v6329 = vpop.permute.xlu0 %6328
  %6332 = vset.pattern.permute.xlu0 0
  %6333 = vperm.xlu0 %6332, %v4664
  %v6334 = vpop.permute.xlu0 %6333
  %6337 = vset.pattern.permute.xlu0 0
  %6338 = vperm.xlu0 %6337, %v4666
  %v6339 = vpop.permute.xlu0 %6338
  %6342 = vset.pattern.permute.xlu0 0
  %6343 = vperm.xlu0 %6342, %v4668
  %v6344 = vpop.permute.xlu0 %6343
  %6347 = vset.pattern.permute.xlu0 0
  %6348 = vperm.xlu0 %6347, %v4670
  %v6349 = vpop.permute.xlu0 %6348
  %6352 = vset.pattern.permute.xlu0 0
  %6353 = vperm.xlu0 %6352, %v4672
  %v6354 = vpop.permute.xlu0 %6353
  %6357 = vset.pattern.permute.xlu0 0
  %6358 = vperm.xlu0 %6357, %v4674
  %v6359 = vpop.permute.xlu0 %6358
  %6362 = vset.pattern.permute.xlu0 0
  %6363 = vperm.xlu0 %6362, %v4676
  %v6364 = vpop.permute.xlu0 %6363
  %6367 = vset.pattern.permute.xlu0 0
  %6368 = vperm.xlu0 %6367, %v4678
  %v6369 = vpop.permute.xlu0 %6368
  %6372 = vset.pattern.permute.xlu0 0
  %6373 = vperm.xlu0 %6372, %v4680
  %v6374 = vpop.permute.xlu0 %6373
  %6377 = vset.pattern.permute.xlu0 0
  %6378 = vperm.xlu0 %6377, %v4682
  %v6379 = vpop.permute.xlu0 %6378
  %6382 = vset.pattern.permute.xlu0 0
  %6383 = vperm.xlu0 %6382, %v4684
  %v6384 = vpop.permute.xlu0 %6383
  %6387 = vset.pattern.permute.xlu0 0
  %6388 = vperm.xlu0 %6387, %v4686
  %v6389 = vpop.permute.xlu0 %6388
  %6392 = vset.pattern.permute.xlu0 0
  %6393 = vperm.xlu0 %6392, %v4688
  %v6394 = vpop.permute.xlu0 %6393
  %6397 = vset.pattern.permute.xlu0 0
  %6398 = vperm.xlu0 %6397, %v4690
  %v6399 = vpop.permute.xlu0 %6398
  %6402 = vset.pattern.permute.xlu0 0
  %6403 = vperm.xlu0 %6402, %v4692
  %v6404 = vpop.permute.xlu0 %6403
  %6407 = vset.pattern.permute.xlu0 0
  %6408 = vperm.xlu0 %6407, %v4694
  %v6409 = vpop.permute.xlu0 %6408
  %6412 = vset.pattern.permute.xlu0 0
  %6413 = vperm.xlu0 %6412, %v4696
  %v6414 = vpop.permute.xlu0 %6413
  %6417 = vset.pattern.permute.xlu0 0
  %6418 = vperm.xlu0 %6417, %v4698
  %v6419 = vpop.permute.xlu0 %6418
  %6422 = vset.pattern.permute.xlu0 0
  %6423 = vperm.xlu0 %6422, %v4700
  %v6424 = vpop.permute.xlu0 %6423
  %6427 = vset.pattern.permute.xlu0 0
  %6428 = vperm.xlu0 %6427, %v4702
  %v6429 = vpop.permute.xlu0 %6428
  %v6431 = vmul.f32 %v4994, %v4703
  %v6432 = vmul.f32 %v4999, %v4704
  %v6433 = vmul.f32 %v5004, %v4705
  %v6434 = vmul.f32 %v5009, %v4706
  %v6435 = vmul.f32 %v5014, %v4707
  %v6436 = vmul.f32 %v5019, %v4708
  %v6437 = vmul.f32 %v5024, %v4709
  %v6438 = vmul.f32 %v5029, %v4710
  %v6439 = vmul.f32 %v5034, %v4711
  %v6440 = vmul.f32 %v5039, %v4712
  %v6441 = vmul.f32 %v5044, %v4713
  %v6442 = vmul.f32 %v5049, %v4714
  %v6443 = vmul.f32 %v5054, %v4715
  %v6444 = vmul.f32 %v5059, %v4716
  %v6445 = vmul.f32 %v5064, %v4717
  %v6446 = vmul.f32 %v5069, %v4718
  %v6447 = vmul.f32 %v5074, %v4719
  %v6448 = vmul.f32 %v5079, %v4720
  %v6449 = vmul.f32 %v5084, %v4721
  %v6450 = vmul.f32 %v5089, %v4722
  %v6451 = vmul.f32 %v5094, %v4723
  %v6452 = vmul.f32 %v5099, %v4724
  %v6453 = vmul.f32 %v5104, %v4725
  %v6454 = vmul.f32 %v5109, %v4726
  %v6455 = vmul.f32 %v5114, %v4727
  %v6456 = vmul.f32 %v5119, %v4728
  %v6457 = vmul.f32 %v5124, %v4729
  %v6458 = vmul.f32 %v5129, %v4730
  %v6459 = vmul.f32 %v5134, %v4731
  %v6460 = vmul.f32 %v5139, %v4732
  %v6461 = vmul.f32 %v5144, %v4733
  %v6462 = vmul.f32 %v5149, %v4734
  %v6463 = vmul.f32 %v5154, %v4735
  %v6464 = vmul.f32 %v5159, %v4736
  %v6465 = vmul.f32 %v5164, %v4737
  %v6466 = vmul.f32 %v5169, %v4738
  %v6467 = vmul.f32 %v5174, %v4739
  %v6468 = vmul.f32 %v5179, %v4740
  %v6469 = vmul.f32 %v5184, %v4741
  %v6470 = vmul.f32 %v5189, %v4742
  %v6471 = vmul.f32 %v5194, %v4743
  %v6472 = vmul.f32 %v5199, %v4744
  %v6473 = vmul.f32 %v5204, %v4745
  %v6474 = vmul.f32 %v5209, %v4746
  %v6475 = vmul.f32 %v5214, %v4747
  %v6476 = vmul.f32 %v5219, %v4748
  %v6477 = vmul.f32 %v5224, %v4749
  %v6478 = vmul.f32 %v5229, %v4750
  %v6479 = vmul.f32 %v5234, %v4751
  %v6480 = vmul.f32 %v5239, %v4752
  %v6481 = vmul.f32 %v5244, %v4753
  %v6482 = vmul.f32 %v5249, %v4754
  %v6483 = vmul.f32 %v5254, %v4755
  %v6484 = vmul.f32 %v5259, %v4756
  %v6485 = vmul.f32 %v5264, %v4757
  %v6486 = vmul.f32 %v5269, %v4758
  %v6487 = vmul.f32 %v5274, %v4759
  %v6488 = vmul.f32 %v5279, %v4760
  %v6489 = vmul.f32 %v5284, %v4761
  %v6490 = vmul.f32 %v5289, %v4762
  %v6491 = vmul.f32 %v5294, %v4763
  %v6492 = vmul.f32 %v5299, %v4764
  %v6493 = vmul.f32 %v5304, %v4765
  %v6494 = vmul.f32 %v5309, %v4766
  %v6495 = vmul.f32 %v5314, %v4767
  %v6496 = vmul.f32 %v5319, %v4768
  %v6497 = vmul.f32 %v5324, %v4769
  %v6498 = vmul.f32 %v5329, %v4770
  %v6499 = vmul.f32 %v5334, %v4771
  %v6500 = vmul.f32 %v5339, %v4772
  %v6501 = vmul.f32 %v5344, %v4773
  %v6502 = vmul.f32 %v5349, %v4774
  %v6503 = vmul.f32 %v5354, %v4775
  %v6504 = vmul.f32 %v5359, %v4776
  %v6505 = vmul.f32 %v5364, %v4777
  %v6506 = vmul.f32 %v5369, %v4778
  %v6507 = vmul.f32 %v5374, %v4779
  %v6508 = vmul.f32 %v5379, %v4780
  %v6509 = vmul.f32 %v5384, %v4781
  %v6510 = vmul.f32 %v5389, %v4782
  %v6511 = vmul.f32 %v5394, %v4783
  %v6512 = vmul.f32 %v5399, %v4784
  %v6513 = vmul.f32 %v5404, %v4785
  %v6514 = vmul.f32 %v5409, %v4786
  %v6515 = vmul.f32 %v5414, %v4787
  %v6516 = vmul.f32 %v5419, %v4788
  %v6517 = vmul.f32 %v5424, %v4789
  %v6518 = vmul.f32 %v5429, %v4790
  %v6519 = vmul.f32 %v5434, %v4791
  %v6520 = vmul.f32 %v5439, %v4792
  %v6521 = vmul.f32 %v5444, %v4793
  %v6522 = vmul.f32 %v5449, %v4794
  %v6523 = vmul.f32 %v5454, %v4795
  %v6524 = vmul.f32 %v5459, %v4796
  %v6525 = vmul.f32 %v5464, %v4797
  %v6526 = vmul.f32 %v5469, %v4798
  %v6527 = vmul.f32 %v5474, %v4799
  %v6528 = vmul.f32 %v5479, %v4800
  %v6529 = vmul.f32 %v5484, %v4801
  %v6530 = vmul.f32 %v5489, %v4802
  %v6531 = vmul.f32 %v5494, %v4803
  %v6532 = vmul.f32 %v5499, %v4804
  %v6533 = vmul.f32 %v5504, %v4805
  %v6534 = vmul.f32 %v5509, %v4806
  %v6535 = vmul.f32 %v5514, %v4807
  %v6536 = vmul.f32 %v5519, %v4808
  %v6537 = vmul.f32 %v5524, %v4809
  %v6538 = vmul.f32 %v5529, %v4810
  %v6539 = vmul.f32 %v5534, %v4811
  %v6540 = vmul.f32 %v5539, %v4812
  %v6541 = vmul.f32 %v5544, %v4813
  %v6542 = vmul.f32 %v5549, %v4814
  %v6543 = vmul.f32 %v5554, %v4815
  %v6544 = vmul.f32 %v5559, %v4816
  %v6545 = vmul.f32 %v5564, %v4817
  %v6546 = vmul.f32 %v5569, %v4818
  %v6547 = vmul.f32 %v5574, %v4819
  %v6548 = vmul.f32 %v5579, %v4820
  %v6549 = vmul.f32 %v5584, %v4821
  %v6550 = vmul.f32 %v5589, %v4822
  %v6551 = vmul.f32 %v5594, %v4823
  %v6552 = vmul.f32 %v5599, %v4824
  %v6553 = vmul.f32 %v5604, %v4825
  %v6554 = vmul.f32 %v5609, %v4826
  %v6555 = vmul.f32 %v5614, %v4827
  %v6556 = vmul.f32 %v5619, %v4828
  %v6557 = vmul.f32 %v5624, %v4829
  %v6558 = vmul.f32 %v5629, %v4830
  %v6559 = vmul.f32 %v5634, %v4831
  %v6560 = vmul.f32 %v5639, %v4832
  %v6561 = vmul.f32 %v5644, %v4833
  %v6562 = vmul.f32 %v5649, %v4834
  %v6563 = vmul.f32 %v5654, %v4835
  %v6564 = vmul.f32 %v5659, %v4836
  %v6565 = vmul.f32 %v5664, %v4837
  %v6566 = vmul.f32 %v5669, %v4838
  %v6567 = vmul.f32 %v5674, %v4839
  %v6568 = vmul.f32 %v5679, %v4840
  %v6569 = vmul.f32 %v5684, %v4841
  %v6570 = vmul.f32 %v5689, %v4842
  %v6571 = vmul.f32 %v5694, %v4843
  %v6572 = vmul.f32 %v5699, %v4844
  %v6573 = vmul.f32 %v5704, %v4845
  %v6574 = vmul.f32 %v5709, %v4846
  %v6575 = vmul.f32 %v5714, %v4847
  %v6576 = vmul.f32 %v5719, %v4848
  %v6577 = vmul.f32 %v5724, %v4849
  %v6578 = vmul.f32 %v5729, %v4850
  %v6579 = vmul.f32 %v5734, %v4851
  %v6580 = vmul.f32 %v5739, %v4852
  %v6581 = vmul.f32 %v5744, %v4853
  %v6582 = vmul.f32 %v5749, %v4854
  %v6583 = vmul.f32 %v5754, %v4855
  %v6584 = vmul.f32 %v5759, %v4856
  %v6585 = vmul.f32 %v5764, %v4857
  %v6586 = vmul.f32 %v5769, %v4858
  %v6587 = vmul.f32 %v5774, %v4859
  %v6588 = vmul.f32 %v5779, %v4860
  %v6589 = vmul.f32 %v5784, %v4861
  %v6590 = vmul.f32 %v5789, %v4862
  %v6591 = vmul.f32 %v5794, %v4863
  %v6592 = vmul.f32 %v5799, %v4864
  %v6593 = vmul.f32 %v5804, %v4865
  %v6594 = vmul.f32 %v5809, %v4866
  %v6595 = vmul.f32 %v5814, %v4867
  %v6596 = vmul.f32 %v5819, %v4868
  %v6597 = vmul.f32 %v5824, %v4869
  %v6598 = vmul.f32 %v5829, %v4870
  %v6599 = vmul.f32 %v5834, %v4871
  %v6600 = vmul.f32 %v5839, %v4872
  %v6601 = vmul.f32 %v5844, %v4873
  %v6602 = vmul.f32 %v5849, %v4874
  %v6603 = vmul.f32 %v5854, %v4875
  %v6604 = vmul.f32 %v5859, %v4876
  %v6605 = vmul.f32 %v5864, %v4877
  %v6606 = vmul.f32 %v5869, %v4878
  %v6607 = vmul.f32 %v5874, %v4879
  %v6608 = vmul.f32 %v5879, %v4880
  %v6609 = vmul.f32 %v5884, %v4881
  %v6610 = vmul.f32 %v5889, %v4882
  %v6611 = vmul.f32 %v5894, %v4883
  %v6612 = vmul.f32 %v5899, %v4884
  %v6613 = vmul.f32 %v5904, %v4885
  %v6614 = vmul.f32 %v5909, %v4886
  %v6615 = vmul.f32 %v5914, %v4887
  %v6616 = vmul.f32 %v5919, %v4888
  %v6617 = vmul.f32 %v5924, %v4889
  %v6618 = vmul.f32 %v5929, %v4890
  %v6619 = vmul.f32 %v5934, %v4891
  %v6620 = vmul.f32 %v5939, %v4892
  %v6621 = vmul.f32 %v5944, %v4893
  %v6622 = vmul.f32 %v5949, %v4894
  %v6623 = vmul.f32 %v5954, %v4895
  %v6624 = vmul.f32 %v5959, %v4896
  %v6625 = vmul.f32 %v5964, %v4897
  %v6626 = vmul.f32 %v5969, %v4898
  %v6627 = vmul.f32 %v5974, %v4899
  %v6628 = vmul.f32 %v5979, %v4900
  %v6629 = vmul.f32 %v5984, %v4901
  %v6630 = vmul.f32 %v5989, %v4902
  %v6631 = vmul.f32 %v5994, %v4903
  %v6632 = vmul.f32 %v5999, %v4904
  %v6633 = vmul.f32 %v6004, %v4905
  %v6634 = vmul.f32 %v6009, %v4906
  %v6635 = vmul.f32 %v6014, %v4907
  %v6636 = vmul.f32 %v6019, %v4908
  %v6637 = vmul.f32 %v6024, %v4909
  %v6638 = vmul.f32 %v6029, %v4910
  %v6639 = vmul.f32 %v6034, %v4911
  %v6640 = vmul.f32 %v6039, %v4912
  %v6641 = vmul.f32 %v6044, %v4913
  %v6642 = vmul.f32 %v6049, %v4914
  %v6643 = vmul.f32 %v6054, %v4915
  %v6644 = vmul.f32 %v6059, %v4916
  %v6645 = vmul.f32 %v6064, %v4917
  %v6646 = vmul.f32 %v6069, %v4918
  %v6647 = vmul.f32 %v6074, %v4919
  %v6648 = vmul.f32 %v6079, %v4920
  %v6649 = vmul.f32 %v6084, %v4921
  %v6650 = vmul.f32 %v6089, %v4922
  %v6651 = vmul.f32 %v6094, %v4923
  %v6652 = vmul.f32 %v6099, %v4924
  %v6653 = vmul.f32 %v6104, %v4925
  %v6654 = vmul.f32 %v6109, %v4926
  %v6655 = vmul.f32 %v6114, %v4927
  %v6656 = vmul.f32 %v6119, %v4928
  %v6657 = vmul.f32 %v6124, %v4929
  %v6658 = vmul.f32 %v6129, %v4930
  %v6659 = vmul.f32 %v6134, %v4931
  %v6660 = vmul.f32 %v6139, %v4932
  %v6661 = vmul.f32 %v6144, %v4933
  %v6662 = vmul.f32 %v6149, %v4934
  %v6663 = vmul.f32 %v6154, %v4935
  %v6664 = vmul.f32 %v6159, %v4936
  %v6665 = vmul.f32 %v6164, %v4937
  %v6666 = vmul.f32 %v6169, %v4938
  %v6667 = vmul.f32 %v6174, %v4939
  %v6668 = vmul.f32 %v6179, %v4940
  %v6669 = vmul.f32 %v6184, %v4941
  %v6670 = vmul.f32 %v6189, %v4942
  %v6671 = vmul.f32 %v6194, %v4943
  %v6672 = vmul.f32 %v6199, %v4944
  %v6673 = vmul.f32 %v6204, %v4945
  %v6674 = vmul.f32 %v6209, %v4946
  %v6675 = vmul.f32 %v6214, %v4947
  %v6676 = vmul.f32 %v6219, %v4948
  %v6677 = vmul.f32 %v6224, %v4949
  %v6678 = vmul.f32 %v6229, %v4950
  %v6679 = vmul.f32 %v6234, %v4951
  %v6680 = vmul.f32 %v6239, %v4952
  %v6681 = vmul.f32 %v6244, %v4953
  %v6682 = vmul.f32 %v6249, %v4954
  %v6683 = vmul.f32 %v6254, %v4955
  %v6684 = vmul.f32 %v6259, %v4956
  %v6685 = vmul.f32 %v6264, %v4957
  %v6686 = vmul.f32 %v6269, %v4958
  %v6687 = vmul.f32 %v6274, %v4959
  %v6688 = vmul.f32 %v6279, %v4960
  %v6689 = vmul.f32 %v6284, %v4961
  %v6690 = vmul.f32 %v6289, %v4962
  %v6691 = vmul.f32 %v6294, %v4963
  %v6692 = vmul.f32 %v6299, %v4964
  %v6693 = vmul.f32 %v6304, %v4965
  %v6694 = vmul.f32 %v6309, %v4966
  %v6695 = vmul.f32 %v6314, %v4967
  %v6696 = vmul.f32 %v6319, %v4968
  %v6697 = vmul.f32 %v6324, %v4969
  %v6698 = vmul.f32 %v6329, %v4970
  %v6699 = vmul.f32 %v6334, %v4971
  %v6700 = vmul.f32 %v6339, %v4972
  %v6701 = vmul.f32 %v6344, %v4973
  %v6702 = vmul.f32 %v6349, %v4974
  %v6703 = vmul.f32 %v6354, %v4975
  %v6704 = vmul.f32 %v6359, %v4976
  %v6705 = vmul.f32 %v6364, %v4977
  %v6706 = vmul.f32 %v6369, %v4978
  %v6707 = vmul.f32 %v6374, %v4979
  %v6708 = vmul.f32 %v6379, %v4980
  %v6709 = vmul.f32 %v6384, %v4981
  %v6710 = vmul.f32 %v6389, %v4982
  %v6711 = vmul.f32 %v6394, %v4983
  %v6712 = vmul.f32 %v6399, %v4984
  %v6713 = vmul.f32 %v6404, %v4985
  %v6714 = vmul.f32 %v6409, %v4986
  %v6715 = vmul.f32 %v6414, %v4987
  %v6716 = vmul.f32 %v6419, %v4988
  %v6717 = vmul.f32 %v6424, %v4989
  %v6718 = vmul.f32 %v6429, %v4990
  %vm6719 = vcmask 400384
  %6720 = vst.msk [vmem:[%s4] sm:$0xff] %vm6719, %v6431
  %6721 = vst.msk [vmem:[%s4 + $0x8] sm:$0xff] %vm6719, %v6432
  %6722 = vst.msk [vmem:[%s4 + $0x10] sm:$0xff] %vm6719, %v6433
  %6723 = vst.msk [vmem:[%s4 + $0x18] sm:$0xff] %vm6719, %v6434
  %6724 = vst.msk [vmem:[%s4 + $0x20] sm:$0xff] %vm6719, %v6435
  %6725 = vst.msk [vmem:[%s4 + $0x28] sm:$0xff] %vm6719, %v6436
  %6726 = vst.msk [vmem:[%s4 + $0x30] sm:$0xff] %vm6719, %v6437
  %6727 = vst.msk [vmem:[%s4 + $0x38] sm:$0xff] %vm6719, %v6438
  %6728 = vst.msk [vmem:[%s4 + $0x40] sm:$0xff] %vm6719, %v6439
  %6729 = vst.msk [vmem:[%s4 + $0x48] sm:$0xff] %vm6719, %v6440
  %6730 = vst.msk [vmem:[%s4 + $0x50] sm:$0xff] %vm6719, %v6441
  %6731 = vst.msk [vmem:[%s4 + $0x58] sm:$0xff] %vm6719, %v6442
  %6732 = vst.msk [vmem:[%s4 + $0x60] sm:$0xff] %vm6719, %v6443
  %6733 = vst.msk [vmem:[%s4 + $0x68] sm:$0xff] %vm6719, %v6444
  %6734 = vst.msk [vmem:[%s4 + $0x70] sm:$0xff] %vm6719, %v6445
  %6735 = vst.msk [vmem:[%s4 + $0x78] sm:$0xff] %vm6719, %v6446
  %6736 = vst.msk [vmem:[%s4 + $0x80] sm:$0xff] %vm6719, %v6447
  %6737 = vst.msk [vmem:[%s4 + $0x88] sm:$0xff] %vm6719, %v6448
  %6738 = vst.msk [vmem:[%s4 + $0x90] sm:$0xff] %vm6719, %v6449
  %6739 = vst.msk [vmem:[%s4 + $0x98] sm:$0xff] %vm6719, %v6450
  %6740 = vst.msk [vmem:[%s4 + $0xa0] sm:$0xff] %vm6719, %v6451
  %6741 = vst.msk [vmem:[%s4 + $0xa8] sm:$0xff] %vm6719, %v6452
  %6742 = vst.msk [vmem:[%s4 + $0xb0] sm:$0xff] %vm6719, %v6453
  %6743 = vst.msk [vmem:[%s4 + $0xb8] sm:$0xff] %vm6719, %v6454
  %6744 = vst.msk [vmem:[%s4 + $0xc0] sm:$0xff] %vm6719, %v6455
  %6745 = vst.msk [vmem:[%s4 + $0xc8] sm:$0xff] %vm6719, %v6456
  %6746 = vst.msk [vmem:[%s4 + $0xd0] sm:$0xff] %vm6719, %v6457
  %6747 = vst.msk [vmem:[%s4 + $0xd8] sm:$0xff] %vm6719, %v6458
  %6748 = vst.msk [vmem:[%s4 + $0xe0] sm:$0xff] %vm6719, %v6459
  %6749 = vst.msk [vmem:[%s4 + $0xe8] sm:$0xff] %vm6719, %v6460
  %6750 = vst.msk [vmem:[%s4 + $0xf0] sm:$0xff] %vm6719, %v6461
  %6751 = vst.msk [vmem:[%s4 + $0xf8] sm:$0xff] %vm6719, %v6462
  %6752 = vst.msk [vmem:[%s4 + $0x100] sm:$0xff] %vm6719, %v6463
  %6753 = vst.msk [vmem:[%s4 + $0x108] sm:$0xff] %vm6719, %v6464
  %6754 = vst.msk [vmem:[%s4 + $0x110] sm:$0xff] %vm6719, %v6465
  %6755 = vst.msk [vmem:[%s4 + $0x118] sm:$0xff] %vm6719, %v6466
  %6756 = vst.msk [vmem:[%s4 + $0x120] sm:$0xff] %vm6719, %v6467
  %6757 = vst.msk [vmem:[%s4 + $0x128] sm:$0xff] %vm6719, %v6468
  %6758 = vst.msk [vmem:[%s4 + $0x130] sm:$0xff] %vm6719, %v6469
  %6759 = vst.msk [vmem:[%s4 + $0x138] sm:$0xff] %vm6719, %v6470
  %6760 = vst.msk [vmem:[%s4 + $0x140] sm:$0xff] %vm6719, %v6471
  %6761 = vst.msk [vmem:[%s4 + $0x148] sm:$0xff] %vm6719, %v6472
  %6762 = vst.msk [vmem:[%s4 + $0x150] sm:$0xff] %vm6719, %v6473
  %6763 = vst.msk [vmem:[%s4 + $0x158] sm:$0xff] %vm6719, %v6474
  %6764 = vst.msk [vmem:[%s4 + $0x160] sm:$0xff] %vm6719, %v6475
  %6765 = vst.msk [vmem:[%s4 + $0x168] sm:$0xff] %vm6719, %v6476
  %6766 = vst.msk [vmem:[%s4 + $0x170] sm:$0xff] %vm6719, %v6477
  %6767 = vst.msk [vmem:[%s4 + $0x178] sm:$0xff] %vm6719, %v6478
  %6768 = vst.msk [vmem:[%s4 + $0x180] sm:$0xff] %vm6719, %v6479
  %6769 = vst.msk [vmem:[%s4 + $0x188] sm:$0xff] %vm6719, %v6480
  %6770 = vst.msk [vmem:[%s4 + $0x190] sm:$0xff] %vm6719, %v6481
  %6771 = vst.msk [vmem:[%s4 + $0x198] sm:$0xff] %vm6719, %v6482
  %6772 = vst.msk [vmem:[%s4 + $0x1a0] sm:$0xff] %vm6719, %v6483
  %6773 = vst.msk [vmem:[%s4 + $0x1a8] sm:$0xff] %vm6719, %v6484
  %6774 = vst.msk [vmem:[%s4 + $0x1b0] sm:$0xff] %vm6719, %v6485
  %6775 = vst.msk [vmem:[%s4 + $0x1b8] sm:$0xff] %vm6719, %v6486
  %6776 = vst.msk [vmem:[%s4 + $0x1c0] sm:$0xff] %vm6719, %v6487
  %6777 = vst.msk [vmem:[%s4 + $0x1c8] sm:$0xff] %vm6719, %v6488
  %6778 = vst.msk [vmem:[%s4 + $0x1d0] sm:$0xff] %vm6719, %v6489
  %6779 = vst.msk [vmem:[%s4 + $0x1d8] sm:$0xff] %vm6719, %v6490
  %6780 = vst.msk [vmem:[%s4 + $0x1e0] sm:$0xff] %vm6719, %v6491
  %6781 = vst.msk [vmem:[%s4 + $0x1e8] sm:$0xff] %vm6719, %v6492
  %6782 = vst.msk [vmem:[%s4 + $0x1f0] sm:$0xff] %vm6719, %v6493
  %6783 = vst.msk [vmem:[%s4 + $0x1f8] sm:$0xff] %vm6719, %v6494
  %6784 = vst.msk [vmem:[%s4 + $0x200] sm:$0xff] %vm6719, %v6495
  %6785 = vst.msk [vmem:[%s4 + $0x208] sm:$0xff] %vm6719, %v6496
  %6786 = vst.msk [vmem:[%s4 + $0x210] sm:$0xff] %vm6719, %v6497
  %6787 = vst.msk [vmem:[%s4 + $0x218] sm:$0xff] %vm6719, %v6498
  %6788 = vst.msk [vmem:[%s4 + $0x220] sm:$0xff] %vm6719, %v6499
  %6789 = vst.msk [vmem:[%s4 + $0x228] sm:$0xff] %vm6719, %v6500
  %6790 = vst.msk [vmem:[%s4 + $0x230] sm:$0xff] %vm6719, %v6501
  %6791 = vst.msk [vmem:[%s4 + $0x238] sm:$0xff] %vm6719, %v6502
  %6792 = vst.msk [vmem:[%s4 + $0x240] sm:$0xff] %vm6719, %v6503
  %6793 = vst.msk [vmem:[%s4 + $0x248] sm:$0xff] %vm6719, %v6504
  %6794 = vst.msk [vmem:[%s4 + $0x250] sm:$0xff] %vm6719, %v6505
  %6795 = vst.msk [vmem:[%s4 + $0x258] sm:$0xff] %vm6719, %v6506
  %6796 = vst.msk [vmem:[%s4 + $0x260] sm:$0xff] %vm6719, %v6507
  %6797 = vst.msk [vmem:[%s4 + $0x268] sm:$0xff] %vm6719, %v6508
  %6798 = vst.msk [vmem:[%s4 + $0x270] sm:$0xff] %vm6719, %v6509
  %6799 = vst.msk [vmem:[%s4 + $0x278] sm:$0xff] %vm6719, %v6510
  %6800 = vst.msk [vmem:[%s4 + $0x280] sm:$0xff] %vm6719, %v6511
  %6801 = vst.msk [vmem:[%s4 + $0x288] sm:$0xff] %vm6719, %v6512
  %6802 = vst.msk [vmem:[%s4 + $0x290] sm:$0xff] %vm6719, %v6513
  %6803 = vst.msk [vmem:[%s4 + $0x298] sm:$0xff] %vm6719, %v6514
  %6804 = vst.msk [vmem:[%s4 + $0x2a0] sm:$0xff] %vm6719, %v6515
  %6805 = vst.msk [vmem:[%s4 + $0x2a8] sm:$0xff] %vm6719, %v6516
  %6806 = vst.msk [vmem:[%s4 + $0x2b0] sm:$0xff] %vm6719, %v6517
  %6807 = vst.msk [vmem:[%s4 + $0x2b8] sm:$0xff] %vm6719, %v6518
  %6808 = vst.msk [vmem:[%s4 + $0x2c0] sm:$0xff] %vm6719, %v6519
  %6809 = vst.msk [vmem:[%s4 + $0x2c8] sm:$0xff] %vm6719, %v6520
  %6810 = vst.msk [vmem:[%s4 + $0x2d0] sm:$0xff] %vm6719, %v6521
  %6811 = vst.msk [vmem:[%s4 + $0x2d8] sm:$0xff] %vm6719, %v6522
  %6812 = vst.msk [vmem:[%s4 + $0x2e0] sm:$0xff] %vm6719, %v6523
  %6813 = vst.msk [vmem:[%s4 + $0x2e8] sm:$0xff] %vm6719, %v6524
  %6814 = vst.msk [vmem:[%s4 + $0x2f0] sm:$0xff] %vm6719, %v6525
  %6815 = vst.msk [vmem:[%s4 + $0x2f8] sm:$0xff] %vm6719, %v6526
  %6816 = vst.msk [vmem:[%s4 + $0x300] sm:$0xff] %vm6719, %v6527
  %6817 = vst.msk [vmem:[%s4 + $0x308] sm:$0xff] %vm6719, %v6528
  %6818 = vst.msk [vmem:[%s4 + $0x310] sm:$0xff] %vm6719, %v6529
  %6819 = vst.msk [vmem:[%s4 + $0x318] sm:$0xff] %vm6719, %v6530
  %6820 = vst.msk [vmem:[%s4 + $0x320] sm:$0xff] %vm6719, %v6531
  %6821 = vst.msk [vmem:[%s4 + $0x328] sm:$0xff] %vm6719, %v6532
  %6822 = vst.msk [vmem:[%s4 + $0x330] sm:$0xff] %vm6719, %v6533
  %6823 = vst.msk [vmem:[%s4 + $0x338] sm:$0xff] %vm6719, %v6534
  %6824 = vst.msk [vmem:[%s4 + $0x340] sm:$0xff] %vm6719, %v6535
  %6825 = vst.msk [vmem:[%s4 + $0x348] sm:$0xff] %vm6719, %v6536
  %6826 = vst.msk [vmem:[%s4 + $0x350] sm:$0xff] %vm6719, %v6537
  %6827 = vst.msk [vmem:[%s4 + $0x358] sm:$0xff] %vm6719, %v6538
  %6828 = vst.msk [vmem:[%s4 + $0x360] sm:$0xff] %vm6719, %v6539
  %6829 = vst.msk [vmem:[%s4 + $0x368] sm:$0xff] %vm6719, %v6540
  %6830 = vst.msk [vmem:[%s4 + $0x370] sm:$0xff] %vm6719, %v6541
  %6831 = vst.msk [vmem:[%s4 + $0x378] sm:$0xff] %vm6719, %v6542
  %6832 = vst.msk [vmem:[%s4 + $0x380] sm:$0xff] %vm6719, %v6543
  %6833 = vst.msk [vmem:[%s4 + $0x388] sm:$0xff] %vm6719, %v6544
  %6834 = vst.msk [vmem:[%s4 + $0x390] sm:$0xff] %vm6719, %v6545
  %6835 = vst.msk [vmem:[%s4 + $0x398] sm:$0xff] %vm6719, %v6546
  %6836 = vst.msk [vmem:[%s4 + $0x3a0] sm:$0xff] %vm6719, %v6547
  %6837 = vst.msk [vmem:[%s4 + $0x3a8] sm:$0xff] %vm6719, %v6548
  %6838 = vst.msk [vmem:[%s4 + $0x3b0] sm:$0xff] %vm6719, %v6549
  %6839 = vst.msk [vmem:[%s4 + $0x3b8] sm:$0xff] %vm6719, %v6550
  %6840 = vst.msk [vmem:[%s4 + $0x3c0] sm:$0xff] %vm6719, %v6551
  %6841 = vst.msk [vmem:[%s4 + $0x3c8] sm:$0xff] %vm6719, %v6552
  %6842 = vst.msk [vmem:[%s4 + $0x3d0] sm:$0xff] %vm6719, %v6553
  %6843 = vst.msk [vmem:[%s4 + $0x3d8] sm:$0xff] %vm6719, %v6554
  %6844 = vst.msk [vmem:[%s4 + $0x3e0] sm:$0xff] %vm6719, %v6555
  %6845 = vst.msk [vmem:[%s4 + $0x3e8] sm:$0xff] %vm6719, %v6556
  %6846 = vst.msk [vmem:[%s4 + $0x3f0] sm:$0xff] %vm6719, %v6557
  %6847 = vst.msk [vmem:[%s4 + $0x3f8] sm:$0xff] %vm6719, %v6558
  %6848 = vst.msk [vmem:[%s4 + $0x400] sm:$0xff] %vm6719, %v6559
  %6849 = vst.msk [vmem:[%s4 + $0x408] sm:$0xff] %vm6719, %v6560
  %6850 = vst.msk [vmem:[%s4 + $0x410] sm:$0xff] %vm6719, %v6561
  %6851 = vst.msk [vmem:[%s4 + $0x418] sm:$0xff] %vm6719, %v6562
  %6852 = vst.msk [vmem:[%s4 + $0x420] sm:$0xff] %vm6719, %v6563
  %6853 = vst.msk [vmem:[%s4 + $0x428] sm:$0xff] %vm6719, %v6564
  %6854 = vst.msk [vmem:[%s4 + $0x430] sm:$0xff] %vm6719, %v6565
  %6855 = vst.msk [vmem:[%s4 + $0x438] sm:$0xff] %vm6719, %v6566
  %6856 = vst.msk [vmem:[%s4 + $0x440] sm:$0xff] %vm6719, %v6567
  %6857 = vst.msk [vmem:[%s4 + $0x448] sm:$0xff] %vm6719, %v6568
  %6858 = vst.msk [vmem:[%s4 + $0x450] sm:$0xff] %vm6719, %v6569
  %6859 = vst.msk [vmem:[%s4 + $0x458] sm:$0xff] %vm6719, %v6570
  %6860 = vst.msk [vmem:[%s4 + $0x460] sm:$0xff] %vm6719, %v6571
  %6861 = vst.msk [vmem:[%s4 + $0x468] sm:$0xff] %vm6719, %v6572
  %6862 = vst.msk [vmem:[%s4 + $0x470] sm:$0xff] %vm6719, %v6573
  %6863 = vst.msk [vmem:[%s4 + $0x478] sm:$0xff] %vm6719, %v6574
  %6864 = vst.msk [vmem:[%s4 + $0x480] sm:$0xff] %vm6719, %v6575
  %6865 = vst.msk [vmem:[%s4 + $0x488] sm:$0xff] %vm6719, %v6576
  %6866 = vst.msk [vmem:[%s4 + $0x490] sm:$0xff] %vm6719, %v6577
  %6867 = vst.msk [vmem:[%s4 + $0x498] sm:$0xff] %vm6719, %v6578
  %6868 = vst.msk [vmem:[%s4 + $0x4a0] sm:$0xff] %vm6719, %v6579
  %6869 = vst.msk [vmem:[%s4 + $0x4a8] sm:$0xff] %vm6719, %v6580
  %6870 = vst.msk [vmem:[%s4 + $0x4b0] sm:$0xff] %vm6719, %v6581
  %6871 = vst.msk [vmem:[%s4 + $0x4b8] sm:$0xff] %vm6719, %v6582
  %6872 = vst.msk [vmem:[%s4 + $0x4c0] sm:$0xff] %vm6719, %v6583
  %6873 = vst.msk [vmem:[%s4 + $0x4c8] sm:$0xff] %vm6719, %v6584
  %6874 = vst.msk [vmem:[%s4 + $0x4d0] sm:$0xff] %vm6719, %v6585
  %6875 = vst.msk [vmem:[%s4 + $0x4d8] sm:$0xff] %vm6719, %v6586
  %6876 = vst.msk [vmem:[%s4 + $0x4e0] sm:$0xff] %vm6719, %v6587
  %6877 = vst.msk [vmem:[%s4 + $0x4e8] sm:$0xff] %vm6719, %v6588
  %6878 = vst.msk [vmem:[%s4 + $0x4f0] sm:$0xff] %vm6719, %v6589
  %6879 = vst.msk [vmem:[%s4 + $0x4f8] sm:$0xff] %vm6719, %v6590
  %6880 = vst.msk [vmem:[%s4 + $0x500] sm:$0xff] %vm6719, %v6591
  %6881 = vst.msk [vmem:[%s4 + $0x508] sm:$0xff] %vm6719, %v6592
  %6882 = vst.msk [vmem:[%s4 + $0x510] sm:$0xff] %vm6719, %v6593
  %6883 = vst.msk [vmem:[%s4 + $0x518] sm:$0xff] %vm6719, %v6594
  %6884 = vst.msk [vmem:[%s4 + $0x520] sm:$0xff] %vm6719, %v6595
  %6885 = vst.msk [vmem:[%s4 + $0x528] sm:$0xff] %vm6719, %v6596
  %6886 = vst.msk [vmem:[%s4 + $0x530] sm:$0xff] %vm6719, %v6597
  %6887 = vst.msk [vmem:[%s4 + $0x538] sm:$0xff] %vm6719, %v6598
  %6888 = vst.msk [vmem:[%s4 + $0x540] sm:$0xff] %vm6719, %v6599
  %6889 = vst.msk [vmem:[%s4 + $0x548] sm:$0xff] %vm6719, %v6600
  %6890 = vst.msk [vmem:[%s4 + $0x550] sm:$0xff] %vm6719, %v6601
  %6891 = vst.msk [vmem:[%s4 + $0x558] sm:$0xff] %vm6719, %v6602
  %6892 = vst.msk [vmem:[%s4 + $0x560] sm:$0xff] %vm6719, %v6603
  %6893 = vst.msk [vmem:[%s4 + $0x568] sm:$0xff] %vm6719, %v6604
  %6894 = vst.msk [vmem:[%s4 + $0x570] sm:$0xff] %vm6719, %v6605
  %6895 = vst.msk [vmem:[%s4 + $0x578] sm:$0xff] %vm6719, %v6606
  %6896 = vst.msk [vmem:[%s4 + $0x580] sm:$0xff] %vm6719, %v6607
  %6897 = vst.msk [vmem:[%s4 + $0x588] sm:$0xff] %vm6719, %v6608
  %6898 = vst.msk [vmem:[%s4 + $0x590] sm:$0xff] %vm6719, %v6609
  %6899 = vst.msk [vmem:[%s4 + $0x598] sm:$0xff] %vm6719, %v6610
  %6900 = vst.msk [vmem:[%s4 + $0x5a0] sm:$0xff] %vm6719, %v6611
  %6901 = vst.msk [vmem:[%s4 + $0x5a8] sm:$0xff] %vm6719, %v6612
  %6902 = vst.msk [vmem:[%s4 + $0x5b0] sm:$0xff] %vm6719, %v6613
  %6903 = vst.msk [vmem:[%s4 + $0x5b8] sm:$0xff] %vm6719, %v6614
  %6904 = vst.msk [vmem:[%s4 + $0x5c0] sm:$0xff] %vm6719, %v6615
  %6905 = vst.msk [vmem:[%s4 + $0x5c8] sm:$0xff] %vm6719, %v6616
  %6906 = vst.msk [vmem:[%s4 + $0x5d0] sm:$0xff] %vm6719, %v6617
  %6907 = vst.msk [vmem:[%s4 + $0x5d8] sm:$0xff] %vm6719, %v6618
  %6908 = vst.msk [vmem:[%s4 + $0x5e0] sm:$0xff] %vm6719, %v6619
  %6909 = vst.msk [vmem:[%s4 + $0x5e8] sm:$0xff] %vm6719, %v6620
  %6910 = vst.msk [vmem:[%s4 + $0x5f0] sm:$0xff] %vm6719, %v6621
  %6911 = vst.msk [vmem:[%s4 + $0x5f8] sm:$0xff] %vm6719, %v6622
  %6912 = vst.msk [vmem:[%s4 + $0x600] sm:$0xff] %vm6719, %v6623
  %6913 = vst.msk [vmem:[%s4 + $0x608] sm:$0xff] %vm6719, %v6624
  %6914 = vst.msk [vmem:[%s4 + $0x610] sm:$0xff] %vm6719, %v6625
  %6915 = vst.msk [vmem:[%s4 + $0x618] sm:$0xff] %vm6719, %v6626
  %6916 = vst.msk [vmem:[%s4 + $0x620] sm:$0xff] %vm6719, %v6627
  %6917 = vst.msk [vmem:[%s4 + $0x628] sm:$0xff] %vm6719, %v6628
  %6918 = vst.msk [vmem:[%s4 + $0x630] sm:$0xff] %vm6719, %v6629
  %6919 = vst.msk [vmem:[%s4 + $0x638] sm:$0xff] %vm6719, %v6630
  %6920 = vst.msk [vmem:[%s4 + $0x640] sm:$0xff] %vm6719, %v6631
  %6921 = vst.msk [vmem:[%s4 + $0x648] sm:$0xff] %vm6719, %v6632
  %6922 = vst.msk [vmem:[%s4 + $0x650] sm:$0xff] %vm6719, %v6633
  %6923 = vst.msk [vmem:[%s4 + $0x658] sm:$0xff] %vm6719, %v6634
  %6924 = vst.msk [vmem:[%s4 + $0x660] sm:$0xff] %vm6719, %v6635
  %6925 = vst.msk [vmem:[%s4 + $0x668] sm:$0xff] %vm6719, %v6636
  %6926 = vst.msk [vmem:[%s4 + $0x670] sm:$0xff] %vm6719, %v6637
  %6927 = vst.msk [vmem:[%s4 + $0x678] sm:$0xff] %vm6719, %v6638
  %6928 = vst.msk [vmem:[%s4 + $0x680] sm:$0xff] %vm6719, %v6639
  %6929 = vst.msk [vmem:[%s4 + $0x688] sm:$0xff] %vm6719, %v6640
  %6930 = vst.msk [vmem:[%s4 + $0x690] sm:$0xff] %vm6719, %v6641
  %6931 = vst.msk [vmem:[%s4 + $0x698] sm:$0xff] %vm6719, %v6642
  %6932 = vst.msk [vmem:[%s4 + $0x6a0] sm:$0xff] %vm6719, %v6643
  %6933 = vst.msk [vmem:[%s4 + $0x6a8] sm:$0xff] %vm6719, %v6644
  %6934 = vst.msk [vmem:[%s4 + $0x6b0] sm:$0xff] %vm6719, %v6645
  %6935 = vst.msk [vmem:[%s4 + $0x6b8] sm:$0xff] %vm6719, %v6646
  %6936 = vst.msk [vmem:[%s4 + $0x6c0] sm:$0xff] %vm6719, %v6647
  %6937 = vst.msk [vmem:[%s4 + $0x6c8] sm:$0xff] %vm6719, %v6648
  %6938 = vst.msk [vmem:[%s4 + $0x6d0] sm:$0xff] %vm6719, %v6649
  %6939 = vst.msk [vmem:[%s4 + $0x6d8] sm:$0xff] %vm6719, %v6650
  %6940 = vst.msk [vmem:[%s4 + $0x6e0] sm:$0xff] %vm6719, %v6651
  %6941 = vst.msk [vmem:[%s4 + $0x6e8] sm:$0xff] %vm6719, %v6652
  %6942 = vst.msk [vmem:[%s4 + $0x6f0] sm:$0xff] %vm6719, %v6653
  %6943 = vst.msk [vmem:[%s4 + $0x6f8] sm:$0xff] %vm6719, %v6654
  %6944 = vst.msk [vmem:[%s4 + $0x700] sm:$0xff] %vm6719, %v6655
  %6945 = vst.msk [vmem:[%s4 + $0x708] sm:$0xff] %vm6719, %v6656
  %6946 = vst.msk [vmem:[%s4 + $0x710] sm:$0xff] %vm6719, %v6657
  %6947 = vst.msk [vmem:[%s4 + $0x718] sm:$0xff] %vm6719, %v6658
  %6948 = vst.msk [vmem:[%s4 + $0x720] sm:$0xff] %vm6719, %v6659
  %6949 = vst.msk [vmem:[%s4 + $0x728] sm:$0xff] %vm6719, %v6660
  %6950 = vst.msk [vmem:[%s4 + $0x730] sm:$0xff] %vm6719, %v6661
  %6951 = vst.msk [vmem:[%s4 + $0x738] sm:$0xff] %vm6719, %v6662
  %6952 = vst.msk [vmem:[%s4 + $0x740] sm:$0xff] %vm6719, %v6663
  %6953 = vst.msk [vmem:[%s4 + $0x748] sm:$0xff] %vm6719, %v6664
  %6954 = vst.msk [vmem:[%s4 + $0x750] sm:$0xff] %vm6719, %v6665
  %6955 = vst.msk [vmem:[%s4 + $0x758] sm:$0xff] %vm6719, %v6666
  %6956 = vst.msk [vmem:[%s4 + $0x760] sm:$0xff] %vm6719, %v6667
  %6957 = vst.msk [vmem:[%s4 + $0x768] sm:$0xff] %vm6719, %v6668
  %6958 = vst.msk [vmem:[%s4 + $0x770] sm:$0xff] %vm6719, %v6669
  %6959 = vst.msk [vmem:[%s4 + $0x778] sm:$0xff] %vm6719, %v6670
  %6960 = vst.msk [vmem:[%s4 + $0x780] sm:$0xff] %vm6719, %v6671
  %6961 = vst.msk [vmem:[%s4 + $0x788] sm:$0xff] %vm6719, %v6672
  %6962 = vst.msk [vmem:[%s4 + $0x790] sm:$0xff] %vm6719, %v6673
  %6963 = vst.msk [vmem:[%s4 + $0x798] sm:$0xff] %vm6719, %v6674
  %6964 = vst.msk [vmem:[%s4 + $0x7a0] sm:$0xff] %vm6719, %v6675
  %6965 = vst.msk [vmem:[%s4 + $0x7a8] sm:$0xff] %vm6719, %v6676
  %6966 = vst.msk [vmem:[%s4 + $0x7b0] sm:$0xff] %vm6719, %v6677
  %6967 = vst.msk [vmem:[%s4 + $0x7b8] sm:$0xff] %vm6719, %v6678
  %6968 = vst.msk [vmem:[%s4 + $0x7c0] sm:$0xff] %vm6719, %v6679
  %6969 = vst.msk [vmem:[%s4 + $0x7c8] sm:$0xff] %vm6719, %v6680
  %6970 = vst.msk [vmem:[%s4 + $0x7d0] sm:$0xff] %vm6719, %v6681
  %6971 = vst.msk [vmem:[%s4 + $0x7d8] sm:$0xff] %vm6719, %v6682
  %6972 = vst.msk [vmem:[%s4 + $0x7e0] sm:$0xff] %vm6719, %v6683
  %6973 = vst.msk [vmem:[%s4 + $0x7e8] sm:$0xff] %vm6719, %v6684
  %6974 = vst.msk [vmem:[%s4 + $0x7f0] sm:$0xff] %vm6719, %v6685
  %6975 = vst.msk [vmem:[%s4 + $0x7f8] sm:$0xff] %vm6719, %v6686
  %6976 = vst.msk [vmem:[%s4 + $0x800] sm:$0xff] %vm6719, %v6687
  %6977 = vst.msk [vmem:[%s4 + $0x808] sm:$0xff] %vm6719, %v6688
  %6978 = vst.msk [vmem:[%s4 + $0x810] sm:$0xff] %vm6719, %v6689
  %6979 = vst.msk [vmem:[%s4 + $0x818] sm:$0xff] %vm6719, %v6690
  %6980 = vst.msk [vmem:[%s4 + $0x820] sm:$0xff] %vm6719, %v6691
  %6981 = vst.msk [vmem:[%s4 + $0x828] sm:$0xff] %vm6719, %v6692
  %6982 = vst.msk [vmem:[%s4 + $0x830] sm:$0xff] %vm6719, %v6693
  %6983 = vst.msk [vmem:[%s4 + $0x838] sm:$0xff] %vm6719, %v6694
  %6984 = vst.msk [vmem:[%s4 + $0x840] sm:$0xff] %vm6719, %v6695
  %6985 = vst.msk [vmem:[%s4 + $0x848] sm:$0xff] %vm6719, %v6696
  %6986 = vst.msk [vmem:[%s4 + $0x850] sm:$0xff] %vm6719, %v6697
  %6987 = vst.msk [vmem:[%s4 + $0x858] sm:$0xff] %vm6719, %v6698
  %6988 = vst.msk [vmem:[%s4 + $0x860] sm:$0xff] %vm6719, %v6699
  %6989 = vst.msk [vmem:[%s4 + $0x868] sm:$0xff] %vm6719, %v6700
  %6990 = vst.msk [vmem:[%s4 + $0x870] sm:$0xff] %vm6719, %v6701
  %6991 = vst.msk [vmem:[%s4 + $0x878] sm:$0xff] %vm6719, %v6702
  %6992 = vst.msk [vmem:[%s4 + $0x880] sm:$0xff] %vm6719, %v6703
  %6993 = vst.msk [vmem:[%s4 + $0x888] sm:$0xff] %vm6719, %v6704
  %6994 = vst.msk [vmem:[%s4 + $0x890] sm:$0xff] %vm6719, %v6705
  %6995 = vst.msk [vmem:[%s4 + $0x898] sm:$0xff] %vm6719, %v6706
  %6996 = vst.msk [vmem:[%s4 + $0x8a0] sm:$0xff] %vm6719, %v6707
  %6997 = vst.msk [vmem:[%s4 + $0x8a8] sm:$0xff] %vm6719, %v6708
  %6998 = vst.msk [vmem:[%s4 + $0x8b0] sm:$0xff] %vm6719, %v6709
  %6999 = vst.msk [vmem:[%s4 + $0x8b8] sm:$0xff] %vm6719, %v6710
  %7000 = vst.msk [vmem:[%s4 + $0x8c0] sm:$0xff] %vm6719, %v6711
  %7001 = vst.msk [vmem:[%s4 + $0x8c8] sm:$0xff] %vm6719, %v6712
  %7002 = vst.msk [vmem:[%s4 + $0x8d0] sm:$0xff] %vm6719, %v6713
  %7003 = vst.msk [vmem:[%s4 + $0x8d8] sm:$0xff] %vm6719, %v6714
  %7004 = vst.msk [vmem:[%s4 + $0x8e0] sm:$0xff] %vm6719, %v6715
  %7005 = vst.msk [vmem:[%s4 + $0x8e8] sm:$0xff] %vm6719, %v6716
  %7006 = vst.msk [vmem:[%s4 + $0x8f0] sm:$0xff] %vm6719, %v6717
  %7007 = vst.msk [vmem:[%s4 + $0x8f8] sm:$0xff] %vm6719, %v6718
  // Predicated region
  $region18: #{se_conv_sigmoid_mul.1} parent=0 // pred_check
    _
  $region19: #{se_conv_sigmoid_mul.1} parent=0 // pred_check_branch
    %7009 = sbr.rel (0) target = $region21
  $region20: #{se_conv_sigmoid_mul.1} parent=0 // pred_region
    _
  $region21: #{se_conv_sigmoid_mul.1} parent=0 // pred_fallthru
    _
  // Predicated region
  $region22: #{se_conv_sigmoid_mul.1} parent=0 // pred_check
    _
  $region23: #{se_conv_sigmoid_mul.1} parent=0 // pred_check_branch
    %7011 = sbr.rel (0) target = $region25
  $region24: #{se_conv_sigmoid_mul.1} parent=0 // pred_region
    _
  $region25: #{se_conv_sigmoid_mul.1} parent=0 // pred_fallthru
    _

</llo_original>
